<compile_context>
chip_gen: v7x
topology: tpu7x:2x2x1
jax: 0.10.0
libtpu: 0.0.40
codegen_flags: <defaults>
</compile_context>

<pallas_src>
import functools

import jax
import jax.numpy as jnp
from jax import lax
from jax.experimental import pallas as pl
from jax.experimental.pallas import tpu as pltpu


def _hardswish(x):
    # PyTorch nn.Hardswish: x * relu6(x + 3) / 6
    return x * jnp.clip(x + 3.0, 0.0, 6.0) * (1.0 / 6.0)


# --------------------------------------------------------------------------
# Fused kernel: 1x1 conv (+BN-fold +hswish)  ->  3x3 conv (+BN-fold +hswish)
#               -> optional residual add.  One grid step = one image.
#
#   x_ref : (1, H, W, Cin)     input (also the residual when use_add)
#   w1_ref: (Cin, hid)         1x1 weights with BN1 scale folded in
#   b1_ref: (1, hid)           BN1 shift
#   w2_ref: (9, hid, Cout)     3x3 weights (tap-major: dy*3+dx), BN2 folded
#   b2_ref: (1, Cout)          BN2 shift
#   o_ref : (1, H, W, Cout)
# --------------------------------------------------------------------------
def bottleneck_kernel(x_ref, w1_ref, b1_ref, w2_ref, b2_ref, o_ref,
                      *, H, W, use_add):
    Cin = x_ref.shape[-1]
    hid = w1_ref.shape[-1]
    Cout = o_ref.shape[-1]
    HW = H * W

    # ---- conv1: single (HW, Cin) x (Cin, hid) matmul, BN shift, hardswish ----
    x2d = x_ref[0].reshape(HW, Cin).astype(jnp.float32)
    y1 = jnp.dot(x2d, w1_ref[...].astype(jnp.float32),
                 preferred_element_type=jnp.float32)
    y1 = _hardswish(y1 + b1_ref[...].astype(jnp.float32))          # (HW, hid)

    # ---- zero-pad 2 rows of W above/below in the row-flattened layout.
    # Vertical (dy) taps that fall off the image then read zeros; only the
    # horizontal wrap across row boundaries needs masking (below).
    zpad = jnp.zeros((2 * W, hid), jnp.float32)
    ypflat = jnp.concatenate([zpad, y1, zpad], axis=0)             # ((H+4)*W, hid)

    # Column-validity masks: tap dx=0 reads column c-1 (invalid at c=0),
    # tap dx=2 reads column c+1 (invalid at c=W-1).
    col = lax.broadcasted_iota(jnp.int32, (HW, 1), 0) % W
    mask_l = (col > 0).astype(jnp.float32)
    mask_r = (col < (W - 1)).astype(jnp.float32)

    # ---- conv2: 9 contiguous-slab matmuls (M = HW, K = hid, N = Cout) ----
    # Input pixel for output p = r*W + c at tap (dy, dx) sits at flat index
    # p + (dy+1)*W + (dx-1) of ypflat (image starts at row 2*W).
    acc = jnp.zeros((HW, Cout), jnp.float32)
    for dx in range(3):
        part = jnp.zeros((HW, Cout), jnp.float32)
        for dy in range(3):
            ofs = (dy + 1) * W + (dx - 1)
            part = part + jnp.dot(ypflat[ofs:ofs + HW, :],
                                  w2_ref[dy * 3 + dx].astype(jnp.float32),
                                  preferred_element_type=jnp.float32)
        if dx == 0:
            part = part * mask_l
        elif dx == 2:
            part = part * mask_r
        acc = acc + part

    y2 = _hardswish(acc + b2_ref[...].astype(jnp.float32))
    if use_add:
        y2 = y2 + x2d                    # only compiled when Cin == Cout
    o_ref[0] = y2.reshape(H, W, Cout).astype(o_ref.dtype)


# --------------------------------------------------------------------------
# Parameter construction (deterministic, synthetic) with BN folded into conv
# weights:  scale = gamma / sqrt(var + eps),  w_folded = w * scale,
#           shift = beta - mean * scale.
# --------------------------------------------------------------------------
def make_bottleneck_params(key, in_ch, out_ch, expansion=0.5, dtype=jnp.float32):
    hid = int(out_ch * expansion)
    ks = jax.random.split(key, 10)
    eps = 1e-5

    # conv1: 1x1, torch (hid, in, 1, 1) -> stored (in, hid)
    w1 = 0.1 * jax.random.normal(ks[0], (in_ch, hid), jnp.float32)
    g1 = 1.0 + 0.1 * jax.random.normal(ks[1], (hid,), jnp.float32)
    b1 = 0.1 * jax.random.normal(ks[2], (hid,), jnp.float32)
    m1 = 0.05 * jax.random.normal(ks[3], (hid,), jnp.float32)
    v1 = 1.0 + 0.1 * jnp.abs(jax.random.normal(ks[4], (hid,), jnp.float32))
    scale1 = g1 / jnp.sqrt(v1 + eps)
    shift1 = b1 - m1 * scale1

    # conv2: 3x3, torch (out, hid, 3, 3) -> stored HWIO (3, 3, hid, out)
    w2 = 0.1 * jax.random.normal(ks[5], (3, 3, hid, out_ch), jnp.float32)
    g2 = 1.0 + 0.1 * jax.random.normal(ks[6], (out_ch,), jnp.float32)
    b2 = 0.1 * jax.random.normal(ks[7], (out_ch,), jnp.float32)
    m2 = 0.05 * jax.random.normal(ks[8], (out_ch,), jnp.float32)
    v2 = 1.0 + 0.1 * jnp.abs(jax.random.normal(ks[9], (out_ch,), jnp.float32))
    scale2 = g2 / jnp.sqrt(v2 + eps)
    shift2 = b2 - m2 * scale2

    w1f = (w1 * scale1[None, :]).astype(dtype)
    w2f = (w2 * scale2[None, None, None, :]).astype(dtype)
    return dict(
        w1f=w1f,
        b1f=shift1.reshape(1, hid).astype(dtype),
        w2f=w2f,                                    # HWIO, for the reference
        w2f9=w2f.reshape(9, hid, out_ch),           # tap-major, for the kernel
        b2f=shift2.reshape(1, out_ch).astype(dtype),
    )


# --------------------------------------------------------------------------
# Wrapper: Bottleneck forward (NCHW in / NCHW out, matching PyTorch)
# --------------------------------------------------------------------------
def bottleneck_forward(x_nchw, params, shortcut=True):
    N, Cin, H, W = x_nchw.shape
    w2f9 = params["w2f9"]
    hid, Cout = w2f9.shape[1], w2f9.shape[2]
    use_add = bool(shortcut and Cin == Cout)

    x = jnp.transpose(x_nchw, (0, 2, 3, 1))        # NCHW -> NHWC (glue)

    kernel = functools.partial(bottleneck_kernel, H=H, W=W, use_add=use_add)
    y = pl.pallas_call(
        kernel,
        out_shape=jax.ShapeDtypeStruct((N, H, W, Cout), x.dtype),
        grid_spec=pltpu.PrefetchScalarGridSpec(
            num_scalar_prefetch=0,
            grid=(N,),
            in_specs=[
                pl.BlockSpec((1, H, W, Cin), lambda n: (n, 0, 0, 0)),
                pl.BlockSpec((Cin, hid), lambda n: (0, 0)),
                pl.BlockSpec((1, hid), lambda n: (0, 0)),
                pl.BlockSpec((9, hid, Cout), lambda n: (0, 0, 0)),
                pl.BlockSpec((1, Cout), lambda n: (0, 0)),
            ],
            out_specs=pl.BlockSpec((1, H, W, Cout), lambda n: (n, 0, 0, 0)),
        ),
        compiler_params=pltpu.CompilerParams(
            dimension_semantics=("parallel",),
            vmem_limit_bytes=48 * 1024 * 1024,
        ),
    )(x, params["w1f"], params["b1f"], w2f9, params["b2f"])

    return jnp.transpose(y, (0, 3, 1, 2))          # NHWC -> NCHW


# --------------------------------------------------------------------------
# Pure-JAX reference (lax.conv) for correctness checking.
# --------------------------------------------------------------------------
def bottleneck_reference(x_nchw, params, shortcut=True):
    N, Cin, H, W = x_nchw.shape
    Cout = params["w2f"].shape[-1]
    use_add = shortcut and Cin == Cout

    x = jnp.transpose(x_nchw, (0, 2, 3, 1)).astype(jnp.float32)
    y1 = _hardswish(jnp.einsum("nhwc,cd->nhwd", x, params["w1f"]) + params["b1f"])
    y2 = lax.conv_general_dilated(
        y1, params["w2f"], window_strides=(1, 1), padding=((1, 1), (1, 1)),
        dimension_numbers=("NHWC", "HWIO", "NHWC"))
    y2 = _hardswish(y2 + params["b2f"])
    if use_add:
        y2 = y2 + x
    return jnp.transpose(y2, (0, 3, 1, 2))


if __name__ == "__main__":
    key = jax.random.PRNGKey(0)
    k_x, k_p = jax.random.split(key)

    # in_channels == out_channels -> shortcut add path exercised.
    N, C, H, W = 2, 32, 16, 16
    x = jax.random.normal(k_x, (N, C, H, W), jnp.float32)
    params = make_bottleneck_params(k_p, in_ch=C, out_ch=C, expansion=0.5)

    fwd = jax.jit(functools.partial(bottleneck_forward, shortcut=True))
    out = fwd(x, params)
    jax.block_until_ready(out)
    assert out.shape == (N, C, H, W)

    ref = bottleneck_reference(x, params, shortcut=True)
    max_err = float(jnp.max(jnp.abs(out - ref)))
    assert max_err < 1e-3, f"mismatch vs reference: {max_err}"

    print("KERNEL_OK")
</pallas_src>

<mosaic_0001>
module attributes {stable_mosaic.version = 11 : i64} {
  func.func @bottleneck_kernel(%arg0: i32, %arg1: memref<1x16x16x32xf32, #tpu.memory_space<vmem>>, %arg2: memref<32x16xf32, #tpu.memory_space<vmem>>, %arg3: memref<1x16xf32, #tpu.memory_space<vmem>>, %arg4: memref<9x16x32xf32, #tpu.memory_space<vmem>>, %arg5: memref<1x32xf32, #tpu.memory_space<vmem>>, %arg6: memref<1x16x16x32xf32, #tpu.memory_space<vmem>>) attributes {dimension_semantics = [#tpu.dimension_semantics<parallel>], iteration_bounds = array<i64: 2>, scalar_prefetch = 0 : i64, scratch_operands = 0 : i64, tpu.core_type = #tpu.core_type<tc>, window_params = [{transform_indices = @transform_0, window_bounds = array<i64: 1, 16, 16, 32>}, {pipeline_mode = #tpu.pipeline_mode<synchronous>, transform_indices = @transform_1, window_bounds = array<i64: 32, 16>}, {pipeline_mode = #tpu.pipeline_mode<synchronous>, transform_indices = @transform_2, window_bounds = array<i64: 1, 16>}, {pipeline_mode = #tpu.pipeline_mode<synchronous>, transform_indices = @transform_3, window_bounds = array<i64: 9, 16, 32>}, {pipeline_mode = #tpu.pipeline_mode<synchronous>, transform_indices = @transform_4, window_bounds = array<i64: 1, 32>}, {transform_indices = @transform_5, window_bounds = array<i64: 1, 16, 16, 32>}]} {
    %c0 = arith.constant 0 : index
    %c0_0 = arith.constant 0 : index
    %c0_1 = arith.constant 0 : index
    %c0_2 = arith.constant 0 : index
    %0 = vector.load %arg1[%c0, %c0_0, %c0_1, %c0_2] : memref<1x16x16x32xf32, #tpu.memory_space<vmem>>, vector<1x16x16x32xf32>
    %1 = vector.shape_cast %0 : vector<1x16x16x32xf32> to vector<16x16x32xf32>
    %2 = vector.shape_cast %1 : vector<16x16x32xf32> to vector<256x32xf32>
    %c0_3 = arith.constant 0 : index
    %c0_4 = arith.constant 0 : index
    %3 = vector.load %arg2[%c0_3, %c0_4] : memref<32x16xf32, #tpu.memory_space<vmem>>, vector<32x16xf32>
    %cst = arith.constant dense<0.000000e+00> : vector<256x16xf32>
    %4 = tpu.matmul %2, %3, %cst {dimension_numbers = #tpu.dot_dimension_numbers<[1], [0], [0], [1], [0, 0, 1, 1], [], []>} : vector<256x32xf32>, vector<32x16xf32>, vector<256x16xf32> -> vector<256x16xf32>
    %c0_5 = arith.constant 0 : index
    %c0_6 = arith.constant 0 : index
    %5 = vector.load %arg3[%c0_5, %c0_6] : memref<1x16xf32, #tpu.memory_space<vmem>>, vector<1x16xf32>
    %6 = vector.broadcast %5 : vector<1x16xf32> to vector<256x16xf32>
    %7 = arith.addf %4, %6 : vector<256x16xf32>
    %cst_7 = arith.constant 3.000000e+00 : f32
    %8 = vector.broadcast %cst_7 : f32 to vector<256x16xf32>
    %9 = arith.addf %7, %8 : vector<256x16xf32>
    %cst_8 = arith.constant 0.000000e+00 : f32
    %cst_9 = arith.constant 6.000000e+00 : f32
    %10 = vector.broadcast %cst_8 : f32 to vector<256x16xf32>
    %11 = arith.maximumf %10, %9 : vector<256x16xf32>
    %12 = vector.broadcast %cst_9 : f32 to vector<256x16xf32>
    %13 = arith.minimumf %12, %11 : vector<256x16xf32>
    %14 = arith.mulf %7, %13 : vector<256x16xf32>
    %cst_10 = arith.constant 0.166666672 : f32
    %15 = vector.broadcast %cst_10 : f32 to vector<256x16xf32>
    %16 = arith.mulf %14, %15 : vector<256x16xf32>
    %cst_11 = arith.constant 0.000000e+00 : f32
    %17 = vector.broadcast %cst_11 : f32 to vector<32x16xf32>
    %18 = tpu.concatenate %17, %16, %17 in 0 : vector<32x16xf32>, vector<256x16xf32>, vector<32x16xf32> -> vector<320x16xf32>
    %19 = tpu.iota {dimensions = array<i32: 0>} : vector<256x1xi32>
    %c16_i32 = arith.constant 16 : i32
    %c0_i32 = arith.constant 0 : i32
    %20 = arith.cmpi eq, %c16_i32, %c0_i32 : i32
    %c1_i32 = arith.constant 1 : i32
    %21 = arith.select %20, %c1_i32, %c16_i32 : i32
    %22 = vector.broadcast %21 : i32 to vector<256x1xi32>
    %23 = arith.remsi %19, %22 : vector<256x1xi32>
    %c0_i32_12 = arith.constant 0 : i32
    %24 = vector.broadcast %c0_i32_12 : i32 to vector<256x1xi32>
    %25 = arith.cmpi ne, %23, %24 : vector<256x1xi32>
    %c0_i32_13 = arith.constant 0 : i32
    %26 = vector.broadcast %c0_i32_13 : i32 to vector<256x1xi32>
    %27 = arith.cmpi slt, %23, %26 : vector<256x1xi32>
    %c0_i32_14 = arith.constant 0 : i32
    %28 = arith.cmpi slt, %21, %c0_i32_14 : i32
    %29 = vector.broadcast %28 : i1 to vector<256x1xi1>
    %30 = vector.broadcast %29 : vector<256x1xi1> to vector<256x1xi1>
    %31 = arith.xori %27, %30 : vector<256x1xi1>
    %32 = arith.andi %31, %25 : vector<256x1xi1>
    %33 = vector.broadcast %21 : i32 to vector<256x1xi32>
    %34 = arith.addi %23, %33 : vector<256x1xi32>
    %35 = arith.select %32, %34, %23 : vector<256x1xi1>, vector<256x1xi32>
    %c0_i32_15 = arith.constant 0 : i32
    %36 = vector.broadcast %c0_i32_15 : i32 to vector<256x1xi32>
    %37 = arith.cmpi sgt, %35, %36 : vector<256x1xi32>
    %38 = arith.extui %37 : vector<256x1xi1> to vector<256x1xi32>
    %39 = arith.sitofp %38 : vector<256x1xi32> to vector<256x1xf32>
    %c15_i32 = arith.constant 15 : i32
    %40 = vector.broadcast %c15_i32 : i32 to vector<256x1xi32>
    %41 = arith.cmpi slt, %35, %40 : vector<256x1xi32>
    %42 = arith.extui %41 : vector<256x1xi1> to vector<256x1xi32>
    %43 = arith.sitofp %42 : vector<256x1xi32> to vector<256x1xf32>
    %cst_16 = arith.constant 0.000000e+00 : f32
    %44 = vector.broadcast %cst_16 : f32 to vector<256x32xf32>
    %cst_17 = arith.constant 0.000000e+00 : f32
    %45 = vector.broadcast %cst_17 : f32 to vector<256x32xf32>
    %46 = vector.extract_strided_slice %18 {offsets = [15, 0], sizes = [256, 16], strides = [1, 1]} : vector<320x16xf32> to vector<256x16xf32>
    %c0_18 = arith.constant 0 : index
    %c0_19 = arith.constant 0 : index
    %c0_20 = arith.constant 0 : index
    %47 = vector.load %arg4[%c0_18, %c0_19, %c0_20] : memref<9x16x32xf32, #tpu.memory_space<vmem>>, vector<1x16x32xf32>
    %48 = vector.shape_cast %47 : vector<1x16x32xf32> to vector<16x32xf32>
    %cst_21 = arith.constant dense<0.000000e+00> : vector<256x32xf32>
    %49 = tpu.matmul %46, %48, %cst_21 {dimension_numbers = #tpu.dot_dimension_numbers<[1], [0], [0], [1], [0, 0, 1, 1], [], []>} : vector<256x16xf32>, vector<16x32xf32>, vector<256x32xf32> -> vector<256x32xf32>
    %50 = arith.addf %45, %49 : vector<256x32xf32>
    %51 = vector.extract_strided_slice %18 {offsets = [31, 0], sizes = [256, 16], strides = [1, 1]} : vector<320x16xf32> to vector<256x16xf32>
    %c3 = arith.constant 3 : index
    %c0_22 = arith.constant 0 : index
    %c0_23 = arith.constant 0 : index
    %52 = vector.load %arg4[%c3, %c0_22, %c0_23] : memref<9x16x32xf32, #tpu.memory_space<vmem>>, vector<1x16x32xf32>
    %53 = vector.shape_cast %52 : vector<1x16x32xf32> to vector<16x32xf32>
    %cst_24 = arith.constant dense<0.000000e+00> : vector<256x32xf32>
    %54 = tpu.matmul %51, %53, %cst_24 {dimension_numbers = #tpu.dot_dimension_numbers<[1], [0], [0], [1], [0, 0, 1, 1], [], []>} : vector<256x16xf32>, vector<16x32xf32>, vector<256x32xf32> -> vector<256x32xf32>
    %55 = arith.addf %50, %54 : vector<256x32xf32>
    %56 = vector.extract_strided_slice %18 {offsets = [47, 0], sizes = [256, 16], strides = [1, 1]} : vector<320x16xf32> to vector<256x16xf32>
    %c6 = arith.constant 6 : index
    %c0_25 = arith.constant 0 : index
    %c0_26 = arith.constant 0 : index
    %57 = vector.load %arg4[%c6, %c0_25, %c0_26] : memref<9x16x32xf32, #tpu.memory_space<vmem>>, vector<1x16x32xf32>
    %58 = vector.shape_cast %57 : vector<1x16x32xf32> to vector<16x32xf32>
    %cst_27 = arith.constant dense<0.000000e+00> : vector<256x32xf32>
    %59 = tpu.matmul %56, %58, %cst_27 {dimension_numbers = #tpu.dot_dimension_numbers<[1], [0], [0], [1], [0, 0, 1, 1], [], []>} : vector<256x16xf32>, vector<16x32xf32>, vector<256x32xf32> -> vector<256x32xf32>
    %60 = arith.addf %55, %59 : vector<256x32xf32>
    %61 = vector.broadcast %39 : vector<256x1xf32> to vector<256x32xf32>
    %62 = arith.mulf %60, %61 : vector<256x32xf32>
    %63 = arith.addf %44, %62 : vector<256x32xf32>
    %cst_28 = arith.constant 0.000000e+00 : f32
    %64 = vector.broadcast %cst_28 : f32 to vector<256x32xf32>
    %65 = vector.extract_strided_slice %18 {offsets = [16, 0], sizes = [256, 16], strides = [1, 1]} : vector<320x16xf32> to vector<256x16xf32>
    %c1 = arith.constant 1 : index
    %c0_29 = arith.constant 0 : index
    %c0_30 = arith.constant 0 : index
    %66 = vector.load %arg4[%c1, %c0_29, %c0_30] : memref<9x16x32xf32, #tpu.memory_space<vmem>>, vector<1x16x32xf32>
    %67 = vector.shape_cast %66 : vector<1x16x32xf32> to vector<16x32xf32>
    %cst_31 = arith.constant dense<0.000000e+00> : vector<256x32xf32>
    %68 = tpu.matmul %65, %67, %cst_31 {dimension_numbers = #tpu.dot_dimension_numbers<[1], [0], [0], [1], [0, 0, 1, 1], [], []>} : vector<256x16xf32>, vector<16x32xf32>, vector<256x32xf32> -> vector<256x32xf32>
    %69 = arith.addf %64, %68 : vector<256x32xf32>
    %70 = vector.extract_strided_slice %18 {offsets = [32, 0], sizes = [256, 16], strides = [1, 1]} : vector<320x16xf32> to vector<256x16xf32>
    %c4 = arith.constant 4 : index
    %c0_32 = arith.constant 0 : index
    %c0_33 = arith.constant 0 : index
    %71 = vector.load %arg4[%c4, %c0_32, %c0_33] : memref<9x16x32xf32, #tpu.memory_space<vmem>>, vector<1x16x32xf32>
    %72 = vector.shape_cast %71 : vector<1x16x32xf32> to vector<16x32xf32>
    %cst_34 = arith.constant dense<0.000000e+00> : vector<256x32xf32>
    %73 = tpu.matmul %70, %72, %cst_34 {dimension_numbers = #tpu.dot_dimension_numbers<[1], [0], [0], [1], [0, 0, 1, 1], [], []>} : vector<256x16xf32>, vector<16x32xf32>, vector<256x32xf32> -> vector<256x32xf32>
    %74 = arith.addf %69, %73 : vector<256x32xf32>
    %75 = vector.extract_strided_slice %18 {offsets = [48, 0], sizes = [256, 16], strides = [1, 1]} : vector<320x16xf32> to vector<256x16xf32>
    %c7 = arith.constant 7 : index
    %c0_35 = arith.constant 0 : index
    %c0_36 = arith.constant 0 : index
    %76 = vector.load %arg4[%c7, %c0_35, %c0_36] : memref<9x16x32xf32, #tpu.memory_space<vmem>>, vector<1x16x32xf32>
    %77 = vector.shape_cast %76 : vector<1x16x32xf32> to vector<16x32xf32>
    %cst_37 = arith.constant dense<0.000000e+00> : vector<256x32xf32>
    %78 = tpu.matmul %75, %77, %cst_37 {dimension_numbers = #tpu.dot_dimension_numbers<[1], [0], [0], [1], [0, 0, 1, 1], [], []>} : vector<256x16xf32>, vector<16x32xf32>, vector<256x32xf32> -> vector<256x32xf32>
    %79 = arith.addf %74, %78 : vector<256x32xf32>
    %80 = arith.addf %63, %79 : vector<256x32xf32>
    %cst_38 = arith.constant 0.000000e+00 : f32
    %81 = vector.broadcast %cst_38 : f32 to vector<256x32xf32>
    %82 = vector.extract_strided_slice %18 {offsets = [17, 0], sizes = [256, 16], strides = [1, 1]} : vector<320x16xf32> to vector<256x16xf32>
    %c2 = arith.constant 2 : index
    %c0_39 = arith.constant 0 : index
    %c0_40 = arith.constant 0 : index
    %83 = vector.load %arg4[%c2, %c0_39, %c0_40] : memref<9x16x32xf32, #tpu.memory_space<vmem>>, vector<1x16x32xf32>
    %84 = vector.shape_cast %83 : vector<1x16x32xf32> to vector<16x32xf32>
    %cst_41 = arith.constant dense<0.000000e+00> : vector<256x32xf32>
    %85 = tpu.matmul %82, %84, %cst_41 {dimension_numbers = #tpu.dot_dimension_numbers<[1], [0], [0], [1], [0, 0, 1, 1], [], []>} : vector<256x16xf32>, vector<16x32xf32>, vector<256x32xf32> -> vector<256x32xf32>
    %86 = arith.addf %81, %85 : vector<256x32xf32>
    %87 = vector.extract_strided_slice %18 {offsets = [33, 0], sizes = [256, 16], strides = [1, 1]} : vector<320x16xf32> to vector<256x16xf32>
    %c5 = arith.constant 5 : index
    %c0_42 = arith.constant 0 : index
    %c0_43 = arith.constant 0 : index
    %88 = vector.load %arg4[%c5, %c0_42, %c0_43] : memref<9x16x32xf32, #tpu.memory_space<vmem>>, vector<1x16x32xf32>
    %89 = vector.shape_cast %88 : vector<1x16x32xf32> to vector<16x32xf32>
    %cst_44 = arith.constant dense<0.000000e+00> : vector<256x32xf32>
    %90 = tpu.matmul %87, %89, %cst_44 {dimension_numbers = #tpu.dot_dimension_numbers<[1], [0], [0], [1], [0, 0, 1, 1], [], []>} : vector<256x16xf32>, vector<16x32xf32>, vector<256x32xf32> -> vector<256x32xf32>
    %91 = arith.addf %86, %90 : vector<256x32xf32>
    %92 = vector.extract_strided_slice %18 {offsets = [49, 0], sizes = [256, 16], strides = [1, 1]} : vector<320x16xf32> to vector<256x16xf32>
    %c8 = arith.constant 8 : index
    %c0_45 = arith.constant 0 : index
    %c0_46 = arith.constant 0 : index
    %93 = vector.load %arg4[%c8, %c0_45, %c0_46] : memref<9x16x32xf32, #tpu.memory_space<vmem>>, vector<1x16x32xf32>
    %94 = vector.shape_cast %93 : vector<1x16x32xf32> to vector<16x32xf32>
    %cst_47 = arith.constant dense<0.000000e+00> : vector<256x32xf32>
    %95 = tpu.matmul %92, %94, %cst_47 {dimension_numbers = #tpu.dot_dimension_numbers<[1], [0], [0], [1], [0, 0, 1, 1], [], []>} : vector<256x16xf32>, vector<16x32xf32>, vector<256x32xf32> -> vector<256x32xf32>
    %96 = arith.addf %91, %95 : vector<256x32xf32>
    %97 = vector.broadcast %43 : vector<256x1xf32> to vector<256x32xf32>
    %98 = arith.mulf %96, %97 : vector<256x32xf32>
    %99 = arith.addf %80, %98 : vector<256x32xf32>
    %c0_48 = arith.constant 0 : index
    %c0_49 = arith.constant 0 : index
    %100 = vector.load %arg5[%c0_48, %c0_49] : memref<1x32xf32, #tpu.memory_space<vmem>>, vector<1x32xf32>
    %101 = vector.broadcast %100 : vector<1x32xf32> to vector<256x32xf32>
    %102 = arith.addf %99, %101 : vector<256x32xf32>
    %cst_50 = arith.constant 3.000000e+00 : f32
    %103 = vector.broadcast %cst_50 : f32 to vector<256x32xf32>
    %104 = arith.addf %102, %103 : vector<256x32xf32>
    %cst_51 = arith.constant 0.000000e+00 : f32
    %cst_52 = arith.constant 6.000000e+00 : f32
    %105 = vector.broadcast %cst_51 : f32 to vector<256x32xf32>
    %106 = arith.maximumf %105, %104 : vector<256x32xf32>
    %107 = vector.broadcast %cst_52 : f32 to vector<256x32xf32>
    %108 = arith.minimumf %107, %106 : vector<256x32xf32>
    %109 = arith.mulf %102, %108 : vector<256x32xf32>
    %cst_53 = arith.constant 0.166666672 : f32
    %110 = vector.broadcast %cst_53 : f32 to vector<256x32xf32>
    %111 = arith.mulf %109, %110 : vector<256x32xf32>
    %112 = arith.addf %111, %2 : vector<256x32xf32>
    %113 = vector.shape_cast %112 : vector<256x32xf32> to vector<16x16x32xf32>
    %c0_54 = arith.constant 0 : index
    %c0_55 = arith.constant 0 : index
    %c0_56 = arith.constant 0 : index
    %c0_57 = arith.constant 0 : index
    %114 = vector.load %arg6[%c0_54, %c0_55, %c0_56, %c0_57] : memref<1x16x16x32xf32, #tpu.memory_space<vmem>>, vector<1x16x16x32xf32>
    %115 = vector.shape_cast %114 : vector<1x16x16x32xf32> to vector<16x16x32xf32>
    %116 = vector.shape_cast %113 : vector<16x16x32xf32> to vector<1x16x16x32xf32>
    tpu.vector_store %arg6[%c0_54, %c0_55, %c0_56, %c0_57], %116 {strides = array<i32>} : memref<1x16x16x32xf32, #tpu.memory_space<vmem>>, vector<1x16x16x32xf32>,
    return
  }
  func.func @transform_0(%arg0: i32) -> (i32, i32, i32, i32) {
    %c0_i32 = arith.constant 0 : i32
    %c0_i32_0 = arith.constant 0 : i32
    %c0_i32_1 = arith.constant 0 : i32
    %c0_i32_2 = arith.constant 0 : i32
    return %arg0, %c0_i32, %c0_i32_0, %c0_i32_1 : i32, i32, i32, i32
  }
  func.func @transform_1(%arg0: i32) -> (i32, i32) {
    %c0_i32 = arith.constant 0 : i32
    %c0_i32_0 = arith.constant 0 : i32
    %c0_i32_1 = arith.constant 0 : i32
    return %c0_i32, %c0_i32_0 : i32, i32
  }
  func.func @transform_2(%arg0: i32) -> (i32, i32) {
    %c0_i32 = arith.constant 0 : i32
    %c0_i32_0 = arith.constant 0 : i32
    %c0_i32_1 = arith.constant 0 : i32
    return %c0_i32, %c0_i32_0 : i32, i32
  }
  func.func @transform_3(%arg0: i32) -> (i32, i32, i32) {
    %c0_i32 = arith.constant 0 : i32
    %c0_i32_0 = arith.constant 0 : i32
    %c0_i32_1 = arith.constant 0 : i32
    %c0_i32_2 = arith.constant 0 : i32
    return %c0_i32, %c0_i32_0, %c0_i32_1 : i32, i32, i32
  }
  func.func @transform_4(%arg0: i32) -> (i32, i32) {
    %c0_i32 = arith.constant 0 : i32
    %c0_i32_0 = arith.constant 0 : i32
    %c0_i32_1 = arith.constant 0 : i32
    return %c0_i32, %c0_i32_0 : i32, i32
  }
  func.func @transform_5(%arg0: i32) -> (i32, i32, i32, i32) {
    %c0_i32 = arith.constant 0 : i32
    %c0_i32_0 = arith.constant 0 : i32
    %c0_i32_1 = arith.constant 0 : i32
    %c0_i32_2 = arith.constant 0 : i32
    return %arg0, %c0_i32, %c0_i32_0, %c0_i32_1 : i32, i32, i32, i32
  }
}

</mosaic_0001>

<llo_original>
// kernel: bottleneck_forward.1
$region0: #{bottleneck_forward.1}
  #allocation0 [shape = 'u32[]', space=smem, size = 0x4, offset = 0x4, fixed_abs, tag = 'smem constant byte address 0x4 - core index']
  #allocation1 [shape = 'u32[144,128]{1,0:T(1,128)}', space=vmem, size = 0x12000, scoped, tag = 'internal scratch']
  %s0 = inlined_call_operand.hbm [shape: f32[2,16,16,32], index: 0, kind: input, shape index: {}]
  %s1 = inlined_call_operand.vmem [shape: f32[32,16], index: 1, kind: input, shape index: {}]
  %s2 = inlined_call_operand.vmem [shape: f32[1,16], index: 2, kind: input, shape index: {}]
  %s3 = inlined_call_operand.hbm [shape: f32[9,16,32], index: 3, kind: input, shape index: {}]
  %s4 = inlined_call_operand.vmem [shape: f32[1,32], index: 4, kind: input, shape index: {}]
  %s5 = inlined_call_operand.hbm [shape: f32[2,16,16,32], index: 5, kind: output, shape index: {}]
  %s6 = sld [smem:[#allocation0]]
  $region61: #{bottleneck_forward.1} parent=0
    _
  %s8 = ssub.s32 1, %s6
  %s9 = scalar_select 0, %s8, %s6
  $region1: #{bottleneck_forward.1} parent=0
    #allocation2 [shape = 'u8[262144]{0}', space=vmem, size = 0x40000, scoped, tag = 'input window, operand 0']
    #allocation3 [shape = 's32[2]{0}', space=sflag, size = 0x8, scoped, tag = 'scoped memory for bottleneck_forward.1']
    #allocation4 [shape = 's32[2]{0}', space=sflag, size = 0x8, scoped, tag = 'scoped memory for bottleneck_forward.1']
    #allocation5 [shape = 'u8[73728]{0}', space=vmem, size = 0x12000, scoped, tag = 'input window, operand 3, single buffered']
    #allocation6 [shape = 's32[1]{0}', space=sflag, size = 0x4, scoped, tag = 'scoped memory for bottleneck_forward.1']
    #allocation7 [shape = 'u8[262144]{0}', space=vmem, size = 0x40000, scoped, tag = 'output window, operand 0']
    %10 = vsyncpa [#allocation3], 0
    %s11 = scalar_lea.sflag [#allocation3], 1
    %12 = vsyncpa %s11, 0
    %13 = vsyncpa [#allocation6], 0
    %14 = vsyncpa [#allocation4], 0
    %s15 = scalar_lea.sflag [#allocation4], 1
    %16 = vsyncpa %s15, 0
    loop: start=0, step=1, limit=4
    $region2: #{bottleneck_forward.1} parent=1 // loop_pre_header
      _
    $region3: #{bottleneck_forward.1} parent=1 // loop_header
      %s18 = sphi 0, %s22
      %p19 = scmp.ge.s32.totalorder %s18, 4
      %s28 = sphi 0, %s30
      %s31 = sphi 0, %s28
      %s32 = sphi 0, %s31
      %s48 = sphi 0, %s32
      %s52 = sphi 0, %s52
      %s54 = sphi 0, %s52
      %s55 = sphi 0, %s54
      %s69 = sphi 0, %s55
      %s73 = sphi 0, %s73
      %s75 = sphi 0, %s73
      %s76 = sphi 0, %s75
      %s90 = sphi 0, %s76
      %s94 = sphi 0, %s94
      %s96 = sphi 0, %s94
      %s97 = sphi 0, %s96
      %s111 = sphi 0, %s97
      %s115 = sphi 0, %s115
      %s117 = sphi 0, %s115
      %s118 = sphi 0, %s117
      %s132 = sphi 0, %s118
      %s138 = sphi 0, %s140
      %s141 = sphi 0, %s138
      %s142 = sphi 0, %s141
      %s158 = sphi 0, %s142
    $region4: #{bottleneck_forward.1} parent=1 // loop_header_branch
      %21 = sbr.rel (%p19) target = $region8
    $region5: #{bottleneck_forward.1} parent=1 // loop_body
      %s23 = ssub.s32 %s18, 1
      %s24 = ssub.s32 %s18, 2
      %s25 = sadd.s32 %s18, 1
      %s26 = ssub.s32 %s18, %s25
      %p27 = scmp.eq.s32.totalorder %s26, 0
      %s29 = sadd.s32 %s28, 1
      %s30 = scalar_select %p27, %s28, %s29
      %p33 = pneg %p27
      %p34 = scmp.eq.s32.totalorder %s18, 1
      %p35 = por %p33, %p34
      %p36 = scmp.ne.s32.totalorder %s28, %s31
      %p37 = scmp.eq.s32.totalorder %s18, 0
      %p38 = por %p36, %p37
      %p39 = scmp.ne.s32.totalorder %s28, %s31
      %p40 = scmp.eq.s32.totalorder %s23, 1
      %p41 = por %p39, %p40
      %p42 = scmp.ne.s32.totalorder %s31, %s32
      %p43 = scmp.eq.s32.totalorder %s23, 0
      %p44 = por %p42, %p43
      %p45 = scmp.ne.s32.totalorder %s31, %s32
      %p46 = scmp.eq.s32.totalorder %s24, 1
      %p47 = por %p45, %p46
      %p49 = scmp.ne.s32.totalorder %s32, %s48
      %p50 = scmp.eq.s32.totalorder %s24, 0
      %p51 = por %p49, %p50
      %s53 = sadd.s32 %s52, 1
      %p56 = scmp.eq.s32.totalorder %s18, 1
      %p57 = scmp.ne.s32.totalorder %s52, %s54
      %p58 = scmp.eq.s32.totalorder %s18, 0
      %p59 = por %p57, %p58
      %p60 = scmp.ne.s32.totalorder %s52, %s54
      %p61 = scmp.eq.s32.totalorder %s23, 1
      %p62 = por %p60, %p61
      %p63 = scmp.ne.s32.totalorder %s54, %s55
      %p64 = scmp.eq.s32.totalorder %s23, 0
      %p65 = por %p63, %p64
      %p66 = scmp.ne.s32.totalorder %s54, %s55
      %p67 = scmp.eq.s32.totalorder %s24, 1
      %p68 = por %p66, %p67
      %p70 = scmp.ne.s32.totalorder %s55, %s69
      %p71 = scmp.eq.s32.totalorder %s24, 0
      %p72 = por %p70, %p71
      %s74 = sadd.s32 %s73, 1
      %p77 = scmp.eq.s32.totalorder %s18, 1
      %p78 = scmp.ne.s32.totalorder %s73, %s75
      %p79 = scmp.eq.s32.totalorder %s18, 0
      %p80 = por %p78, %p79
      %p81 = scmp.ne.s32.totalorder %s73, %s75
      %p82 = scmp.eq.s32.totalorder %s23, 1
      %p83 = por %p81, %p82
      %p84 = scmp.ne.s32.totalorder %s75, %s76
      %p85 = scmp.eq.s32.totalorder %s23, 0
      %p86 = por %p84, %p85
      %p87 = scmp.ne.s32.totalorder %s75, %s76
      %p88 = scmp.eq.s32.totalorder %s24, 1
      %p89 = por %p87, %p88
      %p91 = scmp.ne.s32.totalorder %s76, %s90
      %p92 = scmp.eq.s32.totalorder %s24, 0
      %p93 = por %p91, %p92
      %s95 = sadd.s32 %s94, 1
      %p98 = scmp.eq.s32.totalorder %s18, 1
      %p99 = scmp.ne.s32.totalorder %s94, %s96
      %p100 = scmp.eq.s32.totalorder %s18, 0
      %p101 = por %p99, %p100
      %p102 = scmp.ne.s32.totalorder %s94, %s96
      %p103 = scmp.eq.s32.totalorder %s23, 1
      %p104 = por %p102, %p103
      %p105 = scmp.ne.s32.totalorder %s96, %s97
      %p106 = scmp.eq.s32.totalorder %s23, 0
      %p107 = por %p105, %p106
      %p108 = scmp.ne.s32.totalorder %s96, %s97
      %p109 = scmp.eq.s32.totalorder %s24, 1
      %p110 = por %p108, %p109
      %p112 = scmp.ne.s32.totalorder %s97, %s111
      %p113 = scmp.eq.s32.totalorder %s24, 0
      %p114 = por %p112, %p113
      %s116 = sadd.s32 %s115, 1
      %p119 = scmp.eq.s32.totalorder %s18, 1
      %p120 = scmp.ne.s32.totalorder %s115, %s117
      %p121 = scmp.eq.s32.totalorder %s18, 0
      %p122 = por %p120, %p121
      %p123 = scmp.ne.s32.totalorder %s115, %s117
      %p124 = scmp.eq.s32.totalorder %s23, 1
      %p125 = por %p123, %p124
      %p126 = scmp.ne.s32.totalorder %s117, %s118
      %p127 = scmp.eq.s32.totalorder %s23, 0
      %p128 = por %p126, %p127
      %p129 = scmp.ne.s32.totalorder %s117, %s118
      %p130 = scmp.eq.s32.totalorder %s24, 1
      %p131 = por %p129, %p130
      %p133 = scmp.ne.s32.totalorder %s118, %s132
      %p134 = scmp.eq.s32.totalorder %s24, 0
      %p135 = por %p133, %p134
      %s136 = ssub.s32 %s18, %s25
      %p137 = scmp.eq.s32.totalorder %s136, 0
      %s139 = sadd.s32 %s138, 1
      %s140 = scalar_select %p137, %s138, %s139
      %p143 = pneg %p137
      %p144 = scmp.eq.s32.totalorder %s18, 1
      %p145 = por %p143, %p144
      %p146 = scmp.ne.s32.totalorder %s138, %s141
      %p147 = scmp.eq.s32.totalorder %s18, 0
      %p148 = por %p146, %p147
      %p149 = scmp.ne.s32.totalorder %s138, %s141
      %p150 = scmp.eq.s32.totalorder %s23, 1
      %p151 = por %p149, %p150
      %p152 = scmp.ne.s32.totalorder %s141, %s142
      %p153 = scmp.eq.s32.totalorder %s23, 0
      %p154 = por %p152, %p153
      %p155 = scmp.ne.s32.totalorder %s141, %s142
      %p156 = scmp.eq.s32.totalorder %s24, 1
      %p157 = por %p155, %p156
      %p159 = scmp.ne.s32.totalorder %s142, %s158
      %p160 = scmp.eq.s32.totalorder %s24, 0
      %p161 = por %p159, %p160
      %p162 = scmp.le.s32.totalorder 1, %s18
      %p163 = scmp.lt.s32.totalorder %s18, 3
      %p164 = pnand %p162, %p163
      %p165 = pneg %p164
      // Predicated region
      $region9: #{bottleneck_forward.1} parent=5 // pred_check
        _
      $region10: #{bottleneck_forward.1} parent=5 // pred_check_branch
        %167 = sbr.rel (%p164) target = $region12
      $region11: #{bottleneck_forward.1} parent=5 // pred_region
        %s168 = ssub.s32 %s18, 1
        // Predicated region
        $region13: #{bottleneck_forward.1} parent=11 // pred_check
          %p169 = pneg %p65
        $region14: #{bottleneck_forward.1} parent=11 // pred_check_branch
          %171 = sbr.rel (%p169) target = $region16
        $region15: #{bottleneck_forward.1} parent=11 // pred_region
          _
        $region16: #{bottleneck_forward.1} parent=11 // pred_fallthru
          _
        // Predicated region
        $region17: #{bottleneck_forward.1} parent=11 // pred_check
          %p172 = pneg %p86
        $region18: #{bottleneck_forward.1} parent=11 // pred_check_branch
          %174 = sbr.rel (%p172) target = $region20
        $region19: #{bottleneck_forward.1} parent=11 // pred_region
          _
        $region20: #{bottleneck_forward.1} parent=11 // pred_fallthru
          _
        // Predicated region
        $region21: #{bottleneck_forward.1} parent=11 // pred_check
          %p175 = pneg %p107
        $region22: #{bottleneck_forward.1} parent=11 // pred_check_branch
          %177 = sbr.rel (%p175) target = $region24
        $region23: #{bottleneck_forward.1} parent=11 // pred_region
          %s179 = ssub.s32 2304, 2304
          %180 = vsyncadd [#allocation6], %s179
          %s181 = sshll.u32 [#allocation5], 4
          %s182 = int_to_ptr.vmem [resolvable:$true] %s181
          %187 = dma.hbm_to_vmem [thread:$0]  %s3, 2304, %s182, [#allocation6], 128, 128, 8
        $region24: #{bottleneck_forward.1} parent=11 // pred_fallthru
          _
        // Predicated region
        $region25: #{bottleneck_forward.1} parent=11 // pred_check
          %p188 = pneg %p128
        $region26: #{bottleneck_forward.1} parent=11 // pred_check_branch
          %190 = sbr.rel (%p188) target = $region28
        $region27: #{bottleneck_forward.1} parent=11 // pred_region
          _
        $region28: #{bottleneck_forward.1} parent=11 // pred_fallthru
          _
      $region12: #{bottleneck_forward.1} parent=5 // pred_fallthru
        _
      %p191 = scmp.lt.s32.totalorder %s18, 2
      // Predicated region
      $region29: #{bottleneck_forward.1} parent=5 // pred_check
        %p192 = pneg %p191
      $region30: #{bottleneck_forward.1} parent=5 // pred_check_branch
        %194 = sbr.rel (%p192) target = $region32
      $region31: #{bottleneck_forward.1} parent=5 // pred_region
        // Predicated region
        $region33: #{bottleneck_forward.1} parent=31 // pred_check
          %p195 = pneg %p38
        $region34: #{bottleneck_forward.1} parent=31 // pred_check_branch
          %197 = sbr.rel (%p195) target = $region36
        $region35: #{bottleneck_forward.1} parent=31 // pred_region
          %s198 = sand.u32 %s28, 1
          %s199 = scalar_lea.sflag [#allocation3], %s198
          %s200 = sand.u32 %s28, 1
          %s201 = smul.addr %s200, 256
          %s202 = scalar_lea.vmem [#allocation2], %s201
          %s204 = ssub.s32 4096, 4096
          %205 = vsyncadd %s199, %s204
          %s206 = smul.addr %s18, 32
          %s207 = smul.addr %s206, 128
          %s208 = scalar_lea.hbm %s0, %s207
          %s209 = sshll.u32 %s202, 4
          %s210 = int_to_ptr.vmem [resolvable:$true] %s209
          %215 = dma.hbm_to_vmem [thread:$0]  %s208, 4096, %s210, %s199, 128, 128, 8
        $region36: #{bottleneck_forward.1} parent=31 // pred_fallthru
          _
      $region32: #{bottleneck_forward.1} parent=5 // pred_fallthru
        _
      %p216 = scmp.le.s32.totalorder 1, %s18
      %p217 = scmp.lt.s32.totalorder %s18, 3
      %p218 = pnand %p216, %p217
      %p219 = pneg %p218
      // Predicated region
      $region37: #{bottleneck_forward.1} parent=5 // pred_check
        _
      $region38: #{bottleneck_forward.1} parent=5 // pred_check_branch
        %221 = sbr.rel (%p218) target = $region40
      $region39: #{bottleneck_forward.1} parent=5 // pred_region
        %s222 = ssub.s32 %s18, 1
        %s223 = sand.u32 %s31, 1
        %s224 = scalar_lea.sflag [#allocation3], %s223
        %s225 = sand.u32 %s31, 1
        %s226 = smul.addr %s225, 256
        %s227 = scalar_lea.vmem [#allocation2], %s226
        // Predicated region
        $region41: #{bottleneck_forward.1} parent=39 // pred_check
          %p228 = pneg %p44
        $region42: #{bottleneck_forward.1} parent=39 // pred_check_branch
          %230 = sbr.rel (%p228) target = $region44
        $region43: #{bottleneck_forward.1} parent=39 // pred_region
          %231 = dma.done %s224, 4096
        $region44: #{bottleneck_forward.1} parent=39 // pred_fallthru
          _
        // Predicated region
        $region45: #{bottleneck_forward.1} parent=39 // pred_check
          %p232 = pneg %p107
        $region46: #{bottleneck_forward.1} parent=39 // pred_check_branch
          %234 = sbr.rel (%p232) target = $region48
        $region47: #{bottleneck_forward.1} parent=39 // pred_region
          %235 = dma.done [#allocation6], 2304
        $region48: #{bottleneck_forward.1} parent=39 // pred_fallthru
          _
        %s236 = sand.u32 %s31, 1
        %s237 = scalar_lea.sflag [#allocation3], %s236
        %s238 = sand.u32 %s31, 1
        %s239 = smul.addr %s238, 256
        %s240 = scalar_lea.vmem [#allocation2], %s239
        %p241 = pneg %p44
        %p242 = pneg %p41
        %p243 = pneg %p65
        %p244 = pneg %p62
        %p245 = pneg %p86
        %p246 = pneg %p83
        %p247 = pneg %p107
        %p248 = pneg %p104
        %p249 = pneg %p128
        %p250 = pneg %p125
        %p251 = pneg %p154
        %p252 = pneg %p151
        %s253 = sand.u32 %s141, 1
        %s254 = scalar_lea.sflag [#allocation4], %s253
        %s255 = sand.u32 %s141, 1
        %s256 = smul.addr %s255, 256
        %s257 = scalar_lea.vmem [#allocation7], %s256
        %v258 = vld [vmem:[%s227] sm:$0xff]
        %v259 = vld [vmem:[%s227 + $0x8] sm:$0xff]
        %v260 = vld [vmem:[%s227 + $0x10] sm:$0xff]
        %v261 = vld [vmem:[%s227 + $0x18] sm:$0xff]
        %v262 = vld [vmem:[%s227 + $0x20] sm:$0xff]
        %v263 = vld [vmem:[%s227 + $0x28] sm:$0xff]
        %v264 = vld [vmem:[%s227 + $0x30] sm:$0xff]
        %v265 = vld [vmem:[%s227 + $0x38] sm:$0xff]
        %v266 = vld [vmem:[%s227 + $0x40] sm:$0xff]
        %v267 = vld [vmem:[%s227 + $0x48] sm:$0xff]
        %v268 = vld [vmem:[%s227 + $0x50] sm:$0xff]
        %v269 = vld [vmem:[%s227 + $0x58] sm:$0xff]
        %v270 = vld [vmem:[%s227 + $0x60] sm:$0xff]
        %v271 = vld [vmem:[%s227 + $0x68] sm:$0xff]
        %v272 = vld [vmem:[%s227 + $0x70] sm:$0xff]
        %v273 = vld [vmem:[%s227 + $0x78] sm:$0xff]
        %v274 = vld [vmem:[%s227 + $0x80] sm:$0xff]
        %v275 = vld [vmem:[%s227 + $0x88] sm:$0xff]
        %v276 = vld [vmem:[%s227 + $0x90] sm:$0xff]
        %v277 = vld [vmem:[%s227 + $0x98] sm:$0xff]
        %v278 = vld [vmem:[%s227 + $0xa0] sm:$0xff]
        %v279 = vld [vmem:[%s227 + $0xa8] sm:$0xff]
        %v280 = vld [vmem:[%s227 + $0xb0] sm:$0xff]
        %v281 = vld [vmem:[%s227 + $0xb8] sm:$0xff]
        %v282 = vld [vmem:[%s227 + $0xc0] sm:$0xff]
        %v283 = vld [vmem:[%s227 + $0xc8] sm:$0xff]
        %v284 = vld [vmem:[%s227 + $0xd0] sm:$0xff]
        %v285 = vld [vmem:[%s227 + $0xd8] sm:$0xff]
        %v286 = vld [vmem:[%s227 + $0xe0] sm:$0xff]
        %v287 = vld [vmem:[%s227 + $0xe8] sm:$0xff]
        %v288 = vld [vmem:[%s227 + $0xf0] sm:$0xff]
        %v289 = vld [vmem:[%s227 + $0xf8] sm:$0xff]
        %v290 = vld [vmem:[%s1] sm:$0xff]
        %v291 = vld [vmem:[%s1 + $0x8] sm:$0xff]
        %v292 = vld [vmem:[%s1 + $0x10] sm:$0xff]
        %v293 = vld [vmem:[%s1 + $0x18] sm:$0xff]
        %v294 = vld [vmem:[%s2] sm:$0x1]
        %v296 = vlaneseq
        %v297 = vshrl.u32 %v296, 7
        %v298 = vsub.s32 0, %v297
        %v299 = vrot.slane %v294, %v298
        %vm301 = vcmask 261120
        %v303 = vsel %vm301, %v258, 0
        %v306 = vsel %vm301, %v259, 0
        %v309 = vsel %vm301, %v260, 0
        %v312 = vsel %vm301, %v261, 0
        %v315 = vsel %vm301, %v262, 0
        %v318 = vsel %vm301, %v263, 0
        %v321 = vsel %vm301, %v264, 0
        %v324 = vsel %vm301, %v265, 0
        %v327 = vsel %vm301, %v266, 0
        %v330 = vsel %vm301, %v267, 0
        %v333 = vsel %vm301, %v268, 0
        %v336 = vsel %vm301, %v269, 0
        %v339 = vsel %vm301, %v270, 0
        %v342 = vsel %vm301, %v271, 0
        %v345 = vsel %vm301, %v272, 0
        %v348 = vsel %vm301, %v273, 0
        %v351 = vsel %vm301, %v274, 0
        %v354 = vsel %vm301, %v275, 0
        %v357 = vsel %vm301, %v276, 0
        %v360 = vsel %vm301, %v277, 0
        %v363 = vsel %vm301, %v278, 0
        %v366 = vsel %vm301, %v279, 0
        %v369 = vsel %vm301, %v280, 0
        %v372 = vsel %vm301, %v281, 0
        %v375 = vsel %vm301, %v282, 0
        %v378 = vsel %vm301, %v283, 0
        %v381 = vsel %vm301, %v284, 0
        %v384 = vsel %vm301, %v285, 0
        %v387 = vsel %vm301, %v286, 0
        %v390 = vsel %vm301, %v287, 0
        %v393 = vsel %vm301, %v288, 0
        %v396 = vsel %vm301, %v289, 0
        %398 = vmatprep.subr.mxu0 0.0
        %399 = vmatpush1.msra.mxu0 %v290
        %400 = vmatprep.subr.mxu0 0.0
        %401 = vmatpush1.msra.mxu0 %v291
        %402 = vmatprep.subr.mxu0 0.0
        %403 = vmatpush1.msra.mxu0 %v292
        %404 = vmatprep.subr.mxu0 0.0
        %405 = vmatpush1.msra.mxu0 %v293
        %406 = vmatprep.subr.mxu0 0.0
        %407 = vmatpush1.msra.mxu0 0.0
        %408 = vmatprep.subr.mxu0 0.0
        %409 = vmatpush1.msra.mxu0 0.0
        %410 = vmatprep.subr.mxu0 0.0
        %411 = vmatpush1.msra.mxu0 0.0
        %412 = vmatprep.subr.mxu0 0.0
        %413 = vmatpush1.msra.mxu0 0.0
        %414 = vmatprep.subr.mxu0 0.0
        %415 = vmatpush1.msra.mxu0 0.0
        %416 = vmatprep.subr.mxu0 0.0
        %417 = vmatpush1.msra.mxu0 0.0
        %418 = vmatprep.subr.mxu0 0.0
        %419 = vmatpush1.msra.mxu0 0.0
        %420 = vmatprep.subr.mxu0 0.0
        %421 = vmatpush1.msra.mxu0 0.0
        %422 = vmatprep.subr.mxu0 0.0
        %423 = vmatpush1.msra.mxu0 0.0
        %424 = vmatprep.subr.mxu0 0.0
        %425 = vmatpush1.msra.mxu0 0.0
        %426 = vmatprep.subr.mxu0 0.0
        %427 = vmatpush1.msra.mxu0 0.0
        %428 = vmatprep.subr.mxu0 0.0
        %429 = vmatpush1.msra.mxu0 0.0
        %430 = vmatprep.subr.mxu0 0.0
        %431 = vmatpush1.msra.mxu0 0.0
        %432 = vmatprep.subr.mxu0 0.0
        %433 = vmatpush1.msra.mxu0 0.0
        %434 = vmatprep.subr.mxu0 0.0
        %435 = vmatpush1.msra.mxu0 0.0
        %436 = vmatprep.subr.mxu0 0.0
        %437 = vmatpush1.msra.mxu0 0.0
        %438 = vmatprep.subr.mxu0 0.0
        %439 = vmatpush1.msra.mxu0 0.0
        %440 = vmatprep.subr.mxu0 0.0
        %441 = vmatpush1.msra.mxu0 0.0
        %442 = vmatprep.subr.mxu0 0.0
        %443 = vmatpush1.msra.mxu0 0.0
        %444 = vmatprep.subr.mxu0 0.0
        %445 = vmatpush1.msra.mxu0 0.0
        %446 = vmatprep.subr.mxu0 0.0
        %447 = vmatpush1.msra.mxu0 0.0
        %448 = vmatprep.subr.mxu0 0.0
        %449 = vmatpush1.msra.mxu0 0.0
        %450 = vmatprep.subr.mxu0 0.0
        %451 = vmatpush1.msra.mxu0 0.0
        %452 = vmatprep.subr.mxu0 0.0
        %453 = vmatpush1.msra.mxu0 0.0
        %454 = vmatprep.subr.mxu0 0.0
        %455 = vmatpush1.msra.mxu0 0.0
        %456 = vmatprep.subr.mxu0 0.0
        %457 = vmatpush1.msra.mxu0 0.0
        %458 = vmatprep.subr.mxu0 0.0
        %459 = vmatpush1.msra.mxu0 0.0
        %460 = vmatprep.subr.mxu0 0.0
        %461 = vmatpush1.msra.mxu0 0.0
        %462 = vmatprep.mubr.f32.mxu0 0.0
        %463 = vmatmul.mubr.f32.gmra.mrb[0].mxu0 %v303
        %v464 = vpop.f32.mrb[0].mxu0
        %v465 = vadd.f32 %v299, %v464
        %v466 = vpop.f32.mrb[0].mxu0
        %467 = vmatprep.mubr.f32.mxu0 0.0
        %468 = vmatmul.mubr.f32.gmra.mrb[0].mxu0 %v306
        %v469 = vpop.f32.mrb[0].mxu0
        %v470 = vadd.f32 %v299, %v469
        %v471 = vpop.f32.mrb[0].mxu0
        %472 = vmatprep.mubr.f32.mxu0 0.0
        %473 = vmatmul.mubr.f32.gmra.mrb[0].mxu0 %v309
        %v474 = vpop.f32.mrb[0].mxu0
        %v475 = vadd.f32 %v299, %v474
        %v476 = vpop.f32.mrb[0].mxu0
        %477 = vmatprep.mubr.f32.mxu0 0.0
        %478 = vmatmul.mubr.f32.gmra.mrb[0].mxu0 %v312
        %v479 = vpop.f32.mrb[0].mxu0
        %v480 = vadd.f32 %v299, %v479
        %v481 = vpop.f32.mrb[0].mxu0
        %482 = vmatprep.mubr.f32.mxu0 0.0
        %483 = vmatmul.mubr.f32.gmra.mrb[0].mxu0 %v315
        %v484 = vpop.f32.mrb[0].mxu0
        %v485 = vadd.f32 %v299, %v484
        %v486 = vpop.f32.mrb[0].mxu0
        %487 = vmatprep.mubr.f32.mxu0 0.0
        %488 = vmatmul.mubr.f32.gmra.mrb[0].mxu0 %v318
        %v489 = vpop.f32.mrb[0].mxu0
        %v490 = vadd.f32 %v299, %v489
        %v491 = vpop.f32.mrb[0].mxu0
        %492 = vmatprep.mubr.f32.mxu0 0.0
        %493 = vmatmul.mubr.f32.gmra.mrb[0].mxu0 %v321
        %v494 = vpop.f32.mrb[0].mxu0
        %v495 = vadd.f32 %v299, %v494
        %v496 = vpop.f32.mrb[0].mxu0
        %497 = vmatprep.mubr.f32.mxu0 0.0
        %498 = vmatmul.mubr.f32.gmra.mrb[0].mxu0 %v324
        %v499 = vpop.f32.mrb[0].mxu0
        %v500 = vadd.f32 %v299, %v499
        %v501 = vpop.f32.mrb[0].mxu0
        %502 = vmatprep.mubr.f32.mxu0 0.0
        %503 = vmatmul.mubr.f32.gmra.mrb[0].mxu0 %v327
        %v504 = vpop.f32.mrb[0].mxu0
        %v505 = vadd.f32 %v299, %v504
        %v506 = vpop.f32.mrb[0].mxu0
        %507 = vmatprep.mubr.f32.mxu0 0.0
        %508 = vmatmul.mubr.f32.gmra.mrb[0].mxu0 %v330
        %v509 = vpop.f32.mrb[0].mxu0
        %v510 = vadd.f32 %v299, %v509
        %v511 = vpop.f32.mrb[0].mxu0
        %512 = vmatprep.mubr.f32.mxu0 0.0
        %513 = vmatmul.mubr.f32.gmra.mrb[0].mxu0 %v333
        %v514 = vpop.f32.mrb[0].mxu0
        %v515 = vadd.f32 %v299, %v514
        %v516 = vpop.f32.mrb[0].mxu0
        %517 = vmatprep.mubr.f32.mxu0 0.0
        %518 = vmatmul.mubr.f32.gmra.mrb[0].mxu0 %v336
        %v519 = vpop.f32.mrb[0].mxu0
        %v520 = vadd.f32 %v299, %v519
        %v521 = vpop.f32.mrb[0].mxu0
        %522 = vmatprep.mubr.f32.mxu0 0.0
        %523 = vmatmul.mubr.f32.gmra.mrb[0].mxu0 %v339
        %v524 = vpop.f32.mrb[0].mxu0
        %v525 = vadd.f32 %v299, %v524
        %v526 = vpop.f32.mrb[0].mxu0
        %527 = vmatprep.mubr.f32.mxu0 0.0
        %528 = vmatmul.mubr.f32.gmra.mrb[0].mxu0 %v342
        %v529 = vpop.f32.mrb[0].mxu0
        %v530 = vadd.f32 %v299, %v529
        %v531 = vpop.f32.mrb[0].mxu0
        %532 = vmatprep.mubr.f32.mxu0 0.0
        %533 = vmatmul.mubr.f32.gmra.mrb[0].mxu0 %v345
        %v534 = vpop.f32.mrb[0].mxu0
        %v535 = vadd.f32 %v299, %v534
        %v536 = vpop.f32.mrb[0].mxu0
        %537 = vmatprep.mubr.f32.mxu0 0.0
        %538 = vmatmul.mubr.f32.gmra.mrb[0].mxu0 %v348
        %v539 = vpop.f32.mrb[0].mxu0
        %v540 = vadd.f32 %v299, %v539
        %v541 = vpop.f32.mrb[0].mxu0
        %542 = vmatprep.mubr.f32.mxu0 0.0
        %543 = vmatmul.mubr.f32.gmra.mrb[0].mxu0 %v351
        %v544 = vpop.f32.mrb[0].mxu0
        %v545 = vadd.f32 %v299, %v544
        %v546 = vpop.f32.mrb[0].mxu0
        %547 = vmatprep.mubr.f32.mxu0 0.0
        %548 = vmatmul.mubr.f32.gmra.mrb[0].mxu0 %v354
        %v549 = vpop.f32.mrb[0].mxu0
        %v550 = vadd.f32 %v299, %v549
        %v551 = vpop.f32.mrb[0].mxu0
        %552 = vmatprep.mubr.f32.mxu0 0.0
        %553 = vmatmul.mubr.f32.gmra.mrb[0].mxu0 %v357
        %v554 = vpop.f32.mrb[0].mxu0
        %v555 = vadd.f32 %v299, %v554
        %v556 = vpop.f32.mrb[0].mxu0
        %557 = vmatprep.mubr.f32.mxu0 0.0
        %558 = vmatmul.mubr.f32.gmra.mrb[0].mxu0 %v360
        %v559 = vpop.f32.mrb[0].mxu0
        %v560 = vadd.f32 %v299, %v559
        %v561 = vpop.f32.mrb[0].mxu0
        %562 = vmatprep.mubr.f32.mxu0 0.0
        %563 = vmatmul.mubr.f32.gmra.mrb[0].mxu0 %v363
        %v564 = vpop.f32.mrb[0].mxu0
        %v565 = vadd.f32 %v299, %v564
        %v566 = vpop.f32.mrb[0].mxu0
        %567 = vmatprep.mubr.f32.mxu0 0.0
        %568 = vmatmul.mubr.f32.gmra.mrb[0].mxu0 %v366
        %v569 = vpop.f32.mrb[0].mxu0
        %v570 = vadd.f32 %v299, %v569
        %v571 = vpop.f32.mrb[0].mxu0
        %572 = vmatprep.mubr.f32.mxu0 0.0
        %573 = vmatmul.mubr.f32.gmra.mrb[0].mxu0 %v369
        %v574 = vpop.f32.mrb[0].mxu0
        %v575 = vadd.f32 %v299, %v574
        %v576 = vpop.f32.mrb[0].mxu0
        %577 = vmatprep.mubr.f32.mxu0 0.0
        %578 = vmatmul.mubr.f32.gmra.mrb[0].mxu0 %v372
        %v579 = vpop.f32.mrb[0].mxu0
        %v580 = vadd.f32 %v299, %v579
        %v581 = vpop.f32.mrb[0].mxu0
        %582 = vmatprep.mubr.f32.mxu0 0.0
        %583 = vmatmul.mubr.f32.gmra.mrb[0].mxu0 %v375
        %v584 = vpop.f32.mrb[0].mxu0
        %v585 = vadd.f32 %v299, %v584
        %v586 = vpop.f32.mrb[0].mxu0
        %587 = vmatprep.mubr.f32.mxu0 0.0
        %588 = vmatmul.mubr.f32.gmra.mrb[0].mxu0 %v378
        %v589 = vpop.f32.mrb[0].mxu0
        %v590 = vadd.f32 %v299, %v589
        %v591 = vpop.f32.mrb[0].mxu0
        %592 = vmatprep.mubr.f32.mxu0 0.0
        %593 = vmatmul.mubr.f32.gmra.mrb[0].mxu0 %v381
        %v594 = vpop.f32.mrb[0].mxu0
        %v595 = vadd.f32 %v299, %v594
        %v596 = vpop.f32.mrb[0].mxu0
        %597 = vmatprep.mubr.f32.mxu0 0.0
        %598 = vmatmul.mubr.f32.gmra.mrb[0].mxu0 %v384
        %v599 = vpop.f32.mrb[0].mxu0
        %v600 = vadd.f32 %v299, %v599
        %v601 = vpop.f32.mrb[0].mxu0
        %602 = vmatprep.mubr.f32.mxu0 0.0
        %603 = vmatmul.mubr.f32.gmra.mrb[0].mxu0 %v387
        %v604 = vpop.f32.mrb[0].mxu0
        %v605 = vadd.f32 %v299, %v604
        %v606 = vpop.f32.mrb[0].mxu0
        %607 = vmatprep.mubr.f32.mxu0 0.0
        %608 = vmatmul.mubr.f32.gmra.mrb[0].mxu0 %v390
        %v609 = vpop.f32.mrb[0].mxu0
        %v610 = vadd.f32 %v299, %v609
        %v611 = vpop.f32.mrb[0].mxu0
        %612 = vmatprep.mubr.f32.mxu0 0.0
        %613 = vmatmul.mubr.f32.gmra.mrb[0].mxu0 %v393
        %v614 = vpop.f32.mrb[0].mxu0
        %v615 = vadd.f32 %v299, %v614
        %v616 = vpop.f32.mrb[0].mxu0
        %617 = vmatprep.mubr.f32.mxu0 0.0
        %618 = vmatmul.mubr.f32.gmra.mrb[0].mxu0 %v396
        %v619 = vpop.f32.mrb[0].mxu0
        %v620 = vadd.f32 %v299, %v619
        %v621 = vpop.f32.mrb[0].mxu0
        %622 = vdwg.mxu0
        %v623 = vadd.f32 %v465, 3.0
        %v624 = vadd.f32 %v470, 3.0
        %v625 = vadd.f32 %v475, 3.0
        %v626 = vadd.f32 %v480, 3.0
        %v627 = vadd.f32 %v485, 3.0
        %v628 = vadd.f32 %v490, 3.0
        %v629 = vadd.f32 %v495, 3.0
        %v630 = vadd.f32 %v500, 3.0
        %v631 = vadd.f32 %v505, 3.0
        %v632 = vadd.f32 %v510, 3.0
        %v633 = vadd.f32 %v515, 3.0
        %v634 = vadd.f32 %v520, 3.0
        %v635 = vadd.f32 %v525, 3.0
        %v636 = vadd.f32 %v530, 3.0
        %v637 = vadd.f32 %v535, 3.0
        %v638 = vadd.f32 %v540, 3.0
        %v639 = vadd.f32 %v545, 3.0
        %v640 = vadd.f32 %v550, 3.0
        %v641 = vadd.f32 %v555, 3.0
        %v642 = vadd.f32 %v560, 3.0
        %v643 = vadd.f32 %v565, 3.0
        %v644 = vadd.f32 %v570, 3.0
        %v645 = vadd.f32 %v575, 3.0
        %v646 = vadd.f32 %v580, 3.0
        %v647 = vadd.f32 %v585, 3.0
        %v648 = vadd.f32 %v590, 3.0
        %v649 = vadd.f32 %v595, 3.0
        %v650 = vadd.f32 %v600, 3.0
        %v651 = vadd.f32 %v605, 3.0
        %v652 = vadd.f32 %v610, 3.0
        %v653 = vadd.f32 %v615, 3.0
        %v654 = vadd.f32 %v620, 3.0
        %v655 = vmax.f32 %v623, 0.0
        %v656 = vmax.f32 %v624, 0.0
        %v657 = vmax.f32 %v625, 0.0
        %v658 = vmax.f32 %v626, 0.0
        %v659 = vmax.f32 %v627, 0.0
        %v660 = vmax.f32 %v628, 0.0
        %v661 = vmax.f32 %v629, 0.0
        %v662 = vmax.f32 %v630, 0.0
        %v663 = vmax.f32 %v631, 0.0
        %v664 = vmax.f32 %v632, 0.0
        %v665 = vmax.f32 %v633, 0.0
        %v666 = vmax.f32 %v634, 0.0
        %v667 = vmax.f32 %v635, 0.0
        %v668 = vmax.f32 %v636, 0.0
        %v669 = vmax.f32 %v637, 0.0
        %v670 = vmax.f32 %v638, 0.0
        %v671 = vmax.f32 %v639, 0.0
        %v672 = vmax.f32 %v640, 0.0
        %v673 = vmax.f32 %v641, 0.0
        %v674 = vmax.f32 %v642, 0.0
        %v675 = vmax.f32 %v643, 0.0
        %v676 = vmax.f32 %v644, 0.0
        %v677 = vmax.f32 %v645, 0.0
        %v678 = vmax.f32 %v646, 0.0
        %v679 = vmax.f32 %v647, 0.0
        %v680 = vmax.f32 %v648, 0.0
        %v681 = vmax.f32 %v649, 0.0
        %v682 = vmax.f32 %v650, 0.0
        %v683 = vmax.f32 %v651, 0.0
        %v684 = vmax.f32 %v652, 0.0
        %v685 = vmax.f32 %v653, 0.0
        %v686 = vmax.f32 %v654, 0.0
        %v687 = vmin.f32 %v655, 6.0
        %v688 = vmin.f32 %v656, 6.0
        %v689 = vmin.f32 %v657, 6.0
        %v690 = vmin.f32 %v658, 6.0
        %v691 = vmin.f32 %v659, 6.0
        %v692 = vmin.f32 %v660, 6.0
        %v693 = vmin.f32 %v661, 6.0
        %v694 = vmin.f32 %v662, 6.0
        %v695 = vmin.f32 %v663, 6.0
        %v696 = vmin.f32 %v664, 6.0
        %v697 = vmin.f32 %v665, 6.0
        %v698 = vmin.f32 %v666, 6.0
        %v699 = vmin.f32 %v667, 6.0
        %v700 = vmin.f32 %v668, 6.0
        %v701 = vmin.f32 %v669, 6.0
        %v702 = vmin.f32 %v670, 6.0
        %v703 = vmin.f32 %v671, 6.0
        %v704 = vmin.f32 %v672, 6.0
        %v705 = vmin.f32 %v673, 6.0
        %v706 = vmin.f32 %v674, 6.0
        %v707 = vmin.f32 %v675, 6.0
        %v708 = vmin.f32 %v676, 6.0
        %v709 = vmin.f32 %v677, 6.0
        %v710 = vmin.f32 %v678, 6.0
        %v711 = vmin.f32 %v679, 6.0
        %v712 = vmin.f32 %v680, 6.0
        %v713 = vmin.f32 %v681, 6.0
        %v714 = vmin.f32 %v682, 6.0
        %v715 = vmin.f32 %v683, 6.0
        %v716 = vmin.f32 %v684, 6.0
        %v717 = vmin.f32 %v685, 6.0
        %v718 = vmin.f32 %v686, 6.0
        %v719 = vmul.f32 %v465, %v687
        %v720 = vmul.f32 %v470, %v688
        %v721 = vmul.f32 %v475, %v689
        %v722 = vmul.f32 %v480, %v690
        %v723 = vmul.f32 %v485, %v691
        %v724 = vmul.f32 %v490, %v692
        %v725 = vmul.f32 %v495, %v693
        %v726 = vmul.f32 %v500, %v694
        %v727 = vmul.f32 %v505, %v695
        %v728 = vmul.f32 %v510, %v696
        %v729 = vmul.f32 %v515, %v697
        %v730 = vmul.f32 %v520, %v698
        %v731 = vmul.f32 %v525, %v699
        %v732 = vmul.f32 %v530, %v700
        %v733 = vmul.f32 %v535, %v701
        %v734 = vmul.f32 %v540, %v702
        %v735 = vmul.f32 %v545, %v703
        %v736 = vmul.f32 %v550, %v704
        %v737 = vmul.f32 %v555, %v705
        %v738 = vmul.f32 %v560, %v706
        %v739 = vmul.f32 %v565, %v707
        %v740 = vmul.f32 %v570, %v708
        %v741 = vmul.f32 %v575, %v709
        %v742 = vmul.f32 %v580, %v710
        %v743 = vmul.f32 %v585, %v711
        %v744 = vmul.f32 %v590, %v712
        %v745 = vmul.f32 %v595, %v713
        %v746 = vmul.f32 %v600, %v714
        %v747 = vmul.f32 %v605, %v715
        %v748 = vmul.f32 %v610, %v716
        %v749 = vmul.f32 %v615, %v717
        %v750 = vmul.f32 %v620, %v718
        %v751 = vmul.f32 %v719, 0.16666667
        %v752 = vmul.f32 %v720, 0.16666667
        %v753 = vmul.f32 %v721, 0.16666667
        %v754 = vmul.f32 %v722, 0.16666667
        %v755 = vmul.f32 %v723, 0.16666667
        %v756 = vmul.f32 %v724, 0.16666667
        %v757 = vmul.f32 %v725, 0.16666667
        %v758 = vmul.f32 %v726, 0.16666667
        %v759 = vmul.f32 %v727, 0.16666667
        %v760 = vmul.f32 %v728, 0.16666667
        %v761 = vmul.f32 %v729, 0.16666667
        %v762 = vmul.f32 %v730, 0.16666667
        %v763 = vmul.f32 %v731, 0.16666667
        %v764 = vmul.f32 %v732, 0.16666667
        %v765 = vmul.f32 %v733, 0.16666667
        %v766 = vmul.f32 %v734, 0.16666667
        %v767 = vmul.f32 %v735, 0.16666667
        %v768 = vmul.f32 %v736, 0.16666667
        %v769 = vmul.f32 %v737, 0.16666667
        %v770 = vmul.f32 %v738, 0.16666667
        %v771 = vmul.f32 %v739, 0.16666667
        %v772 = vmul.f32 %v740, 0.16666667
        %v773 = vmul.f32 %v741, 0.16666667
        %v774 = vmul.f32 %v742, 0.16666667
        %v775 = vmul.f32 %v743, 0.16666667
        %v776 = vmul.f32 %v744, 0.16666667
        %v777 = vmul.f32 %v745, 0.16666667
        %v778 = vmul.f32 %v746, 0.16666667
        %v779 = vmul.f32 %v747, 0.16666667
        %v780 = vmul.f32 %v748, 0.16666667
        %v781 = vmul.f32 %v749, 0.16666667
        %v782 = vmul.f32 %v750, 0.16666667
        %v783 = vlaneseq
        %v784 = vshrl.u32 %v783, 7
        %v785 = vadd.s32 %v784, 8
        %v786 = vadd.s32 %v784, 16
        %v787 = vadd.s32 %v784, 24
        %v788 = vadd.s32 %v784, 32
        %v789 = vadd.s32 %v784, 40
        %v790 = vadd.s32 %v784, 48
        %v791 = vadd.s32 %v784, 56
        %v792 = vadd.s32 %v784, 64
        %v793 = vadd.s32 %v784, 72
        %v794 = vadd.s32 %v784, 80
        %v795 = vadd.s32 %v784, 88
        %v796 = vadd.s32 %v784, 96
        %v797 = vadd.s32 %v784, 104
        %v798 = vadd.s32 %v784, 112
        %v799 = vadd.s32 %v784, 120
        %v800 = vadd.s32 %v784, 128
        %v801 = vadd.s32 %v784, 136
        %v802 = vadd.s32 %v784, 144
        %v803 = vadd.s32 %v784, 152
        %v804 = vadd.s32 %v784, 160
        %v805 = vadd.s32 %v784, 168
        %v806 = vadd.s32 %v784, 176
        %v807 = vadd.s32 %v784, 184
        %v808 = vadd.s32 %v784, 192
        %v809 = vadd.s32 %v784, 200
        %v810 = vadd.s32 %v784, 208
        %v811 = vadd.s32 %v784, 216
        %v812 = vadd.s32 %v784, 224
        %v813 = vadd.s32 %v784, 232
        %v814 = vadd.s32 %v784, 240
        %v815 = vadd.s32 %v784, 248
        %vm816 = vcmp.lt.s32.totalorder %v784, 0
        %v817 = vsub.s32 0, %v784
        %v818 = vsel %vm816, %v817, %v784
        %v819 = vshrl.u32 %v818, 4
        %v820 = vand.u32 %v818, 15
        %v821 = vsub.s32 0, %v820
        %v822 = vsel %vm816, %v821, %v820
        %vm823 = vcmp.lt.s32.totalorder %v785, 0
        %v824 = vsub.s32 0, %v785
        %v825 = vsel %vm823, %v824, %v785
        %v826 = vshrl.u32 %v825, 4
        %v827 = vand.u32 %v825, 15
        %v828 = vsub.s32 0, %v827
        %v829 = vsel %vm823, %v828, %v827
        %vm830 = vcmp.lt.s32.totalorder %v786, 0
        %v831 = vsub.s32 0, %v786
        %v832 = vsel %vm830, %v831, %v786
        %v833 = vshrl.u32 %v832, 4
        %v834 = vand.u32 %v832, 15
        %v835 = vsub.s32 0, %v834
        %v836 = vsel %vm830, %v835, %v834
        %vm837 = vcmp.lt.s32.totalorder %v787, 0
        %v838 = vsub.s32 0, %v787
        %v839 = vsel %vm837, %v838, %v787
        %v840 = vshrl.u32 %v839, 4
        %v841 = vand.u32 %v839, 15
        %v842 = vsub.s32 0, %v841
        %v843 = vsel %vm837, %v842, %v841
        %vm844 = vcmp.lt.s32.totalorder %v788, 0
        %v845 = vsub.s32 0, %v788
        %v846 = vsel %vm844, %v845, %v788
        %v847 = vshrl.u32 %v846, 4
        %v848 = vand.u32 %v846, 15
        %v849 = vsub.s32 0, %v848
        %v850 = vsel %vm844, %v849, %v848
        %vm851 = vcmp.lt.s32.totalorder %v789, 0
        %v852 = vsub.s32 0, %v789
        %v853 = vsel %vm851, %v852, %v789
        %v854 = vshrl.u32 %v853, 4
        %v855 = vand.u32 %v853, 15
        %v856 = vsub.s32 0, %v855
        %v857 = vsel %vm851, %v856, %v855
        %vm858 = vcmp.lt.s32.totalorder %v790, 0
        %v859 = vsub.s32 0, %v790
        %v860 = vsel %vm858, %v859, %v790
        %v861 = vshrl.u32 %v860, 4
        %v862 = vand.u32 %v860, 15
        %v863 = vsub.s32 0, %v862
        %v864 = vsel %vm858, %v863, %v862
        %vm865 = vcmp.lt.s32.totalorder %v791, 0
        %v866 = vsub.s32 0, %v791
        %v867 = vsel %vm865, %v866, %v791
        %v868 = vshrl.u32 %v867, 4
        %v869 = vand.u32 %v867, 15
        %v870 = vsub.s32 0, %v869
        %v871 = vsel %vm865, %v870, %v869
        %vm872 = vcmp.lt.s32.totalorder %v792, 0
        %v873 = vsub.s32 0, %v792
        %v874 = vsel %vm872, %v873, %v792
        %v875 = vshrl.u32 %v874, 4
        %v876 = vand.u32 %v874, 15
        %v877 = vsub.s32 0, %v876
        %v878 = vsel %vm872, %v877, %v876
        %vm879 = vcmp.lt.s32.totalorder %v793, 0
        %v880 = vsub.s32 0, %v793
        %v881 = vsel %vm879, %v880, %v793
        %v882 = vshrl.u32 %v881, 4
        %v883 = vand.u32 %v881, 15
        %v884 = vsub.s32 0, %v883
        %v885 = vsel %vm879, %v884, %v883
        %vm886 = vcmp.lt.s32.totalorder %v794, 0
        %v887 = vsub.s32 0, %v794
        %v888 = vsel %vm886, %v887, %v794
        %v889 = vshrl.u32 %v888, 4
        %v890 = vand.u32 %v888, 15
        %v891 = vsub.s32 0, %v890
        %v892 = vsel %vm886, %v891, %v890
        %vm893 = vcmp.lt.s32.totalorder %v795, 0
        %v894 = vsub.s32 0, %v795
        %v895 = vsel %vm893, %v894, %v795
        %v896 = vshrl.u32 %v895, 4
        %v897 = vand.u32 %v895, 15
        %v898 = vsub.s32 0, %v897
        %v899 = vsel %vm893, %v898, %v897
        %vm900 = vcmp.lt.s32.totalorder %v796, 0
        %v901 = vsub.s32 0, %v796
        %v902 = vsel %vm900, %v901, %v796
        %v903 = vshrl.u32 %v902, 4
        %v904 = vand.u32 %v902, 15
        %v905 = vsub.s32 0, %v904
        %v906 = vsel %vm900, %v905, %v904
        %vm907 = vcmp.lt.s32.totalorder %v797, 0
        %v908 = vsub.s32 0, %v797
        %v909 = vsel %vm907, %v908, %v797
        %v910 = vshrl.u32 %v909, 4
        %v911 = vand.u32 %v909, 15
        %v912 = vsub.s32 0, %v911
        %v913 = vsel %vm907, %v912, %v911
        %vm914 = vcmp.lt.s32.totalorder %v798, 0
        %v915 = vsub.s32 0, %v798
        %v916 = vsel %vm914, %v915, %v798
        %v917 = vshrl.u32 %v916, 4
        %v918 = vand.u32 %v916, 15
        %v919 = vsub.s32 0, %v918
        %v920 = vsel %vm914, %v919, %v918
        %vm921 = vcmp.lt.s32.totalorder %v799, 0
        %v922 = vsub.s32 0, %v799
        %v923 = vsel %vm921, %v922, %v799
        %v924 = vshrl.u32 %v923, 4
        %v925 = vand.u32 %v923, 15
        %v926 = vsub.s32 0, %v925
        %v927 = vsel %vm921, %v926, %v925
        %vm928 = vcmp.lt.s32.totalorder %v800, 0
        %v929 = vsub.s32 0, %v800
        %v930 = vsel %vm928, %v929, %v800
        %v931 = vshrl.u32 %v930, 4
        %v932 = vand.u32 %v930, 15
        %v933 = vsub.s32 0, %v932
        %v934 = vsel %vm928, %v933, %v932
        %vm935 = vcmp.lt.s32.totalorder %v801, 0
        %v936 = vsub.s32 0, %v801
        %v937 = vsel %vm935, %v936, %v801
        %v938 = vshrl.u32 %v937, 4
        %v939 = vand.u32 %v937, 15
        %v940 = vsub.s32 0, %v939
        %v941 = vsel %vm935, %v940, %v939
        %vm942 = vcmp.lt.s32.totalorder %v802, 0
        %v943 = vsub.s32 0, %v802
        %v944 = vsel %vm942, %v943, %v802
        %v945 = vshrl.u32 %v944, 4
        %v946 = vand.u32 %v944, 15
        %v947 = vsub.s32 0, %v946
        %v948 = vsel %vm942, %v947, %v946
        %vm949 = vcmp.lt.s32.totalorder %v803, 0
        %v950 = vsub.s32 0, %v803
        %v951 = vsel %vm949, %v950, %v803
        %v952 = vshrl.u32 %v951, 4
        %v953 = vand.u32 %v951, 15
        %v954 = vsub.s32 0, %v953
        %v955 = vsel %vm949, %v954, %v953
        %vm956 = vcmp.lt.s32.totalorder %v804, 0
        %v957 = vsub.s32 0, %v804
        %v958 = vsel %vm956, %v957, %v804
        %v959 = vshrl.u32 %v958, 4
        %v960 = vand.u32 %v958, 15
        %v961 = vsub.s32 0, %v960
        %v962 = vsel %vm956, %v961, %v960
        %vm963 = vcmp.lt.s32.totalorder %v805, 0
        %v964 = vsub.s32 0, %v805
        %v965 = vsel %vm963, %v964, %v805
        %v966 = vshrl.u32 %v965, 4
        %v967 = vand.u32 %v965, 15
        %v968 = vsub.s32 0, %v967
        %v969 = vsel %vm963, %v968, %v967
        %vm970 = vcmp.lt.s32.totalorder %v806, 0
        %v971 = vsub.s32 0, %v806
        %v972 = vsel %vm970, %v971, %v806
        %v973 = vshrl.u32 %v972, 4
        %v974 = vand.u32 %v972, 15
        %v975 = vsub.s32 0, %v974
        %v976 = vsel %vm970, %v975, %v974
        %vm977 = vcmp.lt.s32.totalorder %v807, 0
        %v978 = vsub.s32 0, %v807
        %v979 = vsel %vm977, %v978, %v807
        %v980 = vshrl.u32 %v979, 4
        %v981 = vand.u32 %v979, 15
        %v982 = vsub.s32 0, %v981
        %v983 = vsel %vm977, %v982, %v981
        %vm984 = vcmp.lt.s32.totalorder %v808, 0
        %v985 = vsub.s32 0, %v808
        %v986 = vsel %vm984, %v985, %v808
        %v987 = vshrl.u32 %v986, 4
        %v988 = vand.u32 %v986, 15
        %v989 = vsub.s32 0, %v988
        %v990 = vsel %vm984, %v989, %v988
        %vm991 = vcmp.lt.s32.totalorder %v809, 0
        %v992 = vsub.s32 0, %v809
        %v993 = vsel %vm991, %v992, %v809
        %v994 = vshrl.u32 %v993, 4
        %v995 = vand.u32 %v993, 15
        %v996 = vsub.s32 0, %v995
        %v997 = vsel %vm991, %v996, %v995
        %vm998 = vcmp.lt.s32.totalorder %v810, 0
        %v999 = vsub.s32 0, %v810
        %v1000 = vsel %vm998, %v999, %v810
        %v1001 = vshrl.u32 %v1000, 4
        %v1002 = vand.u32 %v1000, 15
        %v1003 = vsub.s32 0, %v1002
        %v1004 = vsel %vm998, %v1003, %v1002
        %vm1005 = vcmp.lt.s32.totalorder %v811, 0
        %v1006 = vsub.s32 0, %v811
        %v1007 = vsel %vm1005, %v1006, %v811
        %v1008 = vshrl.u32 %v1007, 4
        %v1009 = vand.u32 %v1007, 15
        %v1010 = vsub.s32 0, %v1009
        %v1011 = vsel %vm1005, %v1010, %v1009
        %vm1012 = vcmp.lt.s32.totalorder %v812, 0
        %v1013 = vsub.s32 0, %v812
        %v1014 = vsel %vm1012, %v1013, %v812
        %v1015 = vshrl.u32 %v1014, 4
        %v1016 = vand.u32 %v1014, 15
        %v1017 = vsub.s32 0, %v1016
        %v1018 = vsel %vm1012, %v1017, %v1016
        %vm1019 = vcmp.lt.s32.totalorder %v813, 0
        %v1020 = vsub.s32 0, %v813
        %v1021 = vsel %vm1019, %v1020, %v813
        %v1022 = vshrl.u32 %v1021, 4
        %v1023 = vand.u32 %v1021, 15
        %v1024 = vsub.s32 0, %v1023
        %v1025 = vsel %vm1019, %v1024, %v1023
        %vm1026 = vcmp.lt.s32.totalorder %v814, 0
        %v1027 = vsub.s32 0, %v814
        %v1028 = vsel %vm1026, %v1027, %v814
        %v1029 = vshrl.u32 %v1028, 4
        %v1030 = vand.u32 %v1028, 15
        %v1031 = vsub.s32 0, %v1030
        %v1032 = vsel %vm1026, %v1031, %v1030
        %vm1033 = vcmp.lt.s32.totalorder %v815, 0
        %v1034 = vsub.s32 0, %v815
        %v1035 = vsel %vm1033, %v1034, %v815
        %v1036 = vshrl.u32 %v1035, 4
        %v1037 = vand.u32 %v1035, 15
        %v1038 = vsub.s32 0, %v1037
        %v1039 = vsel %vm1033, %v1038, %v1037
        %vm1040 = vcmp.ne.s32.totalorder %v822, 0
        %vm1041 = vcmp.ne.s32.totalorder %v829, 0
        %vm1042 = vcmp.ne.s32.totalorder %v836, 0
        %vm1043 = vcmp.ne.s32.totalorder %v843, 0
        %vm1044 = vcmp.ne.s32.totalorder %v850, 0
        %vm1045 = vcmp.ne.s32.totalorder %v857, 0
        %vm1046 = vcmp.ne.s32.totalorder %v864, 0
        %vm1047 = vcmp.ne.s32.totalorder %v871, 0
        %vm1048 = vcmp.ne.s32.totalorder %v878, 0
        %vm1049 = vcmp.ne.s32.totalorder %v885, 0
        %vm1050 = vcmp.ne.s32.totalorder %v892, 0
        %vm1051 = vcmp.ne.s32.totalorder %v899, 0
        %vm1052 = vcmp.ne.s32.totalorder %v906, 0
        %vm1053 = vcmp.ne.s32.totalorder %v913, 0
        %vm1054 = vcmp.ne.s32.totalorder %v920, 0
        %vm1055 = vcmp.ne.s32.totalorder %v927, 0
        %vm1056 = vcmp.ne.s32.totalorder %v934, 0
        %vm1057 = vcmp.ne.s32.totalorder %v941, 0
        %vm1058 = vcmp.ne.s32.totalorder %v948, 0
        %vm1059 = vcmp.ne.s32.totalorder %v955, 0
        %vm1060 = vcmp.ne.s32.totalorder %v962, 0
        %vm1061 = vcmp.ne.s32.totalorder %v969, 0
        %vm1062 = vcmp.ne.s32.totalorder %v976, 0
        %vm1063 = vcmp.ne.s32.totalorder %v983, 0
        %vm1064 = vcmp.ne.s32.totalorder %v990, 0
        %vm1065 = vcmp.ne.s32.totalorder %v997, 0
        %vm1066 = vcmp.ne.s32.totalorder %v1004, 0
        %vm1067 = vcmp.ne.s32.totalorder %v1011, 0
        %vm1068 = vcmp.ne.s32.totalorder %v1018, 0
        %vm1069 = vcmp.ne.s32.totalorder %v1025, 0
        %vm1070 = vcmp.ne.s32.totalorder %v1032, 0
        %vm1071 = vcmp.ne.s32.totalorder %v1039, 0
        %vm1072 = vcmp.lt.s32.totalorder %v822, 0
        %vm1073 = vcmp.lt.s32.totalorder %v829, 0
        %vm1074 = vcmp.lt.s32.totalorder %v836, 0
        %vm1075 = vcmp.lt.s32.totalorder %v843, 0
        %vm1076 = vcmp.lt.s32.totalorder %v850, 0
        %vm1077 = vcmp.lt.s32.totalorder %v857, 0
        %vm1078 = vcmp.lt.s32.totalorder %v864, 0
        %vm1079 = vcmp.lt.s32.totalorder %v871, 0
        %vm1080 = vcmp.lt.s32.totalorder %v878, 0
        %vm1081 = vcmp.lt.s32.totalorder %v885, 0
        %vm1082 = vcmp.lt.s32.totalorder %v892, 0
        %vm1083 = vcmp.lt.s32.totalorder %v899, 0
        %vm1084 = vcmp.lt.s32.totalorder %v906, 0
        %vm1085 = vcmp.lt.s32.totalorder %v913, 0
        %vm1086 = vcmp.lt.s32.totalorder %v920, 0
        %vm1087 = vcmp.lt.s32.totalorder %v927, 0
        %vm1088 = vcmp.lt.s32.totalorder %v934, 0
        %vm1089 = vcmp.lt.s32.totalorder %v941, 0
        %vm1090 = vcmp.lt.s32.totalorder %v948, 0
        %vm1091 = vcmp.lt.s32.totalorder %v955, 0
        %vm1092 = vcmp.lt.s32.totalorder %v962, 0
        %vm1093 = vcmp.lt.s32.totalorder %v969, 0
        %vm1094 = vcmp.lt.s32.totalorder %v976, 0
        %vm1095 = vcmp.lt.s32.totalorder %v983, 0
        %vm1096 = vcmp.lt.s32.totalorder %v990, 0
        %vm1097 = vcmp.lt.s32.totalorder %v997, 0
        %vm1098 = vcmp.lt.s32.totalorder %v1004, 0
        %vm1099 = vcmp.lt.s32.totalorder %v1011, 0
        %vm1100 = vcmp.lt.s32.totalorder %v1018, 0
        %vm1101 = vcmp.lt.s32.totalorder %v1025, 0
        %vm1102 = vcmp.lt.s32.totalorder %v1032, 0
        %vm1103 = vcmp.lt.s32.totalorder %v1039, 0
        %vm1104 = vmand %vm1072, %vm1040
        %vm1105 = vmand %vm1073, %vm1041
        %vm1106 = vmand %vm1074, %vm1042
        %vm1107 = vmand %vm1075, %vm1043
        %vm1108 = vmand %vm1076, %vm1044
        %vm1109 = vmand %vm1077, %vm1045
        %vm1110 = vmand %vm1078, %vm1046
        %vm1111 = vmand %vm1079, %vm1047
        %vm1112 = vmand %vm1080, %vm1048
        %vm1113 = vmand %vm1081, %vm1049
        %vm1114 = vmand %vm1082, %vm1050
        %vm1115 = vmand %vm1083, %vm1051
        %vm1116 = vmand %vm1084, %vm1052
        %vm1117 = vmand %vm1085, %vm1053
        %vm1118 = vmand %vm1086, %vm1054
        %vm1119 = vmand %vm1087, %vm1055
        %vm1120 = vmand %vm1088, %vm1056
        %vm1121 = vmand %vm1089, %vm1057
        %vm1122 = vmand %vm1090, %vm1058
        %vm1123 = vmand %vm1091, %vm1059
        %vm1124 = vmand %vm1092, %vm1060
        %vm1125 = vmand %vm1093, %vm1061
        %vm1126 = vmand %vm1094, %vm1062
        %vm1127 = vmand %vm1095, %vm1063
        %vm1128 = vmand %vm1096, %vm1064
        %vm1129 = vmand %vm1097, %vm1065
        %vm1130 = vmand %vm1098, %vm1066
        %vm1131 = vmand %vm1099, %vm1067
        %vm1132 = vmand %vm1100, %vm1068
        %vm1133 = vmand %vm1101, %vm1069
        %vm1134 = vmand %vm1102, %vm1070
        %vm1135 = vmand %vm1103, %vm1071
        %v1136 = vadd.s32 %v822, 16
        %v1137 = vadd.s32 %v829, 16
        %v1138 = vadd.s32 %v836, 16
        %v1139 = vadd.s32 %v843, 16
        %v1140 = vadd.s32 %v850, 16
        %v1141 = vadd.s32 %v857, 16
        %v1142 = vadd.s32 %v864, 16
        %v1143 = vadd.s32 %v871, 16
        %v1144 = vadd.s32 %v878, 16
        %v1145 = vadd.s32 %v885, 16
        %v1146 = vadd.s32 %v892, 16
        %v1147 = vadd.s32 %v899, 16
        %v1148 = vadd.s32 %v906, 16
        %v1149 = vadd.s32 %v913, 16
        %v1150 = vadd.s32 %v920, 16
        %v1151 = vadd.s32 %v927, 16
        %v1152 = vadd.s32 %v934, 16
        %v1153 = vadd.s32 %v941, 16
        %v1154 = vadd.s32 %v948, 16
        %v1155 = vadd.s32 %v955, 16
        %v1156 = vadd.s32 %v962, 16
        %v1157 = vadd.s32 %v969, 16
        %v1158 = vadd.s32 %v976, 16
        %v1159 = vadd.s32 %v983, 16
        %v1160 = vadd.s32 %v990, 16
        %v1161 = vadd.s32 %v997, 16
        %v1162 = vadd.s32 %v1004, 16
        %v1163 = vadd.s32 %v1011, 16
        %v1164 = vadd.s32 %v1018, 16
        %v1165 = vadd.s32 %v1025, 16
        %v1166 = vadd.s32 %v1032, 16
        %v1167 = vadd.s32 %v1039, 16
        %v1168 = vsel %vm1104, %v1136, %v822
        %v1169 = vsel %vm1105, %v1137, %v829
        %v1170 = vsel %vm1106, %v1138, %v836
        %v1171 = vsel %vm1107, %v1139, %v843
        %v1172 = vsel %vm1108, %v1140, %v850
        %v1173 = vsel %vm1109, %v1141, %v857
        %v1174 = vsel %vm1110, %v1142, %v864
        %v1175 = vsel %vm1111, %v1143, %v871
        %v1176 = vsel %vm1112, %v1144, %v878
        %v1177 = vsel %vm1113, %v1145, %v885
        %v1178 = vsel %vm1114, %v1146, %v892
        %v1179 = vsel %vm1115, %v1147, %v899
        %v1180 = vsel %vm1116, %v1148, %v906
        %v1181 = vsel %vm1117, %v1149, %v913
        %v1182 = vsel %vm1118, %v1150, %v920
        %v1183 = vsel %vm1119, %v1151, %v927
        %v1184 = vsel %vm1120, %v1152, %v934
        %v1185 = vsel %vm1121, %v1153, %v941
        %v1186 = vsel %vm1122, %v1154, %v948
        %v1187 = vsel %vm1123, %v1155, %v955
        %v1188 = vsel %vm1124, %v1156, %v962
        %v1189 = vsel %vm1125, %v1157, %v969
        %v1190 = vsel %vm1126, %v1158, %v976
        %v1191 = vsel %vm1127, %v1159, %v983
        %v1192 = vsel %vm1128, %v1160, %v990
        %v1193 = vsel %vm1129, %v1161, %v997
        %v1194 = vsel %vm1130, %v1162, %v1004
        %v1195 = vsel %vm1131, %v1163, %v1011
        %v1196 = vsel %vm1132, %v1164, %v1018
        %v1197 = vsel %vm1133, %v1165, %v1025
        %v1198 = vsel %vm1134, %v1166, %v1032
        %v1199 = vsel %vm1135, %v1167, %v1039
        %vm1200 = vcmp.gt.s32.totalorder %v1168, 0
        %vm1201 = vcmp.gt.s32.totalorder %v1169, 0
        %vm1202 = vcmp.gt.s32.totalorder %v1170, 0
        %vm1203 = vcmp.gt.s32.totalorder %v1171, 0
        %vm1204 = vcmp.gt.s32.totalorder %v1172, 0
        %vm1205 = vcmp.gt.s32.totalorder %v1173, 0
        %vm1206 = vcmp.gt.s32.totalorder %v1174, 0
        %vm1207 = vcmp.gt.s32.totalorder %v1175, 0
        %vm1208 = vcmp.gt.s32.totalorder %v1176, 0
        %vm1209 = vcmp.gt.s32.totalorder %v1177, 0
        %vm1210 = vcmp.gt.s32.totalorder %v1178, 0
        %vm1211 = vcmp.gt.s32.totalorder %v1179, 0
        %vm1212 = vcmp.gt.s32.totalorder %v1180, 0
        %vm1213 = vcmp.gt.s32.totalorder %v1181, 0
        %vm1214 = vcmp.gt.s32.totalorder %v1182, 0
        %vm1215 = vcmp.gt.s32.totalorder %v1183, 0
        %vm1216 = vcmp.gt.s32.totalorder %v1184, 0
        %vm1217 = vcmp.gt.s32.totalorder %v1185, 0
        %vm1218 = vcmp.gt.s32.totalorder %v1186, 0
        %vm1219 = vcmp.gt.s32.totalorder %v1187, 0
        %vm1220 = vcmp.gt.s32.totalorder %v1188, 0
        %vm1221 = vcmp.gt.s32.totalorder %v1189, 0
        %vm1222 = vcmp.gt.s32.totalorder %v1190, 0
        %vm1223 = vcmp.gt.s32.totalorder %v1191, 0
        %vm1224 = vcmp.gt.s32.totalorder %v1192, 0
        %vm1225 = vcmp.gt.s32.totalorder %v1193, 0
        %vm1226 = vcmp.gt.s32.totalorder %v1194, 0
        %vm1227 = vcmp.gt.s32.totalorder %v1195, 0
        %vm1228 = vcmp.gt.s32.totalorder %v1196, 0
        %vm1229 = vcmp.gt.s32.totalorder %v1197, 0
        %vm1230 = vcmp.gt.s32.totalorder %v1198, 0
        %vm1231 = vcmp.gt.s32.totalorder %v1199, 0
        %v1232 = vsel %vm1200, 1, 0
        %v1233 = vsel %vm1201, 1, 0
        %v1234 = vsel %vm1202, 1, 0
        %v1235 = vsel %vm1203, 1, 0
        %v1236 = vsel %vm1204, 1, 0
        %v1237 = vsel %vm1205, 1, 0
        %v1238 = vsel %vm1206, 1, 0
        %v1239 = vsel %vm1207, 1, 0
        %v1240 = vsel %vm1208, 1, 0
        %v1241 = vsel %vm1209, 1, 0
        %v1242 = vsel %vm1210, 1, 0
        %v1243 = vsel %vm1211, 1, 0
        %v1244 = vsel %vm1212, 1, 0
        %v1245 = vsel %vm1213, 1, 0
        %v1246 = vsel %vm1214, 1, 0
        %v1247 = vsel %vm1215, 1, 0
        %v1248 = vsel %vm1216, 1, 0
        %v1249 = vsel %vm1217, 1, 0
        %v1250 = vsel %vm1218, 1, 0
        %v1251 = vsel %vm1219, 1, 0
        %v1252 = vsel %vm1220, 1, 0
        %v1253 = vsel %vm1221, 1, 0
        %v1254 = vsel %vm1222, 1, 0
        %v1255 = vsel %vm1223, 1, 0
        %v1256 = vsel %vm1224, 1, 0
        %v1257 = vsel %vm1225, 1, 0
        %v1258 = vsel %vm1226, 1, 0
        %v1259 = vsel %vm1227, 1, 0
        %v1260 = vsel %vm1228, 1, 0
        %v1261 = vsel %vm1229, 1, 0
        %v1262 = vsel %vm1230, 1, 0
        %v1263 = vsel %vm1231, 1, 0
        %v1264 = vcvt.s32.f32 %v1232
        %v1265 = vcvt.s32.f32 %v1233
        %v1266 = vcvt.s32.f32 %v1234
        %v1267 = vcvt.s32.f32 %v1235
        %v1268 = vcvt.s32.f32 %v1236
        %v1269 = vcvt.s32.f32 %v1237
        %v1270 = vcvt.s32.f32 %v1238
        %v1271 = vcvt.s32.f32 %v1239
        %v1272 = vcvt.s32.f32 %v1240
        %v1273 = vcvt.s32.f32 %v1241
        %v1274 = vcvt.s32.f32 %v1242
        %v1275 = vcvt.s32.f32 %v1243
        %v1276 = vcvt.s32.f32 %v1244
        %v1277 = vcvt.s32.f32 %v1245
        %v1278 = vcvt.s32.f32 %v1246
        %v1279 = vcvt.s32.f32 %v1247
        %v1280 = vcvt.s32.f32 %v1248
        %v1281 = vcvt.s32.f32 %v1249
        %v1282 = vcvt.s32.f32 %v1250
        %v1283 = vcvt.s32.f32 %v1251
        %v1284 = vcvt.s32.f32 %v1252
        %v1285 = vcvt.s32.f32 %v1253
        %v1286 = vcvt.s32.f32 %v1254
        %v1287 = vcvt.s32.f32 %v1255
        %v1288 = vcvt.s32.f32 %v1256
        %v1289 = vcvt.s32.f32 %v1257
        %v1290 = vcvt.s32.f32 %v1258
        %v1291 = vcvt.s32.f32 %v1259
        %v1292 = vcvt.s32.f32 %v1260
        %v1293 = vcvt.s32.f32 %v1261
        %v1294 = vcvt.s32.f32 %v1262
        %v1295 = vcvt.s32.f32 %v1263
        %vm1296 = vcmp.lt.s32.totalorder %v1168, 15
        %vm1297 = vcmp.lt.s32.totalorder %v1169, 15
        %vm1298 = vcmp.lt.s32.totalorder %v1170, 15
        %vm1299 = vcmp.lt.s32.totalorder %v1171, 15
        %vm1300 = vcmp.lt.s32.totalorder %v1172, 15
        %vm1301 = vcmp.lt.s32.totalorder %v1173, 15
        %vm1302 = vcmp.lt.s32.totalorder %v1174, 15
        %vm1303 = vcmp.lt.s32.totalorder %v1175, 15
        %vm1304 = vcmp.lt.s32.totalorder %v1176, 15
        %vm1305 = vcmp.lt.s32.totalorder %v1177, 15
        %vm1306 = vcmp.lt.s32.totalorder %v1178, 15
        %vm1307 = vcmp.lt.s32.totalorder %v1179, 15
        %vm1308 = vcmp.lt.s32.totalorder %v1180, 15
        %vm1309 = vcmp.lt.s32.totalorder %v1181, 15
        %vm1310 = vcmp.lt.s32.totalorder %v1182, 15
        %vm1311 = vcmp.lt.s32.totalorder %v1183, 15
        %vm1312 = vcmp.lt.s32.totalorder %v1184, 15
        %vm1313 = vcmp.lt.s32.totalorder %v1185, 15
        %vm1314 = vcmp.lt.s32.totalorder %v1186, 15
        %vm1315 = vcmp.lt.s32.totalorder %v1187, 15
        %vm1316 = vcmp.lt.s32.totalorder %v1188, 15
        %vm1317 = vcmp.lt.s32.totalorder %v1189, 15
        %vm1318 = vcmp.lt.s32.totalorder %v1190, 15
        %vm1319 = vcmp.lt.s32.totalorder %v1191, 15
        %vm1320 = vcmp.lt.s32.totalorder %v1192, 15
        %vm1321 = vcmp.lt.s32.totalorder %v1193, 15
        %vm1322 = vcmp.lt.s32.totalorder %v1194, 15
        %vm1323 = vcmp.lt.s32.totalorder %v1195, 15
        %vm1324 = vcmp.lt.s32.totalorder %v1196, 15
        %vm1325 = vcmp.lt.s32.totalorder %v1197, 15
        %vm1326 = vcmp.lt.s32.totalorder %v1198, 15
        %vm1327 = vcmp.lt.s32.totalorder %v1199, 15
        %v1328 = vsel %vm1296, 1, 0
        %v1329 = vsel %vm1297, 1, 0
        %v1330 = vsel %vm1298, 1, 0
        %v1331 = vsel %vm1299, 1, 0
        %v1332 = vsel %vm1300, 1, 0
        %v1333 = vsel %vm1301, 1, 0
        %v1334 = vsel %vm1302, 1, 0
        %v1335 = vsel %vm1303, 1, 0
        %v1336 = vsel %vm1304, 1, 0
        %v1337 = vsel %vm1305, 1, 0
        %v1338 = vsel %vm1306, 1, 0
        %v1339 = vsel %vm1307, 1, 0
        %v1340 = vsel %vm1308, 1, 0
        %v1341 = vsel %vm1309, 1, 0
        %v1342 = vsel %vm1310, 1, 0
        %v1343 = vsel %vm1311, 1, 0
        %v1344 = vsel %vm1312, 1, 0
        %v1345 = vsel %vm1313, 1, 0
        %v1346 = vsel %vm1314, 1, 0
        %v1347 = vsel %vm1315, 1, 0
        %v1348 = vsel %vm1316, 1, 0
        %v1349 = vsel %vm1317, 1, 0
        %v1350 = vsel %vm1318, 1, 0
        %v1351 = vsel %vm1319, 1, 0
        %v1352 = vsel %vm1320, 1, 0
        %v1353 = vsel %vm1321, 1, 0
        %v1354 = vsel %vm1322, 1, 0
        %v1355 = vsel %vm1323, 1, 0
        %v1356 = vsel %vm1324, 1, 0
        %v1357 = vsel %vm1325, 1, 0
        %v1358 = vsel %vm1326, 1, 0
        %v1359 = vsel %vm1327, 1, 0
        %v1360 = vcvt.s32.f32 %v1328
        %v1361 = vcvt.s32.f32 %v1329
        %v1362 = vcvt.s32.f32 %v1330
        %v1363 = vcvt.s32.f32 %v1331
        %v1364 = vcvt.s32.f32 %v1332
        %v1365 = vcvt.s32.f32 %v1333
        %v1366 = vcvt.s32.f32 %v1334
        %v1367 = vcvt.s32.f32 %v1335
        %v1368 = vcvt.s32.f32 %v1336
        %v1369 = vcvt.s32.f32 %v1337
        %v1370 = vcvt.s32.f32 %v1338
        %v1371 = vcvt.s32.f32 %v1339
        %v1372 = vcvt.s32.f32 %v1340
        %v1373 = vcvt.s32.f32 %v1341
        %v1374 = vcvt.s32.f32 %v1342
        %v1375 = vcvt.s32.f32 %v1343
        %v1376 = vcvt.s32.f32 %v1344
        %v1377 = vcvt.s32.f32 %v1345
        %v1378 = vcvt.s32.f32 %v1346
        %v1379 = vcvt.s32.f32 %v1347
        %v1380 = vcvt.s32.f32 %v1348
        %v1381 = vcvt.s32.f32 %v1349
        %v1382 = vcvt.s32.f32 %v1350
        %v1383 = vcvt.s32.f32 %v1351
        %v1384 = vcvt.s32.f32 %v1352
        %v1385 = vcvt.s32.f32 %v1353
        %v1386 = vcvt.s32.f32 %v1354
        %v1387 = vcvt.s32.f32 %v1355
        %v1388 = vcvt.s32.f32 %v1356
        %v1389 = vcvt.s32.f32 %v1357
        %v1390 = vcvt.s32.f32 %v1358
        %v1391 = vcvt.s32.f32 %v1359
        %v1392 = vld [vmem:[#allocation5] sm:$0xff]
        %v1393 = vld [vmem:[#allocation5 + $0x8] sm:$0xff]
        %s1394 = scalar_lea.vmem [#allocation5], 48
        %v1395 = vld [vmem:[%s1394] sm:$0xff]
        %v1396 = vld [vmem:[%s1394 + $0x8] sm:$0xff]
        %vm1430 = vcmask 1040384
        %v1431 = vrot.slane 0.0, 7
        %v1432 = vrot.slane %v751, 7
        %v1433 = vsel %vm1430, %v1431, %v1432
        %v1434 = vrot.slane %v752, 7
        %v1435 = vsel %vm1430, %v1432, %v1434
        %v1436 = vrot.slane %v753, 7
        %v1437 = vsel %vm1430, %v1434, %v1436
        %v1438 = vrot.slane %v754, 7
        %v1439 = vsel %vm1430, %v1436, %v1438
        %v1440 = vrot.slane %v755, 7
        %v1441 = vsel %vm1430, %v1438, %v1440
        %v1442 = vrot.slane %v756, 7
        %v1443 = vsel %vm1430, %v1440, %v1442
        %v1444 = vrot.slane %v757, 7
        %v1445 = vsel %vm1430, %v1442, %v1444
        %v1446 = vrot.slane %v758, 7
        %v1447 = vsel %vm1430, %v1444, %v1446
        %v1448 = vrot.slane %v759, 7
        %v1449 = vsel %vm1430, %v1446, %v1448
        %v1450 = vrot.slane %v760, 7
        %v1451 = vsel %vm1430, %v1448, %v1450
        %v1452 = vrot.slane %v761, 7
        %v1453 = vsel %vm1430, %v1450, %v1452
        %v1454 = vrot.slane %v762, 7
        %v1455 = vsel %vm1430, %v1452, %v1454
        %v1456 = vrot.slane %v763, 7
        %v1457 = vsel %vm1430, %v1454, %v1456
        %v1458 = vrot.slane %v764, 7
        %v1459 = vsel %vm1430, %v1456, %v1458
        %v1460 = vrot.slane %v765, 7
        %v1461 = vsel %vm1430, %v1458, %v1460
        %v1462 = vrot.slane %v766, 7
        %v1463 = vsel %vm1430, %v1460, %v1462
        %v1464 = vrot.slane %v767, 7
        %v1465 = vsel %vm1430, %v1462, %v1464
        %v1466 = vrot.slane %v768, 7
        %v1467 = vsel %vm1430, %v1464, %v1466
        %v1468 = vrot.slane %v769, 7
        %v1469 = vsel %vm1430, %v1466, %v1468
        %v1470 = vrot.slane %v770, 7
        %v1471 = vsel %vm1430, %v1468, %v1470
        %v1472 = vrot.slane %v771, 7
        %v1473 = vsel %vm1430, %v1470, %v1472
        %v1474 = vrot.slane %v772, 7
        %v1475 = vsel %vm1430, %v1472, %v1474
        %v1476 = vrot.slane %v773, 7
        %v1477 = vsel %vm1430, %v1474, %v1476
        %v1478 = vrot.slane %v774, 7
        %v1479 = vsel %vm1430, %v1476, %v1478
        %v1480 = vrot.slane %v775, 7
        %v1481 = vsel %vm1430, %v1478, %v1480
        %v1482 = vrot.slane %v776, 7
        %v1483 = vsel %vm1430, %v1480, %v1482
        %v1484 = vrot.slane %v777, 7
        %v1485 = vsel %vm1430, %v1482, %v1484
        %v1486 = vrot.slane %v778, 7
        %v1487 = vsel %vm1430, %v1484, %v1486
        %v1488 = vrot.slane %v779, 7
        %v1489 = vsel %vm1430, %v1486, %v1488
        %v1490 = vrot.slane %v780, 7
        %v1491 = vsel %vm1430, %v1488, %v1490
        %v1492 = vrot.slane %v781, 7
        %v1493 = vsel %vm1430, %v1490, %v1492
        %v1494 = vrot.slane %v782, 7
        %v1495 = vsel %vm1430, %v1492, %v1494
        %vm1496 = vcmask 130048
        %v1497 = vsel %vm1496, %v1433, 0
        %v1499 = vsel %vm1496, %v1435, 0
        %v1501 = vsel %vm1496, %v1437, 0
        %v1503 = vsel %vm1496, %v1439, 0
        %v1505 = vsel %vm1496, %v1441, 0
        %v1507 = vsel %vm1496, %v1443, 0
        %v1509 = vsel %vm1496, %v1445, 0
        %v1511 = vsel %vm1496, %v1447, 0
        %v1513 = vsel %vm1496, %v1449, 0
        %v1515 = vsel %vm1496, %v1451, 0
        %v1517 = vsel %vm1496, %v1453, 0
        %v1519 = vsel %vm1496, %v1455, 0
        %v1521 = vsel %vm1496, %v1457, 0
        %v1523 = vsel %vm1496, %v1459, 0
        %v1525 = vsel %vm1496, %v1461, 0
        %v1527 = vsel %vm1496, %v1463, 0
        %v1529 = vsel %vm1496, %v1465, 0
        %v1531 = vsel %vm1496, %v1467, 0
        %v1533 = vsel %vm1496, %v1469, 0
        %v1535 = vsel %vm1496, %v1471, 0
        %v1537 = vsel %vm1496, %v1473, 0
        %v1539 = vsel %vm1496, %v1475, 0
        %v1541 = vsel %vm1496, %v1477, 0
        %v1543 = vsel %vm1496, %v1479, 0
        %v1545 = vsel %vm1496, %v1481, 0
        %v1547 = vsel %vm1496, %v1483, 0
        %v1549 = vsel %vm1496, %v1485, 0
        %v1551 = vsel %vm1496, %v1487, 0
        %v1553 = vsel %vm1496, %v1489, 0
        %v1555 = vsel %vm1496, %v1491, 0
        %v1557 = vsel %vm1496, %v1493, 0
        %v1559 = vsel %vm1496, %v1495, 0
        %1561 = vmatprep.subr.mxu0 0.0
        %1562 = vmatpush1.msra.mxu0 %v1395
        %1563 = vmatprep.subr.mxu0 0.0
        %1564 = vmatpush1.msra.mxu0 %v1396
        %1565 = vmatprep.subr.mxu0 0.0
        %1566 = vmatpush1.msra.mxu0 0.0
        %1567 = vmatprep.subr.mxu0 0.0
        %1568 = vmatpush1.msra.mxu0 0.0
        %1569 = vmatprep.subr.mxu0 0.0
        %1570 = vmatpush1.msra.mxu0 0.0
        %1571 = vmatprep.subr.mxu0 0.0
        %1572 = vmatpush1.msra.mxu0 0.0
        %1573 = vmatprep.subr.mxu0 0.0
        %1574 = vmatpush1.msra.mxu0 0.0
        %1575 = vmatprep.subr.mxu0 0.0
        %1576 = vmatpush1.msra.mxu0 0.0
        %1577 = vmatprep.subr.mxu0 0.0
        %1578 = vmatpush1.msra.mxu0 0.0
        %1579 = vmatprep.subr.mxu0 0.0
        %1580 = vmatpush1.msra.mxu0 0.0
        %1581 = vmatprep.subr.mxu0 0.0
        %1582 = vmatpush1.msra.mxu0 0.0
        %1583 = vmatprep.subr.mxu0 0.0
        %1584 = vmatpush1.msra.mxu0 0.0
        %1585 = vmatprep.subr.mxu0 0.0
        %1586 = vmatpush1.msra.mxu0 0.0
        %1587 = vmatprep.subr.mxu0 0.0
        %1588 = vmatpush1.msra.mxu0 0.0
        %1589 = vmatprep.subr.mxu0 0.0
        %1590 = vmatpush1.msra.mxu0 0.0
        %1591 = vmatprep.subr.mxu0 0.0
        %1592 = vmatpush1.msra.mxu0 0.0
        %1593 = vmatprep.subr.mxu0 0.0
        %1594 = vmatpush1.msra.mxu0 0.0
        %1595 = vmatprep.subr.mxu0 0.0
        %1596 = vmatpush1.msra.mxu0 0.0
        %1597 = vmatprep.subr.mxu0 0.0
        %1598 = vmatpush1.msra.mxu0 0.0
        %1599 = vmatprep.subr.mxu0 0.0
        %1600 = vmatpush1.msra.mxu0 0.0
        %1601 = vmatprep.subr.mxu0 0.0
        %1602 = vmatpush1.msra.mxu0 0.0
        %1603 = vmatprep.subr.mxu0 0.0
        %1604 = vmatpush1.msra.mxu0 0.0
        %1605 = vmatprep.subr.mxu0 0.0
        %1606 = vmatpush1.msra.mxu0 0.0
        %1607 = vmatprep.subr.mxu0 0.0
        %1608 = vmatpush1.msra.mxu0 0.0
        %1609 = vmatprep.subr.mxu0 0.0
        %1610 = vmatpush1.msra.mxu0 0.0
        %1611 = vmatprep.subr.mxu0 0.0
        %1612 = vmatpush1.msra.mxu0 0.0
        %1613 = vmatprep.subr.mxu0 0.0
        %1614 = vmatpush1.msra.mxu0 0.0
        %1615 = vmatprep.subr.mxu0 0.0
        %1616 = vmatpush1.msra.mxu0 0.0
        %1617 = vmatprep.subr.mxu0 0.0
        %1618 = vmatpush1.msra.mxu0 0.0
        %1619 = vmatprep.subr.mxu0 0.0
        %1620 = vmatpush1.msra.mxu0 0.0
        %1621 = vmatprep.subr.mxu0 0.0
        %1622 = vmatpush1.msra.mxu0 0.0
        %1623 = vmatprep.subr.mxu0 0.0
        %1624 = vmatpush1.msra.mxu0 0.0
        %1625 = vmatprep.mubr.f32.mxu0 0.0
        %1626 = vmatmul.mubr.f32.gmra.mrb[0].mxu0 %v1497
        %v1627 = vpop.f32.mrb[0].mxu0
        %v1628 = vadd.f32 0.0, %v1627
        %v1629 = vpop.f32.mrb[0].mxu0
        %1630 = vmatprep.mubr.f32.mxu0 0.0
        %1631 = vmatmul.mubr.f32.gmra.mrb[0].mxu0 %v1499
        %v1632 = vpop.f32.mrb[0].mxu0
        %v1633 = vadd.f32 0.0, %v1632
        %v1634 = vpop.f32.mrb[0].mxu0
        %1635 = vmatprep.mubr.f32.mxu0 0.0
        %1636 = vmatmul.mubr.f32.gmra.mrb[0].mxu0 %v1501
        %v1637 = vpop.f32.mrb[0].mxu0
        %v1638 = vadd.f32 0.0, %v1637
        %v1639 = vpop.f32.mrb[0].mxu0
        %1640 = vmatprep.mubr.f32.mxu0 0.0
        %1641 = vmatmul.mubr.f32.gmra.mrb[0].mxu0 %v1503
        %v1642 = vpop.f32.mrb[0].mxu0
        %v1643 = vadd.f32 0.0, %v1642
        %v1644 = vpop.f32.mrb[0].mxu0
        %1645 = vmatprep.mubr.f32.mxu0 0.0
        %1646 = vmatmul.mubr.f32.gmra.mrb[0].mxu0 %v1505
        %v1647 = vpop.f32.mrb[0].mxu0
        %v1648 = vadd.f32 0.0, %v1647
        %v1649 = vpop.f32.mrb[0].mxu0
        %1650 = vmatprep.mubr.f32.mxu0 0.0
        %1651 = vmatmul.mubr.f32.gmra.mrb[0].mxu0 %v1507
        %v1652 = vpop.f32.mrb[0].mxu0
        %v1653 = vadd.f32 0.0, %v1652
        %v1654 = vpop.f32.mrb[0].mxu0
        %1655 = vmatprep.mubr.f32.mxu0 0.0
        %1656 = vmatmul.mubr.f32.gmra.mrb[0].mxu0 %v1509
        %v1657 = vpop.f32.mrb[0].mxu0
        %v1658 = vadd.f32 0.0, %v1657
        %v1659 = vpop.f32.mrb[0].mxu0
        %1660 = vmatprep.mubr.f32.mxu0 0.0
        %1661 = vmatmul.mubr.f32.gmra.mrb[0].mxu0 %v1511
        %v1662 = vpop.f32.mrb[0].mxu0
        %v1663 = vadd.f32 0.0, %v1662
        %v1664 = vpop.f32.mrb[0].mxu0
        %1665 = vmatprep.mubr.f32.mxu0 0.0
        %1666 = vmatmul.mubr.f32.gmra.mrb[0].mxu0 %v1513
        %v1667 = vpop.f32.mrb[0].mxu0
        %v1668 = vadd.f32 0.0, %v1667
        %v1669 = vpop.f32.mrb[0].mxu0
        %1670 = vmatprep.mubr.f32.mxu0 0.0
        %1671 = vmatmul.mubr.f32.gmra.mrb[0].mxu0 %v1515
        %v1672 = vpop.f32.mrb[0].mxu0
        %v1673 = vadd.f32 0.0, %v1672
        %v1674 = vpop.f32.mrb[0].mxu0
        %1675 = vmatprep.mubr.f32.mxu0 0.0
        %1676 = vmatmul.mubr.f32.gmra.mrb[0].mxu0 %v1517
        %v1677 = vpop.f32.mrb[0].mxu0
        %v1678 = vadd.f32 0.0, %v1677
        %v1679 = vpop.f32.mrb[0].mxu0
        %1680 = vmatprep.mubr.f32.mxu0 0.0
        %1681 = vmatmul.mubr.f32.gmra.mrb[0].mxu0 %v1519
        %v1682 = vpop.f32.mrb[0].mxu0
        %v1683 = vadd.f32 0.0, %v1682
        %v1684 = vpop.f32.mrb[0].mxu0
        %1685 = vmatprep.mubr.f32.mxu0 0.0
        %1686 = vmatmul.mubr.f32.gmra.mrb[0].mxu0 %v1521
        %v1687 = vpop.f32.mrb[0].mxu0
        %v1688 = vadd.f32 0.0, %v1687
        %v1689 = vpop.f32.mrb[0].mxu0
        %1690 = vmatprep.mubr.f32.mxu0 0.0
        %1691 = vmatmul.mubr.f32.gmra.mrb[0].mxu0 %v1523
        %v1692 = vpop.f32.mrb[0].mxu0
        %v1693 = vadd.f32 0.0, %v1692
        %v1694 = vpop.f32.mrb[0].mxu0
        %1695 = vmatprep.mubr.f32.mxu0 0.0
        %1696 = vmatmul.mubr.f32.gmra.mrb[0].mxu0 %v1525
        %v1697 = vpop.f32.mrb[0].mxu0
        %v1698 = vadd.f32 0.0, %v1697
        %v1699 = vpop.f32.mrb[0].mxu0
        %1700 = vmatprep.mubr.f32.mxu0 0.0
        %1701 = vmatmul.mubr.f32.gmra.mrb[0].mxu0 %v1527
        %v1702 = vpop.f32.mrb[0].mxu0
        %v1703 = vadd.f32 0.0, %v1702
        %v1704 = vpop.f32.mrb[0].mxu0
        %1705 = vmatprep.mubr.f32.mxu0 0.0
        %1706 = vmatmul.mubr.f32.gmra.mrb[0].mxu0 %v1529
        %v1707 = vpop.f32.mrb[0].mxu0
        %v1708 = vadd.f32 0.0, %v1707
        %v1709 = vpop.f32.mrb[0].mxu0
        %1710 = vmatprep.mubr.f32.mxu0 0.0
        %1711 = vmatmul.mubr.f32.gmra.mrb[0].mxu0 %v1531
        %v1712 = vpop.f32.mrb[0].mxu0
        %v1713 = vadd.f32 0.0, %v1712
        %v1714 = vpop.f32.mrb[0].mxu0
        %1715 = vmatprep.mubr.f32.mxu0 0.0
        %1716 = vmatmul.mubr.f32.gmra.mrb[0].mxu0 %v1533
        %v1717 = vpop.f32.mrb[0].mxu0
        %v1718 = vadd.f32 0.0, %v1717
        %v1719 = vpop.f32.mrb[0].mxu0
        %1720 = vmatprep.mubr.f32.mxu0 0.0
        %1721 = vmatmul.mubr.f32.gmra.mrb[0].mxu0 %v1535
        %v1722 = vpop.f32.mrb[0].mxu0
        %v1723 = vadd.f32 0.0, %v1722
        %v1724 = vpop.f32.mrb[0].mxu0
        %1725 = vmatprep.mubr.f32.mxu0 0.0
        %1726 = vmatmul.mubr.f32.gmra.mrb[0].mxu0 %v1537
        %v1727 = vpop.f32.mrb[0].mxu0
        %v1728 = vadd.f32 0.0, %v1727
        %v1729 = vpop.f32.mrb[0].mxu0
        %1730 = vmatprep.mubr.f32.mxu0 0.0
        %1731 = vmatmul.mubr.f32.gmra.mrb[0].mxu0 %v1539
        %v1732 = vpop.f32.mrb[0].mxu0
        %v1733 = vadd.f32 0.0, %v1732
        %v1734 = vpop.f32.mrb[0].mxu0
        %1735 = vmatprep.mubr.f32.mxu0 0.0
        %1736 = vmatmul.mubr.f32.gmra.mrb[0].mxu0 %v1541
        %v1737 = vpop.f32.mrb[0].mxu0
        %v1738 = vadd.f32 0.0, %v1737
        %v1739 = vpop.f32.mrb[0].mxu0
        %1740 = vmatprep.mubr.f32.mxu0 0.0
        %1741 = vmatmul.mubr.f32.gmra.mrb[0].mxu0 %v1543
        %v1742 = vpop.f32.mrb[0].mxu0
        %v1743 = vadd.f32 0.0, %v1742
        %v1744 = vpop.f32.mrb[0].mxu0
        %1745 = vmatprep.mubr.f32.mxu0 0.0
        %1746 = vmatmul.mubr.f32.gmra.mrb[0].mxu0 %v1545
        %v1747 = vpop.f32.mrb[0].mxu0
        %v1748 = vadd.f32 0.0, %v1747
        %v1749 = vpop.f32.mrb[0].mxu0
        %1750 = vmatprep.mubr.f32.mxu0 0.0
        %1751 = vmatmul.mubr.f32.gmra.mrb[0].mxu0 %v1547
        %v1752 = vpop.f32.mrb[0].mxu0
        %v1753 = vadd.f32 0.0, %v1752
        %v1754 = vpop.f32.mrb[0].mxu0
        %1755 = vmatprep.mubr.f32.mxu0 0.0
        %1756 = vmatmul.mubr.f32.gmra.mrb[0].mxu0 %v1549
        %v1757 = vpop.f32.mrb[0].mxu0
        %v1758 = vadd.f32 0.0, %v1757
        %v1759 = vpop.f32.mrb[0].mxu0
        %1760 = vmatprep.mubr.f32.mxu0 0.0
        %1761 = vmatmul.mubr.f32.gmra.mrb[0].mxu0 %v1551
        %v1762 = vpop.f32.mrb[0].mxu0
        %v1763 = vadd.f32 0.0, %v1762
        %v1764 = vpop.f32.mrb[0].mxu0
        %1765 = vmatprep.mubr.f32.mxu0 0.0
        %1766 = vmatmul.mubr.f32.gmra.mrb[0].mxu0 %v1553
        %v1767 = vpop.f32.mrb[0].mxu0
        %v1768 = vadd.f32 0.0, %v1767
        %v1769 = vpop.f32.mrb[0].mxu0
        %1770 = vmatprep.mubr.f32.mxu0 0.0
        %1771 = vmatmul.mubr.f32.gmra.mrb[0].mxu0 %v1555
        %v1772 = vpop.f32.mrb[0].mxu0
        %v1773 = vadd.f32 0.0, %v1772
        %v1774 = vpop.f32.mrb[0].mxu0
        %1775 = vmatprep.mubr.f32.mxu0 0.0
        %1776 = vmatmul.mubr.f32.gmra.mrb[0].mxu0 %v1557
        %v1777 = vpop.f32.mrb[0].mxu0
        %v1778 = vadd.f32 0.0, %v1777
        %v1779 = vpop.f32.mrb[0].mxu0
        %1780 = vmatprep.mubr.f32.mxu0 0.0
        %1781 = vmatmul.mubr.f32.gmra.mrb[0].mxu0 %v1559
        %v1782 = vpop.f32.mrb[0].mxu0
        %v1783 = vadd.f32 0.0, %v1782
        %v1784 = vpop.f32.mrb[0].mxu0
        %1785 = vdwg.mxu0
        %v1786 = vsel %vm1430, %v1431, %v1431
        %v1787 = vsel %vm1496, %v1786, 0
        %1789 = vmatprep.subr.mxu0 0.0
        %1790 = vmatpush1.msra.mxu0 %v1392
        %1791 = vmatprep.subr.mxu0 0.0
        %1792 = vmatpush1.msra.mxu0 %v1393
        %1793 = vmatprep.subr.mxu0 0.0
        %1794 = vmatpush1.msra.mxu0 0.0
        %1795 = vmatprep.subr.mxu0 0.0
        %1796 = vmatpush1.msra.mxu0 0.0
        %1797 = vmatprep.subr.mxu0 0.0
        %1798 = vmatpush1.msra.mxu0 0.0
        %1799 = vmatprep.subr.mxu0 0.0
        %1800 = vmatpush1.msra.mxu0 0.0
        %1801 = vmatprep.subr.mxu0 0.0
        %1802 = vmatpush1.msra.mxu0 0.0
        %1803 = vmatprep.subr.mxu0 0.0
        %1804 = vmatpush1.msra.mxu0 0.0
        %1805 = vmatprep.subr.mxu0 0.0
        %1806 = vmatpush1.msra.mxu0 0.0
        %1807 = vmatprep.subr.mxu0 0.0
        %1808 = vmatpush1.msra.mxu0 0.0
        %1809 = vmatprep.subr.mxu0 0.0
        %1810 = vmatpush1.msra.mxu0 0.0
        %1811 = vmatprep.subr.mxu0 0.0
        %1812 = vmatpush1.msra.mxu0 0.0
        %1813 = vmatprep.subr.mxu0 0.0
        %1814 = vmatpush1.msra.mxu0 0.0
        %1815 = vmatprep.subr.mxu0 0.0
        %1816 = vmatpush1.msra.mxu0 0.0
        %1817 = vmatprep.subr.mxu0 0.0
        %1818 = vmatpush1.msra.mxu0 0.0
        %1819 = vmatprep.subr.mxu0 0.0
        %1820 = vmatpush1.msra.mxu0 0.0
        %1821 = vmatprep.subr.mxu0 0.0
        %1822 = vmatpush1.msra.mxu0 0.0
        %1823 = vmatprep.subr.mxu0 0.0
        %1824 = vmatpush1.msra.mxu0 0.0
        %1825 = vmatprep.subr.mxu0 0.0
        %1826 = vmatpush1.msra.mxu0 0.0
        %1827 = vmatprep.subr.mxu0 0.0
        %1828 = vmatpush1.msra.mxu0 0.0
        %1829 = vmatprep.subr.mxu0 0.0
        %1830 = vmatpush1.msra.mxu0 0.0
        %1831 = vmatprep.subr.mxu0 0.0
        %1832 = vmatpush1.msra.mxu0 0.0
        %1833 = vmatprep.subr.mxu0 0.0
        %1834 = vmatpush1.msra.mxu0 0.0
        %1835 = vmatprep.subr.mxu0 0.0
        %1836 = vmatpush1.msra.mxu0 0.0
        %1837 = vmatprep.subr.mxu0 0.0
        %1838 = vmatpush1.msra.mxu0 0.0
        %1839 = vmatprep.subr.mxu0 0.0
        %1840 = vmatpush1.msra.mxu0 0.0
        %1841 = vmatprep.subr.mxu0 0.0
        %1842 = vmatpush1.msra.mxu0 0.0
        %1843 = vmatprep.subr.mxu0 0.0
        %1844 = vmatpush1.msra.mxu0 0.0
        %1845 = vmatprep.subr.mxu0 0.0
        %1846 = vmatpush1.msra.mxu0 0.0
        %1847 = vmatprep.subr.mxu0 0.0
        %1848 = vmatpush1.msra.mxu0 0.0
        %1849 = vmatprep.subr.mxu0 0.0
        %1850 = vmatpush1.msra.mxu0 0.0
        %1851 = vmatprep.subr.mxu0 0.0
        %1852 = vmatpush1.msra.mxu0 0.0
        %1853 = vmatprep.mubr.f32.mxu0 0.0
        %1854 = vmatmul.mubr.f32.gmra.mrb[0].mxu0 %v1787
        %v1855 = vpop.f32.mrb[0].mxu0
        %v1856 = vadd.f32 %v1628, %v1855
        %v1857 = vpop.f32.mrb[0].mxu0
        %1858 = vmatprep.mubr.f32.mxu0 0.0
        %1859 = vmatmul.mubr.f32.gmra.mrb[0].mxu0 %v1787
        %v1860 = vpop.f32.mrb[0].mxu0
        %v1861 = vadd.f32 %v1633, %v1860
        %v1862 = vpop.f32.mrb[0].mxu0
        %1863 = vmatprep.mubr.f32.mxu0 0.0
        %1864 = vmatmul.mubr.f32.gmra.mrb[0].mxu0 %v1497
        %v1865 = vpop.f32.mrb[0].mxu0
        %v1866 = vadd.f32 %v1638, %v1865
        %v1867 = vpop.f32.mrb[0].mxu0
        %1868 = vmatprep.mubr.f32.mxu0 0.0
        %1869 = vmatmul.mubr.f32.gmra.mrb[0].mxu0 %v1499
        %v1870 = vpop.f32.mrb[0].mxu0
        %v1871 = vadd.f32 %v1643, %v1870
        %v1872 = vpop.f32.mrb[0].mxu0
        %1873 = vmatprep.mubr.f32.mxu0 0.0
        %1874 = vmatmul.mubr.f32.gmra.mrb[0].mxu0 %v1501
        %v1875 = vpop.f32.mrb[0].mxu0
        %v1876 = vadd.f32 %v1648, %v1875
        %v1877 = vpop.f32.mrb[0].mxu0
        %1878 = vmatprep.mubr.f32.mxu0 0.0
        %1879 = vmatmul.mubr.f32.gmra.mrb[0].mxu0 %v1503
        %v1880 = vpop.f32.mrb[0].mxu0
        %v1881 = vadd.f32 %v1653, %v1880
        %v1882 = vpop.f32.mrb[0].mxu0
        %1883 = vmatprep.mubr.f32.mxu0 0.0
        %1884 = vmatmul.mubr.f32.gmra.mrb[0].mxu0 %v1505
        %v1885 = vpop.f32.mrb[0].mxu0
        %v1886 = vadd.f32 %v1658, %v1885
        %v1887 = vpop.f32.mrb[0].mxu0
        %1888 = vmatprep.mubr.f32.mxu0 0.0
        %1889 = vmatmul.mubr.f32.gmra.mrb[0].mxu0 %v1507
        %v1890 = vpop.f32.mrb[0].mxu0
        %v1891 = vadd.f32 %v1663, %v1890
        %v1892 = vpop.f32.mrb[0].mxu0
        %1893 = vmatprep.mubr.f32.mxu0 0.0
        %1894 = vmatmul.mubr.f32.gmra.mrb[0].mxu0 %v1509
        %v1895 = vpop.f32.mrb[0].mxu0
        %v1896 = vadd.f32 %v1668, %v1895
        %v1897 = vpop.f32.mrb[0].mxu0
        %1898 = vmatprep.mubr.f32.mxu0 0.0
        %1899 = vmatmul.mubr.f32.gmra.mrb[0].mxu0 %v1511
        %v1900 = vpop.f32.mrb[0].mxu0
        %v1901 = vadd.f32 %v1673, %v1900
        %v1902 = vpop.f32.mrb[0].mxu0
        %1903 = vmatprep.mubr.f32.mxu0 0.0
        %1904 = vmatmul.mubr.f32.gmra.mrb[0].mxu0 %v1513
        %v1905 = vpop.f32.mrb[0].mxu0
        %v1906 = vadd.f32 %v1678, %v1905
        %v1907 = vpop.f32.mrb[0].mxu0
        %1908 = vmatprep.mubr.f32.mxu0 0.0
        %1909 = vmatmul.mubr.f32.gmra.mrb[0].mxu0 %v1515
        %v1910 = vpop.f32.mrb[0].mxu0
        %v1911 = vadd.f32 %v1683, %v1910
        %v1912 = vpop.f32.mrb[0].mxu0
        %1913 = vmatprep.mubr.f32.mxu0 0.0
        %1914 = vmatmul.mubr.f32.gmra.mrb[0].mxu0 %v1517
        %v1915 = vpop.f32.mrb[0].mxu0
        %v1916 = vadd.f32 %v1688, %v1915
        %v1917 = vpop.f32.mrb[0].mxu0
        %1918 = vmatprep.mubr.f32.mxu0 0.0
        %1919 = vmatmul.mubr.f32.gmra.mrb[0].mxu0 %v1519
        %v1920 = vpop.f32.mrb[0].mxu0
        %v1921 = vadd.f32 %v1693, %v1920
        %v1922 = vpop.f32.mrb[0].mxu0
        %1923 = vmatprep.mubr.f32.mxu0 0.0
        %1924 = vmatmul.mubr.f32.gmra.mrb[0].mxu0 %v1521
        %v1925 = vpop.f32.mrb[0].mxu0
        %v1926 = vadd.f32 %v1698, %v1925
        %v1927 = vpop.f32.mrb[0].mxu0
        %1928 = vmatprep.mubr.f32.mxu0 0.0
        %1929 = vmatmul.mubr.f32.gmra.mrb[0].mxu0 %v1523
        %v1930 = vpop.f32.mrb[0].mxu0
        %v1931 = vadd.f32 %v1703, %v1930
        %v1932 = vpop.f32.mrb[0].mxu0
        %1933 = vmatprep.mubr.f32.mxu0 0.0
        %1934 = vmatmul.mubr.f32.gmra.mrb[0].mxu0 %v1525
        %v1935 = vpop.f32.mrb[0].mxu0
        %v1936 = vadd.f32 %v1708, %v1935
        %v1937 = vpop.f32.mrb[0].mxu0
        %1938 = vmatprep.mubr.f32.mxu0 0.0
        %1939 = vmatmul.mubr.f32.gmra.mrb[0].mxu0 %v1527
        %v1940 = vpop.f32.mrb[0].mxu0
        %v1941 = vadd.f32 %v1713, %v1940
        %v1942 = vpop.f32.mrb[0].mxu0
        %1943 = vmatprep.mubr.f32.mxu0 0.0
        %1944 = vmatmul.mubr.f32.gmra.mrb[0].mxu0 %v1529
        %v1945 = vpop.f32.mrb[0].mxu0
        %v1946 = vadd.f32 %v1718, %v1945
        %v1947 = vpop.f32.mrb[0].mxu0
        %1948 = vmatprep.mubr.f32.mxu0 0.0
        %1949 = vmatmul.mubr.f32.gmra.mrb[0].mxu0 %v1531
        %v1950 = vpop.f32.mrb[0].mxu0
        %v1951 = vadd.f32 %v1723, %v1950
        %v1952 = vpop.f32.mrb[0].mxu0
        %1953 = vmatprep.mubr.f32.mxu0 0.0
        %1954 = vmatmul.mubr.f32.gmra.mrb[0].mxu0 %v1533
        %v1955 = vpop.f32.mrb[0].mxu0
        %v1956 = vadd.f32 %v1728, %v1955
        %v1957 = vpop.f32.mrb[0].mxu0
        %1958 = vmatprep.mubr.f32.mxu0 0.0
        %1959 = vmatmul.mubr.f32.gmra.mrb[0].mxu0 %v1535
        %v1960 = vpop.f32.mrb[0].mxu0
        %v1961 = vadd.f32 %v1733, %v1960
        %v1962 = vpop.f32.mrb[0].mxu0
        %1963 = vmatprep.mubr.f32.mxu0 0.0
        %1964 = vmatmul.mubr.f32.gmra.mrb[0].mxu0 %v1537
        %v1965 = vpop.f32.mrb[0].mxu0
        %v1966 = vadd.f32 %v1738, %v1965
        %v1967 = vpop.f32.mrb[0].mxu0
        %1968 = vmatprep.mubr.f32.mxu0 0.0
        %1969 = vmatmul.mubr.f32.gmra.mrb[0].mxu0 %v1539
        %v1970 = vpop.f32.mrb[0].mxu0
        %v1971 = vadd.f32 %v1743, %v1970
        %v1972 = vpop.f32.mrb[0].mxu0
        %1973 = vmatprep.mubr.f32.mxu0 0.0
        %1974 = vmatmul.mubr.f32.gmra.mrb[0].mxu0 %v1541
        %v1975 = vpop.f32.mrb[0].mxu0
        %v1976 = vadd.f32 %v1748, %v1975
        %v1977 = vpop.f32.mrb[0].mxu0
        %1978 = vmatprep.mubr.f32.mxu0 0.0
        %1979 = vmatmul.mubr.f32.gmra.mrb[0].mxu0 %v1543
        %v1980 = vpop.f32.mrb[0].mxu0
        %v1981 = vadd.f32 %v1753, %v1980
        %v1982 = vpop.f32.mrb[0].mxu0
        %1983 = vmatprep.mubr.f32.mxu0 0.0
        %1984 = vmatmul.mubr.f32.gmra.mrb[0].mxu0 %v1545
        %v1985 = vpop.f32.mrb[0].mxu0
        %v1986 = vadd.f32 %v1758, %v1985
        %v1987 = vpop.f32.mrb[0].mxu0
        %1988 = vmatprep.mubr.f32.mxu0 0.0
        %1989 = vmatmul.mubr.f32.gmra.mrb[0].mxu0 %v1547
        %v1990 = vpop.f32.mrb[0].mxu0
        %v1991 = vadd.f32 %v1763, %v1990
        %v1992 = vpop.f32.mrb[0].mxu0
        %1993 = vmatprep.mubr.f32.mxu0 0.0
        %1994 = vmatmul.mubr.f32.gmra.mrb[0].mxu0 %v1549
        %v1995 = vpop.f32.mrb[0].mxu0
        %v1996 = vadd.f32 %v1768, %v1995
        %v1997 = vpop.f32.mrb[0].mxu0
        %1998 = vmatprep.mubr.f32.mxu0 0.0
        %1999 = vmatmul.mubr.f32.gmra.mrb[0].mxu0 %v1551
        %v2000 = vpop.f32.mrb[0].mxu0
        %v2001 = vadd.f32 %v1773, %v2000
        %v2002 = vpop.f32.mrb[0].mxu0
        %2003 = vmatprep.mubr.f32.mxu0 0.0
        %2004 = vmatmul.mubr.f32.gmra.mrb[0].mxu0 %v1553
        %v2005 = vpop.f32.mrb[0].mxu0
        %v2006 = vadd.f32 %v1778, %v2005
        %v2007 = vpop.f32.mrb[0].mxu0
        %2008 = vmatprep.mubr.f32.mxu0 0.0
        %2009 = vmatmul.mubr.f32.gmra.mrb[0].mxu0 %v1555
        %v2010 = vpop.f32.mrb[0].mxu0
        %v2011 = vadd.f32 %v1783, %v2010
        %v2012 = vpop.f32.mrb[0].mxu0
        %2013 = vdwg.mxu0
        %s2014 = scalar_lea.vmem [#allocation5], 96
        %v2015 = vld [vmem:[%s2014] sm:$0xff]
        %v2016 = vld [vmem:[%s2014 + $0x8] sm:$0xff]
        %v2017 = vsel %vm1430, %v1494, %v1431
        %v2018 = vsel %vm1496, %v2017, 0
        %2020 = vmatprep.subr.mxu0 0.0
        %2021 = vmatpush1.msra.mxu0 %v2015
        %2022 = vmatprep.subr.mxu0 0.0
        %2023 = vmatpush1.msra.mxu0 %v2016
        %2024 = vmatprep.subr.mxu0 0.0
        %2025 = vmatpush1.msra.mxu0 0.0
        %2026 = vmatprep.subr.mxu0 0.0
        %2027 = vmatpush1.msra.mxu0 0.0
        %2028 = vmatprep.subr.mxu0 0.0
        %2029 = vmatpush1.msra.mxu0 0.0
        %2030 = vmatprep.subr.mxu0 0.0
        %2031 = vmatpush1.msra.mxu0 0.0
        %2032 = vmatprep.subr.mxu0 0.0
        %2033 = vmatpush1.msra.mxu0 0.0
        %2034 = vmatprep.subr.mxu0 0.0
        %2035 = vmatpush1.msra.mxu0 0.0
        %2036 = vmatprep.subr.mxu0 0.0
        %2037 = vmatpush1.msra.mxu0 0.0
        %2038 = vmatprep.subr.mxu0 0.0
        %2039 = vmatpush1.msra.mxu0 0.0
        %2040 = vmatprep.subr.mxu0 0.0
        %2041 = vmatpush1.msra.mxu0 0.0
        %2042 = vmatprep.subr.mxu0 0.0
        %2043 = vmatpush1.msra.mxu0 0.0
        %2044 = vmatprep.subr.mxu0 0.0
        %2045 = vmatpush1.msra.mxu0 0.0
        %2046 = vmatprep.subr.mxu0 0.0
        %2047 = vmatpush1.msra.mxu0 0.0
        %2048 = vmatprep.subr.mxu0 0.0
        %2049 = vmatpush1.msra.mxu0 0.0
        %2050 = vmatprep.subr.mxu0 0.0
        %2051 = vmatpush1.msra.mxu0 0.0
        %2052 = vmatprep.subr.mxu0 0.0
        %2053 = vmatpush1.msra.mxu0 0.0
        %2054 = vmatprep.subr.mxu0 0.0
        %2055 = vmatpush1.msra.mxu0 0.0
        %2056 = vmatprep.subr.mxu0 0.0
        %2057 = vmatpush1.msra.mxu0 0.0
        %2058 = vmatprep.subr.mxu0 0.0
        %2059 = vmatpush1.msra.mxu0 0.0
        %2060 = vmatprep.subr.mxu0 0.0
        %2061 = vmatpush1.msra.mxu0 0.0
        %2062 = vmatprep.subr.mxu0 0.0
        %2063 = vmatpush1.msra.mxu0 0.0
        %2064 = vmatprep.subr.mxu0 0.0
        %2065 = vmatpush1.msra.mxu0 0.0
        %2066 = vmatprep.subr.mxu0 0.0
        %2067 = vmatpush1.msra.mxu0 0.0
        %2068 = vmatprep.subr.mxu0 0.0
        %2069 = vmatpush1.msra.mxu0 0.0
        %2070 = vmatprep.subr.mxu0 0.0
        %2071 = vmatpush1.msra.mxu0 0.0
        %2072 = vmatprep.subr.mxu0 0.0
        %2073 = vmatpush1.msra.mxu0 0.0
        %2074 = vmatprep.subr.mxu0 0.0
        %2075 = vmatpush1.msra.mxu0 0.0
        %2076 = vmatprep.subr.mxu0 0.0
        %2077 = vmatpush1.msra.mxu0 0.0
        %2078 = vmatprep.subr.mxu0 0.0
        %2079 = vmatpush1.msra.mxu0 0.0
        %2080 = vmatprep.subr.mxu0 0.0
        %2081 = vmatpush1.msra.mxu0 0.0
        %2082 = vmatprep.subr.mxu0 0.0
        %2083 = vmatpush1.msra.mxu0 0.0
        %2084 = vmatprep.mubr.f32.mxu0 0.0
        %2085 = vmatmul.mubr.f32.gmra.mrb[0].mxu0 %v1501
        %v2086 = vpop.f32.mrb[0].mxu0
        %v2087 = vadd.f32 0.0, %v2086
        %v2088 = vpop.f32.mrb[0].mxu0
        %2089 = vmatprep.mubr.f32.mxu0 0.0
        %2090 = vmatmul.mubr.f32.gmra.mrb[0].mxu0 %v1503
        %v2091 = vpop.f32.mrb[0].mxu0
        %v2092 = vadd.f32 0.0, %v2091
        %v2093 = vpop.f32.mrb[0].mxu0
        %2094 = vmatprep.mubr.f32.mxu0 0.0
        %2095 = vmatmul.mubr.f32.gmra.mrb[0].mxu0 %v1505
        %v2096 = vpop.f32.mrb[0].mxu0
        %v2097 = vadd.f32 0.0, %v2096
        %v2098 = vpop.f32.mrb[0].mxu0
        %2099 = vmatprep.mubr.f32.mxu0 0.0
        %2100 = vmatmul.mubr.f32.gmra.mrb[0].mxu0 %v1507
        %v2101 = vpop.f32.mrb[0].mxu0
        %v2102 = vadd.f32 0.0, %v2101
        %v2103 = vpop.f32.mrb[0].mxu0
        %2104 = vmatprep.mubr.f32.mxu0 0.0
        %2105 = vmatmul.mubr.f32.gmra.mrb[0].mxu0 %v1509
        %v2106 = vpop.f32.mrb[0].mxu0
        %v2107 = vadd.f32 0.0, %v2106
        %v2108 = vpop.f32.mrb[0].mxu0
        %2109 = vmatprep.mubr.f32.mxu0 0.0
        %2110 = vmatmul.mubr.f32.gmra.mrb[0].mxu0 %v1511
        %v2111 = vpop.f32.mrb[0].mxu0
        %v2112 = vadd.f32 0.0, %v2111
        %v2113 = vpop.f32.mrb[0].mxu0
        %2114 = vmatprep.mubr.f32.mxu0 0.0
        %2115 = vmatmul.mubr.f32.gmra.mrb[0].mxu0 %v1513
        %v2116 = vpop.f32.mrb[0].mxu0
        %v2117 = vadd.f32 0.0, %v2116
        %v2118 = vpop.f32.mrb[0].mxu0
        %2119 = vmatprep.mubr.f32.mxu0 0.0
        %2120 = vmatmul.mubr.f32.gmra.mrb[0].mxu0 %v1515
        %v2121 = vpop.f32.mrb[0].mxu0
        %v2122 = vadd.f32 0.0, %v2121
        %v2123 = vpop.f32.mrb[0].mxu0
        %2124 = vmatprep.mubr.f32.mxu0 0.0
        %2125 = vmatmul.mubr.f32.gmra.mrb[0].mxu0 %v1517
        %v2126 = vpop.f32.mrb[0].mxu0
        %v2127 = vadd.f32 0.0, %v2126
        %v2128 = vpop.f32.mrb[0].mxu0
        %2129 = vmatprep.mubr.f32.mxu0 0.0
        %2130 = vmatmul.mubr.f32.gmra.mrb[0].mxu0 %v1519
        %v2131 = vpop.f32.mrb[0].mxu0
        %v2132 = vadd.f32 0.0, %v2131
        %v2133 = vpop.f32.mrb[0].mxu0
        %2134 = vmatprep.mubr.f32.mxu0 0.0
        %2135 = vmatmul.mubr.f32.gmra.mrb[0].mxu0 %v1521
        %v2136 = vpop.f32.mrb[0].mxu0
        %v2137 = vadd.f32 0.0, %v2136
        %v2138 = vpop.f32.mrb[0].mxu0
        %2139 = vmatprep.mubr.f32.mxu0 0.0
        %2140 = vmatmul.mubr.f32.gmra.mrb[0].mxu0 %v1523
        %v2141 = vpop.f32.mrb[0].mxu0
        %v2142 = vadd.f32 0.0, %v2141
        %v2143 = vpop.f32.mrb[0].mxu0
        %2144 = vmatprep.mubr.f32.mxu0 0.0
        %2145 = vmatmul.mubr.f32.gmra.mrb[0].mxu0 %v1525
        %v2146 = vpop.f32.mrb[0].mxu0
        %v2147 = vadd.f32 0.0, %v2146
        %v2148 = vpop.f32.mrb[0].mxu0
        %2149 = vmatprep.mubr.f32.mxu0 0.0
        %2150 = vmatmul.mubr.f32.gmra.mrb[0].mxu0 %v1527
        %v2151 = vpop.f32.mrb[0].mxu0
        %v2152 = vadd.f32 0.0, %v2151
        %v2153 = vpop.f32.mrb[0].mxu0
        %2154 = vmatprep.mubr.f32.mxu0 0.0
        %2155 = vmatmul.mubr.f32.gmra.mrb[0].mxu0 %v1529
        %v2156 = vpop.f32.mrb[0].mxu0
        %v2157 = vadd.f32 0.0, %v2156
        %v2158 = vpop.f32.mrb[0].mxu0
        %2159 = vmatprep.mubr.f32.mxu0 0.0
        %2160 = vmatmul.mubr.f32.gmra.mrb[0].mxu0 %v1531
        %v2161 = vpop.f32.mrb[0].mxu0
        %v2162 = vadd.f32 0.0, %v2161
        %v2163 = vpop.f32.mrb[0].mxu0
        %2164 = vmatprep.mubr.f32.mxu0 0.0
        %2165 = vmatmul.mubr.f32.gmra.mrb[0].mxu0 %v1533
        %v2166 = vpop.f32.mrb[0].mxu0
        %v2167 = vadd.f32 0.0, %v2166
        %v2168 = vpop.f32.mrb[0].mxu0
        %2169 = vmatprep.mubr.f32.mxu0 0.0
        %2170 = vmatmul.mubr.f32.gmra.mrb[0].mxu0 %v1535
        %v2171 = vpop.f32.mrb[0].mxu0
        %v2172 = vadd.f32 0.0, %v2171
        %v2173 = vpop.f32.mrb[0].mxu0
        %2174 = vmatprep.mubr.f32.mxu0 0.0
        %2175 = vmatmul.mubr.f32.gmra.mrb[0].mxu0 %v1537
        %v2176 = vpop.f32.mrb[0].mxu0
        %v2177 = vadd.f32 0.0, %v2176
        %v2178 = vpop.f32.mrb[0].mxu0
        %2179 = vmatprep.mubr.f32.mxu0 0.0
        %2180 = vmatmul.mubr.f32.gmra.mrb[0].mxu0 %v1539
        %v2181 = vpop.f32.mrb[0].mxu0
        %v2182 = vadd.f32 0.0, %v2181
        %v2183 = vpop.f32.mrb[0].mxu0
        %2184 = vmatprep.mubr.f32.mxu0 0.0
        %2185 = vmatmul.mubr.f32.gmra.mrb[0].mxu0 %v1541
        %v2186 = vpop.f32.mrb[0].mxu0
        %v2187 = vadd.f32 0.0, %v2186
        %v2188 = vpop.f32.mrb[0].mxu0
        %2189 = vmatprep.mubr.f32.mxu0 0.0
        %2190 = vmatmul.mubr.f32.gmra.mrb[0].mxu0 %v1543
        %v2191 = vpop.f32.mrb[0].mxu0
        %v2192 = vadd.f32 0.0, %v2191
        %v2193 = vpop.f32.mrb[0].mxu0
        %2194 = vmatprep.mubr.f32.mxu0 0.0
        %2195 = vmatmul.mubr.f32.gmra.mrb[0].mxu0 %v1545
        %v2196 = vpop.f32.mrb[0].mxu0
        %v2197 = vadd.f32 0.0, %v2196
        %v2198 = vpop.f32.mrb[0].mxu0
        %2199 = vmatprep.mubr.f32.mxu0 0.0
        %2200 = vmatmul.mubr.f32.gmra.mrb[0].mxu0 %v1547
        %v2201 = vpop.f32.mrb[0].mxu0
        %v2202 = vadd.f32 0.0, %v2201
        %v2203 = vpop.f32.mrb[0].mxu0
        %2204 = vmatprep.mubr.f32.mxu0 0.0
        %2205 = vmatmul.mubr.f32.gmra.mrb[0].mxu0 %v1549
        %v2206 = vpop.f32.mrb[0].mxu0
        %v2207 = vadd.f32 0.0, %v2206
        %v2208 = vpop.f32.mrb[0].mxu0
        %2209 = vmatprep.mubr.f32.mxu0 0.0
        %2210 = vmatmul.mubr.f32.gmra.mrb[0].mxu0 %v1551
        %v2211 = vpop.f32.mrb[0].mxu0
        %v2212 = vadd.f32 0.0, %v2211
        %v2213 = vpop.f32.mrb[0].mxu0
        %2214 = vmatprep.mubr.f32.mxu0 0.0
        %2215 = vmatmul.mubr.f32.gmra.mrb[0].mxu0 %v1553
        %v2216 = vpop.f32.mrb[0].mxu0
        %v2217 = vadd.f32 0.0, %v2216
        %v2218 = vpop.f32.mrb[0].mxu0
        %2219 = vmatprep.mubr.f32.mxu0 0.0
        %2220 = vmatmul.mubr.f32.gmra.mrb[0].mxu0 %v1555
        %v2221 = vpop.f32.mrb[0].mxu0
        %v2222 = vadd.f32 0.0, %v2221
        %v2223 = vpop.f32.mrb[0].mxu0
        %2224 = vmatprep.mubr.f32.mxu0 0.0
        %2225 = vmatmul.mubr.f32.gmra.mrb[0].mxu0 %v1557
        %v2226 = vpop.f32.mrb[0].mxu0
        %v2227 = vadd.f32 0.0, %v2226
        %v2228 = vpop.f32.mrb[0].mxu0
        %2229 = vmatprep.mubr.f32.mxu0 0.0
        %2230 = vmatmul.mubr.f32.gmra.mrb[0].mxu0 %v1559
        %v2231 = vpop.f32.mrb[0].mxu0
        %v2232 = vadd.f32 0.0, %v2231
        %v2233 = vpop.f32.mrb[0].mxu0
        %2234 = vmatprep.mubr.f32.mxu0 0.0
        %2235 = vmatmul.mubr.f32.gmra.mrb[0].mxu0 %v2018
        %v2236 = vpop.f32.mrb[0].mxu0
        %v2237 = vadd.f32 0.0, %v2236
        %v2238 = vpop.f32.mrb[0].mxu0
        %2239 = vmatprep.mubr.f32.mxu0 0.0
        %2240 = vmatmul.mubr.f32.gmra.mrb[0].mxu0 %v1787
        %v2241 = vpop.f32.mrb[0].mxu0
        %v2242 = vadd.f32 0.0, %v2241
        %v2243 = vpop.f32.mrb[0].mxu0
        %2244 = vdwg.mxu0
        %v2245 = vadd.f32 %v1856, %v2087
        %v2246 = vadd.f32 %v1861, %v2092
        %v2247 = vadd.f32 %v1866, %v2097
        %v2248 = vadd.f32 %v1871, %v2102
        %v2249 = vadd.f32 %v1876, %v2107
        %v2250 = vadd.f32 %v1881, %v2112
        %v2251 = vadd.f32 %v1886, %v2117
        %v2252 = vadd.f32 %v1891, %v2122
        %v2253 = vadd.f32 %v1896, %v2127
        %v2254 = vadd.f32 %v1901, %v2132
        %v2255 = vadd.f32 %v1906, %v2137
        %v2256 = vadd.f32 %v1911, %v2142
        %v2257 = vadd.f32 %v1916, %v2147
        %v2258 = vadd.f32 %v1921, %v2152
        %v2259 = vadd.f32 %v1926, %v2157
        %v2260 = vadd.f32 %v1931, %v2162
        %v2261 = vadd.f32 %v1936, %v2167
        %v2262 = vadd.f32 %v1941, %v2172
        %v2263 = vadd.f32 %v1946, %v2177
        %v2264 = vadd.f32 %v1951, %v2182
        %v2265 = vadd.f32 %v1956, %v2187
        %v2266 = vadd.f32 %v1961, %v2192
        %v2267 = vadd.f32 %v1966, %v2197
        %v2268 = vadd.f32 %v1971, %v2202
        %v2269 = vadd.f32 %v1976, %v2207
        %v2270 = vadd.f32 %v1981, %v2212
        %v2271 = vadd.f32 %v1986, %v2217
        %v2272 = vadd.f32 %v1991, %v2222
        %v2273 = vadd.f32 %v1996, %v2227
        %v2274 = vadd.f32 %v2001, %v2232
        %v2275 = vadd.f32 %v2006, %v2237
        %v2276 = vadd.f32 %v2011, %v2242
        %v2277 = vmul.f32 %v2245, %v1264
        %v2278 = vmul.f32 %v2246, %v1265
        %v2279 = vmul.f32 %v2247, %v1266
        %v2280 = vmul.f32 %v2248, %v1267
        %v2281 = vmul.f32 %v2249, %v1268
        %v2282 = vmul.f32 %v2250, %v1269
        %v2283 = vmul.f32 %v2251, %v1270
        %v2284 = vmul.f32 %v2252, %v1271
        %v2285 = vmul.f32 %v2253, %v1272
        %v2286 = vmul.f32 %v2254, %v1273
        %v2287 = vmul.f32 %v2255, %v1274
        %v2288 = vmul.f32 %v2256, %v1275
        %v2289 = vmul.f32 %v2257, %v1276
        %v2290 = vmul.f32 %v2258, %v1277
        %v2291 = vmul.f32 %v2259, %v1278
        %v2292 = vmul.f32 %v2260, %v1279
        %v2293 = vmul.f32 %v2261, %v1280
        %v2294 = vmul.f32 %v2262, %v1281
        %v2295 = vmul.f32 %v2263, %v1282
        %v2296 = vmul.f32 %v2264, %v1283
        %v2297 = vmul.f32 %v2265, %v1284
        %v2298 = vmul.f32 %v2266, %v1285
        %v2299 = vmul.f32 %v2267, %v1286
        %v2300 = vmul.f32 %v2268, %v1287
        %v2301 = vmul.f32 %v2269, %v1288
        %v2302 = vmul.f32 %v2270, %v1289
        %v2303 = vmul.f32 %v2271, %v1290
        %v2304 = vmul.f32 %v2272, %v1291
        %v2305 = vmul.f32 %v2273, %v1292
        %v2306 = vmul.f32 %v2274, %v1293
        %v2307 = vmul.f32 %v2275, %v1294
        %v2308 = vmul.f32 %v2276, %v1295
        %v2309 = vadd.f32 %v2277, 0.0
        %v2310 = vadd.f32 %v2278, 0.0
        %v2311 = vadd.f32 %v2279, 0.0
        %v2312 = vadd.f32 %v2280, 0.0
        %v2313 = vadd.f32 %v2281, 0.0
        %v2314 = vadd.f32 %v2282, 0.0
        %v2315 = vadd.f32 %v2283, 0.0
        %v2316 = vadd.f32 %v2284, 0.0
        %v2317 = vadd.f32 %v2285, 0.0
        %v2318 = vadd.f32 %v2286, 0.0
        %v2319 = vadd.f32 %v2287, 0.0
        %v2320 = vadd.f32 %v2288, 0.0
        %v2321 = vadd.f32 %v2289, 0.0
        %v2322 = vadd.f32 %v2290, 0.0
        %v2323 = vadd.f32 %v2291, 0.0
        %v2324 = vadd.f32 %v2292, 0.0
        %v2325 = vadd.f32 %v2293, 0.0
        %v2326 = vadd.f32 %v2294, 0.0
        %v2327 = vadd.f32 %v2295, 0.0
        %v2328 = vadd.f32 %v2296, 0.0
        %v2329 = vadd.f32 %v2297, 0.0
        %v2330 = vadd.f32 %v2298, 0.0
        %v2331 = vadd.f32 %v2299, 0.0
        %v2332 = vadd.f32 %v2300, 0.0
        %v2333 = vadd.f32 %v2301, 0.0
        %v2334 = vadd.f32 %v2302, 0.0
        %v2335 = vadd.f32 %v2303, 0.0
        %v2336 = vadd.f32 %v2304, 0.0
        %v2337 = vadd.f32 %v2305, 0.0
        %v2338 = vadd.f32 %v2306, 0.0
        %v2339 = vadd.f32 %v2307, 0.0
        %v2340 = vadd.f32 %v2308, 0.0
        %s2341 = scalar_lea.vmem [#allocation5], 16
        %v2342 = vld [vmem:[%s2341] sm:$0xff]
        %v2343 = vld [vmem:[%s2341 + $0x8] sm:$0xff]
        %s2344 = scalar_lea.vmem [#allocation5], 64
        %v2345 = vld [vmem:[%s2344] sm:$0xff]
        %v2346 = vld [vmem:[%s2344 + $0x8] sm:$0xff]
        %v2347 = vsel %vm1496, %v751, 0
        %v2349 = vsel %vm1496, %v752, 0
        %v2351 = vsel %vm1496, %v753, 0
        %v2353 = vsel %vm1496, %v754, 0
        %v2355 = vsel %vm1496, %v755, 0
        %v2357 = vsel %vm1496, %v756, 0
        %v2359 = vsel %vm1496, %v757, 0
        %v2361 = vsel %vm1496, %v758, 0
        %v2363 = vsel %vm1496, %v759, 0
        %v2365 = vsel %vm1496, %v760, 0
        %v2367 = vsel %vm1496, %v761, 0
        %v2369 = vsel %vm1496, %v762, 0
        %v2371 = vsel %vm1496, %v763, 0
        %v2373 = vsel %vm1496, %v764, 0
        %v2375 = vsel %vm1496, %v765, 0
        %v2377 = vsel %vm1496, %v766, 0
        %v2379 = vsel %vm1496, %v767, 0
        %v2381 = vsel %vm1496, %v768, 0
        %v2383 = vsel %vm1496, %v769, 0
        %v2385 = vsel %vm1496, %v770, 0
        %v2387 = vsel %vm1496, %v771, 0
        %v2389 = vsel %vm1496, %v772, 0
        %v2391 = vsel %vm1496, %v773, 0
        %v2393 = vsel %vm1496, %v774, 0
        %v2395 = vsel %vm1496, %v775, 0
        %v2397 = vsel %vm1496, %v776, 0
        %v2399 = vsel %vm1496, %v777, 0
        %v2401 = vsel %vm1496, %v778, 0
        %v2403 = vsel %vm1496, %v779, 0
        %v2405 = vsel %vm1496, %v780, 0
        %v2407 = vsel %vm1496, %v781, 0
        %v2409 = vsel %vm1496, %v782, 0
        %2411 = vmatprep.subr.mxu0 0.0
        %2412 = vmatpush1.msra.mxu0 %v2345
        %2413 = vmatprep.subr.mxu0 0.0
        %2414 = vmatpush1.msra.mxu0 %v2346
        %2415 = vmatprep.subr.mxu0 0.0
        %2416 = vmatpush1.msra.mxu0 0.0
        %2417 = vmatprep.subr.mxu0 0.0
        %2418 = vmatpush1.msra.mxu0 0.0
        %2419 = vmatprep.subr.mxu0 0.0
        %2420 = vmatpush1.msra.mxu0 0.0
        %2421 = vmatprep.subr.mxu0 0.0
        %2422 = vmatpush1.msra.mxu0 0.0
        %2423 = vmatprep.subr.mxu0 0.0
        %2424 = vmatpush1.msra.mxu0 0.0
        %2425 = vmatprep.subr.mxu0 0.0
        %2426 = vmatpush1.msra.mxu0 0.0
        %2427 = vmatprep.subr.mxu0 0.0
        %2428 = vmatpush1.msra.mxu0 0.0
        %2429 = vmatprep.subr.mxu0 0.0
        %2430 = vmatpush1.msra.mxu0 0.0
        %2431 = vmatprep.subr.mxu0 0.0
        %2432 = vmatpush1.msra.mxu0 0.0
        %2433 = vmatprep.subr.mxu0 0.0
        %2434 = vmatpush1.msra.mxu0 0.0
        %2435 = vmatprep.subr.mxu0 0.0
        %2436 = vmatpush1.msra.mxu0 0.0
        %2437 = vmatprep.subr.mxu0 0.0
        %2438 = vmatpush1.msra.mxu0 0.0
        %2439 = vmatprep.subr.mxu0 0.0
        %2440 = vmatpush1.msra.mxu0 0.0
        %2441 = vmatprep.subr.mxu0 0.0
        %2442 = vmatpush1.msra.mxu0 0.0
        %2443 = vmatprep.subr.mxu0 0.0
        %2444 = vmatpush1.msra.mxu0 0.0
        %2445 = vmatprep.subr.mxu0 0.0
        %2446 = vmatpush1.msra.mxu0 0.0
        %2447 = vmatprep.subr.mxu0 0.0
        %2448 = vmatpush1.msra.mxu0 0.0
        %2449 = vmatprep.subr.mxu0 0.0
        %2450 = vmatpush1.msra.mxu0 0.0
        %2451 = vmatprep.subr.mxu0 0.0
        %2452 = vmatpush1.msra.mxu0 0.0
        %2453 = vmatprep.subr.mxu0 0.0
        %2454 = vmatpush1.msra.mxu0 0.0
        %2455 = vmatprep.subr.mxu0 0.0
        %2456 = vmatpush1.msra.mxu0 0.0
        %2457 = vmatprep.subr.mxu0 0.0
        %2458 = vmatpush1.msra.mxu0 0.0
        %2459 = vmatprep.subr.mxu0 0.0
        %2460 = vmatpush1.msra.mxu0 0.0
        %2461 = vmatprep.subr.mxu0 0.0
        %2462 = vmatpush1.msra.mxu0 0.0
        %2463 = vmatprep.subr.mxu0 0.0
        %2464 = vmatpush1.msra.mxu0 0.0
        %2465 = vmatprep.subr.mxu0 0.0
        %2466 = vmatpush1.msra.mxu0 0.0
        %2467 = vmatprep.subr.mxu0 0.0
        %2468 = vmatpush1.msra.mxu0 0.0
        %2469 = vmatprep.subr.mxu0 0.0
        %2470 = vmatpush1.msra.mxu0 0.0
        %2471 = vmatprep.subr.mxu0 0.0
        %2472 = vmatpush1.msra.mxu0 0.0
        %2473 = vmatprep.subr.mxu0 0.0
        %2474 = vmatpush1.msra.mxu0 0.0
        %2475 = vmatprep.mubr.f32.mxu0 0.0
        %2476 = vmatmul.mubr.f32.gmra.mrb[0].mxu0 %v2347
        %v2477 = vpop.f32.mrb[0].mxu0
        %v2478 = vadd.f32 0.0, %v2477
        %v2479 = vpop.f32.mrb[0].mxu0
        %2480 = vmatprep.mubr.f32.mxu0 0.0
        %2481 = vmatmul.mubr.f32.gmra.mrb[0].mxu0 %v2349
        %v2482 = vpop.f32.mrb[0].mxu0
        %v2483 = vadd.f32 0.0, %v2482
        %v2484 = vpop.f32.mrb[0].mxu0
        %2485 = vmatprep.mubr.f32.mxu0 0.0
        %2486 = vmatmul.mubr.f32.gmra.mrb[0].mxu0 %v2351
        %v2487 = vpop.f32.mrb[0].mxu0
        %v2488 = vadd.f32 0.0, %v2487
        %v2489 = vpop.f32.mrb[0].mxu0
        %2490 = vmatprep.mubr.f32.mxu0 0.0
        %2491 = vmatmul.mubr.f32.gmra.mrb[0].mxu0 %v2353
        %v2492 = vpop.f32.mrb[0].mxu0
        %v2493 = vadd.f32 0.0, %v2492
        %v2494 = vpop.f32.mrb[0].mxu0
        %2495 = vmatprep.mubr.f32.mxu0 0.0
        %2496 = vmatmul.mubr.f32.gmra.mrb[0].mxu0 %v2355
        %v2497 = vpop.f32.mrb[0].mxu0
        %v2498 = vadd.f32 0.0, %v2497
        %v2499 = vpop.f32.mrb[0].mxu0
        %2500 = vmatprep.mubr.f32.mxu0 0.0
        %2501 = vmatmul.mubr.f32.gmra.mrb[0].mxu0 %v2357
        %v2502 = vpop.f32.mrb[0].mxu0
        %v2503 = vadd.f32 0.0, %v2502
        %v2504 = vpop.f32.mrb[0].mxu0
        %2505 = vmatprep.mubr.f32.mxu0 0.0
        %2506 = vmatmul.mubr.f32.gmra.mrb[0].mxu0 %v2359
        %v2507 = vpop.f32.mrb[0].mxu0
        %v2508 = vadd.f32 0.0, %v2507
        %v2509 = vpop.f32.mrb[0].mxu0
        %2510 = vmatprep.mubr.f32.mxu0 0.0
        %2511 = vmatmul.mubr.f32.gmra.mrb[0].mxu0 %v2361
        %v2512 = vpop.f32.mrb[0].mxu0
        %v2513 = vadd.f32 0.0, %v2512
        %v2514 = vpop.f32.mrb[0].mxu0
        %2515 = vmatprep.mubr.f32.mxu0 0.0
        %2516 = vmatmul.mubr.f32.gmra.mrb[0].mxu0 %v2363
        %v2517 = vpop.f32.mrb[0].mxu0
        %v2518 = vadd.f32 0.0, %v2517
        %v2519 = vpop.f32.mrb[0].mxu0
        %2520 = vmatprep.mubr.f32.mxu0 0.0
        %2521 = vmatmul.mubr.f32.gmra.mrb[0].mxu0 %v2365
        %v2522 = vpop.f32.mrb[0].mxu0
        %v2523 = vadd.f32 0.0, %v2522
        %v2524 = vpop.f32.mrb[0].mxu0
        %2525 = vmatprep.mubr.f32.mxu0 0.0
        %2526 = vmatmul.mubr.f32.gmra.mrb[0].mxu0 %v2367
        %v2527 = vpop.f32.mrb[0].mxu0
        %v2528 = vadd.f32 0.0, %v2527
        %v2529 = vpop.f32.mrb[0].mxu0
        %2530 = vmatprep.mubr.f32.mxu0 0.0
        %2531 = vmatmul.mubr.f32.gmra.mrb[0].mxu0 %v2369
        %v2532 = vpop.f32.mrb[0].mxu0
        %v2533 = vadd.f32 0.0, %v2532
        %v2534 = vpop.f32.mrb[0].mxu0
        %2535 = vmatprep.mubr.f32.mxu0 0.0
        %2536 = vmatmul.mubr.f32.gmra.mrb[0].mxu0 %v2371
        %v2537 = vpop.f32.mrb[0].mxu0
        %v2538 = vadd.f32 0.0, %v2537
        %v2539 = vpop.f32.mrb[0].mxu0
        %2540 = vmatprep.mubr.f32.mxu0 0.0
        %2541 = vmatmul.mubr.f32.gmra.mrb[0].mxu0 %v2373
        %v2542 = vpop.f32.mrb[0].mxu0
        %v2543 = vadd.f32 0.0, %v2542
        %v2544 = vpop.f32.mrb[0].mxu0
        %2545 = vmatprep.mubr.f32.mxu0 0.0
        %2546 = vmatmul.mubr.f32.gmra.mrb[0].mxu0 %v2375
        %v2547 = vpop.f32.mrb[0].mxu0
        %v2548 = vadd.f32 0.0, %v2547
        %v2549 = vpop.f32.mrb[0].mxu0
        %2550 = vmatprep.mubr.f32.mxu0 0.0
        %2551 = vmatmul.mubr.f32.gmra.mrb[0].mxu0 %v2377
        %v2552 = vpop.f32.mrb[0].mxu0
        %v2553 = vadd.f32 0.0, %v2552
        %v2554 = vpop.f32.mrb[0].mxu0
        %2555 = vmatprep.mubr.f32.mxu0 0.0
        %2556 = vmatmul.mubr.f32.gmra.mrb[0].mxu0 %v2379
        %v2557 = vpop.f32.mrb[0].mxu0
        %v2558 = vadd.f32 0.0, %v2557
        %v2559 = vpop.f32.mrb[0].mxu0
        %2560 = vmatprep.mubr.f32.mxu0 0.0
        %2561 = vmatmul.mubr.f32.gmra.mrb[0].mxu0 %v2381
        %v2562 = vpop.f32.mrb[0].mxu0
        %v2563 = vadd.f32 0.0, %v2562
        %v2564 = vpop.f32.mrb[0].mxu0
        %2565 = vmatprep.mubr.f32.mxu0 0.0
        %2566 = vmatmul.mubr.f32.gmra.mrb[0].mxu0 %v2383
        %v2567 = vpop.f32.mrb[0].mxu0
        %v2568 = vadd.f32 0.0, %v2567
        %v2569 = vpop.f32.mrb[0].mxu0
        %2570 = vmatprep.mubr.f32.mxu0 0.0
        %2571 = vmatmul.mubr.f32.gmra.mrb[0].mxu0 %v2385
        %v2572 = vpop.f32.mrb[0].mxu0
        %v2573 = vadd.f32 0.0, %v2572
        %v2574 = vpop.f32.mrb[0].mxu0
        %2575 = vmatprep.mubr.f32.mxu0 0.0
        %2576 = vmatmul.mubr.f32.gmra.mrb[0].mxu0 %v2387
        %v2577 = vpop.f32.mrb[0].mxu0
        %v2578 = vadd.f32 0.0, %v2577
        %v2579 = vpop.f32.mrb[0].mxu0
        %2580 = vmatprep.mubr.f32.mxu0 0.0
        %2581 = vmatmul.mubr.f32.gmra.mrb[0].mxu0 %v2389
        %v2582 = vpop.f32.mrb[0].mxu0
        %v2583 = vadd.f32 0.0, %v2582
        %v2584 = vpop.f32.mrb[0].mxu0
        %2585 = vmatprep.mubr.f32.mxu0 0.0
        %2586 = vmatmul.mubr.f32.gmra.mrb[0].mxu0 %v2391
        %v2587 = vpop.f32.mrb[0].mxu0
        %v2588 = vadd.f32 0.0, %v2587
        %v2589 = vpop.f32.mrb[0].mxu0
        %2590 = vmatprep.mubr.f32.mxu0 0.0
        %2591 = vmatmul.mubr.f32.gmra.mrb[0].mxu0 %v2393
        %v2592 = vpop.f32.mrb[0].mxu0
        %v2593 = vadd.f32 0.0, %v2592
        %v2594 = vpop.f32.mrb[0].mxu0
        %2595 = vmatprep.mubr.f32.mxu0 0.0
        %2596 = vmatmul.mubr.f32.gmra.mrb[0].mxu0 %v2395
        %v2597 = vpop.f32.mrb[0].mxu0
        %v2598 = vadd.f32 0.0, %v2597
        %v2599 = vpop.f32.mrb[0].mxu0
        %2600 = vmatprep.mubr.f32.mxu0 0.0
        %2601 = vmatmul.mubr.f32.gmra.mrb[0].mxu0 %v2397
        %v2602 = vpop.f32.mrb[0].mxu0
        %v2603 = vadd.f32 0.0, %v2602
        %v2604 = vpop.f32.mrb[0].mxu0
        %2605 = vmatprep.mubr.f32.mxu0 0.0
        %2606 = vmatmul.mubr.f32.gmra.mrb[0].mxu0 %v2399
        %v2607 = vpop.f32.mrb[0].mxu0
        %v2608 = vadd.f32 0.0, %v2607
        %v2609 = vpop.f32.mrb[0].mxu0
        %2610 = vmatprep.mubr.f32.mxu0 0.0
        %2611 = vmatmul.mubr.f32.gmra.mrb[0].mxu0 %v2401
        %v2612 = vpop.f32.mrb[0].mxu0
        %v2613 = vadd.f32 0.0, %v2612
        %v2614 = vpop.f32.mrb[0].mxu0
        %2615 = vmatprep.mubr.f32.mxu0 0.0
        %2616 = vmatmul.mubr.f32.gmra.mrb[0].mxu0 %v2403
        %v2617 = vpop.f32.mrb[0].mxu0
        %v2618 = vadd.f32 0.0, %v2617
        %v2619 = vpop.f32.mrb[0].mxu0
        %2620 = vmatprep.mubr.f32.mxu0 0.0
        %2621 = vmatmul.mubr.f32.gmra.mrb[0].mxu0 %v2405
        %v2622 = vpop.f32.mrb[0].mxu0
        %v2623 = vadd.f32 0.0, %v2622
        %v2624 = vpop.f32.mrb[0].mxu0
        %2625 = vmatprep.mubr.f32.mxu0 0.0
        %2626 = vmatmul.mubr.f32.gmra.mrb[0].mxu0 %v2407
        %v2627 = vpop.f32.mrb[0].mxu0
        %v2628 = vadd.f32 0.0, %v2627
        %v2629 = vpop.f32.mrb[0].mxu0
        %2630 = vmatprep.mubr.f32.mxu0 0.0
        %2631 = vmatmul.mubr.f32.gmra.mrb[0].mxu0 %v2409
        %v2632 = vpop.f32.mrb[0].mxu0
        %v2633 = vadd.f32 0.0, %v2632
        %v2634 = vpop.f32.mrb[0].mxu0
        %2635 = vdwg.mxu0
        %v2636 = vsel %vm1496, 0.0, 0
        %2638 = vmatprep.subr.mxu0 0.0
        %2639 = vmatpush1.msra.mxu0 %v2342
        %2640 = vmatprep.subr.mxu0 0.0
        %2641 = vmatpush1.msra.mxu0 %v2343
        %2642 = vmatprep.subr.mxu0 0.0
        %2643 = vmatpush1.msra.mxu0 0.0
        %2644 = vmatprep.subr.mxu0 0.0
        %2645 = vmatpush1.msra.mxu0 0.0
        %2646 = vmatprep.subr.mxu0 0.0
        %2647 = vmatpush1.msra.mxu0 0.0
        %2648 = vmatprep.subr.mxu0 0.0
        %2649 = vmatpush1.msra.mxu0 0.0
        %2650 = vmatprep.subr.mxu0 0.0
        %2651 = vmatpush1.msra.mxu0 0.0
        %2652 = vmatprep.subr.mxu0 0.0
        %2653 = vmatpush1.msra.mxu0 0.0
        %2654 = vmatprep.subr.mxu0 0.0
        %2655 = vmatpush1.msra.mxu0 0.0
        %2656 = vmatprep.subr.mxu0 0.0
        %2657 = vmatpush1.msra.mxu0 0.0
        %2658 = vmatprep.subr.mxu0 0.0
        %2659 = vmatpush1.msra.mxu0 0.0
        %2660 = vmatprep.subr.mxu0 0.0
        %2661 = vmatpush1.msra.mxu0 0.0
        %2662 = vmatprep.subr.mxu0 0.0
        %2663 = vmatpush1.msra.mxu0 0.0
        %2664 = vmatprep.subr.mxu0 0.0
        %2665 = vmatpush1.msra.mxu0 0.0
        %2666 = vmatprep.subr.mxu0 0.0
        %2667 = vmatpush1.msra.mxu0 0.0
        %2668 = vmatprep.subr.mxu0 0.0
        %2669 = vmatpush1.msra.mxu0 0.0
        %2670 = vmatprep.subr.mxu0 0.0
        %2671 = vmatpush1.msra.mxu0 0.0
        %2672 = vmatprep.subr.mxu0 0.0
        %2673 = vmatpush1.msra.mxu0 0.0
        %2674 = vmatprep.subr.mxu0 0.0
        %2675 = vmatpush1.msra.mxu0 0.0
        %2676 = vmatprep.subr.mxu0 0.0
        %2677 = vmatpush1.msra.mxu0 0.0
        %2678 = vmatprep.subr.mxu0 0.0
        %2679 = vmatpush1.msra.mxu0 0.0
        %2680 = vmatprep.subr.mxu0 0.0
        %2681 = vmatpush1.msra.mxu0 0.0
        %2682 = vmatprep.subr.mxu0 0.0
        %2683 = vmatpush1.msra.mxu0 0.0
        %2684 = vmatprep.subr.mxu0 0.0
        %2685 = vmatpush1.msra.mxu0 0.0
        %2686 = vmatprep.subr.mxu0 0.0
        %2687 = vmatpush1.msra.mxu0 0.0
        %2688 = vmatprep.subr.mxu0 0.0
        %2689 = vmatpush1.msra.mxu0 0.0
        %2690 = vmatprep.subr.mxu0 0.0
        %2691 = vmatpush1.msra.mxu0 0.0
        %2692 = vmatprep.subr.mxu0 0.0
        %2693 = vmatpush1.msra.mxu0 0.0
        %2694 = vmatprep.subr.mxu0 0.0
        %2695 = vmatpush1.msra.mxu0 0.0
        %2696 = vmatprep.subr.mxu0 0.0
        %2697 = vmatpush1.msra.mxu0 0.0
        %2698 = vmatprep.subr.mxu0 0.0
        %2699 = vmatpush1.msra.mxu0 0.0
        %2700 = vmatprep.subr.mxu0 0.0
        %2701 = vmatpush1.msra.mxu0 0.0
        %2702 = vmatprep.mubr.f32.mxu0 0.0
        %2703 = vmatmul.mubr.f32.gmra.mrb[0].mxu0 %v2636
        %v2704 = vpop.f32.mrb[0].mxu0
        %v2705 = vadd.f32 %v2478, %v2704
        %v2706 = vpop.f32.mrb[0].mxu0
        %2707 = vmatprep.mubr.f32.mxu0 0.0
        %2708 = vmatmul.mubr.f32.gmra.mrb[0].mxu0 %v2636
        %v2709 = vpop.f32.mrb[0].mxu0
        %v2710 = vadd.f32 %v2483, %v2709
        %v2711 = vpop.f32.mrb[0].mxu0
        %2712 = vmatprep.mubr.f32.mxu0 0.0
        %2713 = vmatmul.mubr.f32.gmra.mrb[0].mxu0 %v2347
        %v2714 = vpop.f32.mrb[0].mxu0
        %v2715 = vadd.f32 %v2488, %v2714
        %v2716 = vpop.f32.mrb[0].mxu0
        %2717 = vmatprep.mubr.f32.mxu0 0.0
        %2718 = vmatmul.mubr.f32.gmra.mrb[0].mxu0 %v2349
        %v2719 = vpop.f32.mrb[0].mxu0
        %v2720 = vadd.f32 %v2493, %v2719
        %v2721 = vpop.f32.mrb[0].mxu0
        %2722 = vmatprep.mubr.f32.mxu0 0.0
        %2723 = vmatmul.mubr.f32.gmra.mrb[0].mxu0 %v2351
        %v2724 = vpop.f32.mrb[0].mxu0
        %v2725 = vadd.f32 %v2498, %v2724
        %v2726 = vpop.f32.mrb[0].mxu0
        %2727 = vmatprep.mubr.f32.mxu0 0.0
        %2728 = vmatmul.mubr.f32.gmra.mrb[0].mxu0 %v2353
        %v2729 = vpop.f32.mrb[0].mxu0
        %v2730 = vadd.f32 %v2503, %v2729
        %v2731 = vpop.f32.mrb[0].mxu0
        %2732 = vmatprep.mubr.f32.mxu0 0.0
        %2733 = vmatmul.mubr.f32.gmra.mrb[0].mxu0 %v2355
        %v2734 = vpop.f32.mrb[0].mxu0
        %v2735 = vadd.f32 %v2508, %v2734
        %v2736 = vpop.f32.mrb[0].mxu0
        %2737 = vmatprep.mubr.f32.mxu0 0.0
        %2738 = vmatmul.mubr.f32.gmra.mrb[0].mxu0 %v2357
        %v2739 = vpop.f32.mrb[0].mxu0
        %v2740 = vadd.f32 %v2513, %v2739
        %v2741 = vpop.f32.mrb[0].mxu0
        %2742 = vmatprep.mubr.f32.mxu0 0.0
        %2743 = vmatmul.mubr.f32.gmra.mrb[0].mxu0 %v2359
        %v2744 = vpop.f32.mrb[0].mxu0
        %v2745 = vadd.f32 %v2518, %v2744
        %v2746 = vpop.f32.mrb[0].mxu0
        %2747 = vmatprep.mubr.f32.mxu0 0.0
        %2748 = vmatmul.mubr.f32.gmra.mrb[0].mxu0 %v2361
        %v2749 = vpop.f32.mrb[0].mxu0
        %v2750 = vadd.f32 %v2523, %v2749
        %v2751 = vpop.f32.mrb[0].mxu0
        %2752 = vmatprep.mubr.f32.mxu0 0.0
        %2753 = vmatmul.mubr.f32.gmra.mrb[0].mxu0 %v2363
        %v2754 = vpop.f32.mrb[0].mxu0
        %v2755 = vadd.f32 %v2528, %v2754
        %v2756 = vpop.f32.mrb[0].mxu0
        %2757 = vmatprep.mubr.f32.mxu0 0.0
        %2758 = vmatmul.mubr.f32.gmra.mrb[0].mxu0 %v2365
        %v2759 = vpop.f32.mrb[0].mxu0
        %v2760 = vadd.f32 %v2533, %v2759
        %v2761 = vpop.f32.mrb[0].mxu0
        %2762 = vmatprep.mubr.f32.mxu0 0.0
        %2763 = vmatmul.mubr.f32.gmra.mrb[0].mxu0 %v2367
        %v2764 = vpop.f32.mrb[0].mxu0
        %v2765 = vadd.f32 %v2538, %v2764
        %v2766 = vpop.f32.mrb[0].mxu0
        %2767 = vmatprep.mubr.f32.mxu0 0.0
        %2768 = vmatmul.mubr.f32.gmra.mrb[0].mxu0 %v2369
        %v2769 = vpop.f32.mrb[0].mxu0
        %v2770 = vadd.f32 %v2543, %v2769
        %v2771 = vpop.f32.mrb[0].mxu0
        %2772 = vmatprep.mubr.f32.mxu0 0.0
        %2773 = vmatmul.mubr.f32.gmra.mrb[0].mxu0 %v2371
        %v2774 = vpop.f32.mrb[0].mxu0
        %v2775 = vadd.f32 %v2548, %v2774
        %v2776 = vpop.f32.mrb[0].mxu0
        %2777 = vmatprep.mubr.f32.mxu0 0.0
        %2778 = vmatmul.mubr.f32.gmra.mrb[0].mxu0 %v2373
        %v2779 = vpop.f32.mrb[0].mxu0
        %v2780 = vadd.f32 %v2553, %v2779
        %v2781 = vpop.f32.mrb[0].mxu0
        %2782 = vmatprep.mubr.f32.mxu0 0.0
        %2783 = vmatmul.mubr.f32.gmra.mrb[0].mxu0 %v2375
        %v2784 = vpop.f32.mrb[0].mxu0
        %v2785 = vadd.f32 %v2558, %v2784
        %v2786 = vpop.f32.mrb[0].mxu0
        %2787 = vmatprep.mubr.f32.mxu0 0.0
        %2788 = vmatmul.mubr.f32.gmra.mrb[0].mxu0 %v2377
        %v2789 = vpop.f32.mrb[0].mxu0
        %v2790 = vadd.f32 %v2563, %v2789
        %v2791 = vpop.f32.mrb[0].mxu0
        %2792 = vmatprep.mubr.f32.mxu0 0.0
        %2793 = vmatmul.mubr.f32.gmra.mrb[0].mxu0 %v2379
        %v2794 = vpop.f32.mrb[0].mxu0
        %v2795 = vadd.f32 %v2568, %v2794
        %v2796 = vpop.f32.mrb[0].mxu0
        %2797 = vmatprep.mubr.f32.mxu0 0.0
        %2798 = vmatmul.mubr.f32.gmra.mrb[0].mxu0 %v2381
        %v2799 = vpop.f32.mrb[0].mxu0
        %v2800 = vadd.f32 %v2573, %v2799
        %v2801 = vpop.f32.mrb[0].mxu0
        %2802 = vmatprep.mubr.f32.mxu0 0.0
        %2803 = vmatmul.mubr.f32.gmra.mrb[0].mxu0 %v2383
        %v2804 = vpop.f32.mrb[0].mxu0
        %v2805 = vadd.f32 %v2578, %v2804
        %v2806 = vpop.f32.mrb[0].mxu0
        %2807 = vmatprep.mubr.f32.mxu0 0.0
        %2808 = vmatmul.mubr.f32.gmra.mrb[0].mxu0 %v2385
        %v2809 = vpop.f32.mrb[0].mxu0
        %v2810 = vadd.f32 %v2583, %v2809
        %v2811 = vpop.f32.mrb[0].mxu0
        %2812 = vmatprep.mubr.f32.mxu0 0.0
        %2813 = vmatmul.mubr.f32.gmra.mrb[0].mxu0 %v2387
        %v2814 = vpop.f32.mrb[0].mxu0
        %v2815 = vadd.f32 %v2588, %v2814
        %v2816 = vpop.f32.mrb[0].mxu0
        %2817 = vmatprep.mubr.f32.mxu0 0.0
        %2818 = vmatmul.mubr.f32.gmra.mrb[0].mxu0 %v2389
        %v2819 = vpop.f32.mrb[0].mxu0
        %v2820 = vadd.f32 %v2593, %v2819
        %v2821 = vpop.f32.mrb[0].mxu0
        %2822 = vmatprep.mubr.f32.mxu0 0.0
        %2823 = vmatmul.mubr.f32.gmra.mrb[0].mxu0 %v2391
        %v2824 = vpop.f32.mrb[0].mxu0
        %v2825 = vadd.f32 %v2598, %v2824
        %v2826 = vpop.f32.mrb[0].mxu0
        %2827 = vmatprep.mubr.f32.mxu0 0.0
        %2828 = vmatmul.mubr.f32.gmra.mrb[0].mxu0 %v2393
        %v2829 = vpop.f32.mrb[0].mxu0
        %v2830 = vadd.f32 %v2603, %v2829
        %v2831 = vpop.f32.mrb[0].mxu0
        %2832 = vmatprep.mubr.f32.mxu0 0.0
        %2833 = vmatmul.mubr.f32.gmra.mrb[0].mxu0 %v2395
        %v2834 = vpop.f32.mrb[0].mxu0
        %v2835 = vadd.f32 %v2608, %v2834
        %v2836 = vpop.f32.mrb[0].mxu0
        %2837 = vmatprep.mubr.f32.mxu0 0.0
        %2838 = vmatmul.mubr.f32.gmra.mrb[0].mxu0 %v2397
        %v2839 = vpop.f32.mrb[0].mxu0
        %v2840 = vadd.f32 %v2613, %v2839
        %v2841 = vpop.f32.mrb[0].mxu0
        %2842 = vmatprep.mubr.f32.mxu0 0.0
        %2843 = vmatmul.mubr.f32.gmra.mrb[0].mxu0 %v2399
        %v2844 = vpop.f32.mrb[0].mxu0
        %v2845 = vadd.f32 %v2618, %v2844
        %v2846 = vpop.f32.mrb[0].mxu0
        %2847 = vmatprep.mubr.f32.mxu0 0.0
        %2848 = vmatmul.mubr.f32.gmra.mrb[0].mxu0 %v2401
        %v2849 = vpop.f32.mrb[0].mxu0
        %v2850 = vadd.f32 %v2623, %v2849
        %v2851 = vpop.f32.mrb[0].mxu0
        %2852 = vmatprep.mubr.f32.mxu0 0.0
        %2853 = vmatmul.mubr.f32.gmra.mrb[0].mxu0 %v2403
        %v2854 = vpop.f32.mrb[0].mxu0
        %v2855 = vadd.f32 %v2628, %v2854
        %v2856 = vpop.f32.mrb[0].mxu0
        %2857 = vmatprep.mubr.f32.mxu0 0.0
        %2858 = vmatmul.mubr.f32.gmra.mrb[0].mxu0 %v2405
        %v2859 = vpop.f32.mrb[0].mxu0
        %v2860 = vadd.f32 %v2633, %v2859
        %v2861 = vpop.f32.mrb[0].mxu0
        %2862 = vdwg.mxu0
        %s2863 = scalar_lea.vmem [#allocation5], 112
        %v2864 = vld [vmem:[%s2863] sm:$0xff]
        %v2865 = vld [vmem:[%s2863 + $0x8] sm:$0xff]
        %2866 = vmatprep.subr.mxu0 0.0
        %2867 = vmatpush1.msra.mxu0 %v2864
        %2868 = vmatprep.subr.mxu0 0.0
        %2869 = vmatpush1.msra.mxu0 %v2865
        %2870 = vmatprep.subr.mxu0 0.0
        %2871 = vmatpush1.msra.mxu0 0.0
        %2872 = vmatprep.subr.mxu0 0.0
        %2873 = vmatpush1.msra.mxu0 0.0
        %2874 = vmatprep.subr.mxu0 0.0
        %2875 = vmatpush1.msra.mxu0 0.0
        %2876 = vmatprep.subr.mxu0 0.0
        %2877 = vmatpush1.msra.mxu0 0.0
        %2878 = vmatprep.subr.mxu0 0.0
        %2879 = vmatpush1.msra.mxu0 0.0
        %2880 = vmatprep.subr.mxu0 0.0
        %2881 = vmatpush1.msra.mxu0 0.0
        %2882 = vmatprep.subr.mxu0 0.0
        %2883 = vmatpush1.msra.mxu0 0.0
        %2884 = vmatprep.subr.mxu0 0.0
        %2885 = vmatpush1.msra.mxu0 0.0
        %2886 = vmatprep.subr.mxu0 0.0
        %2887 = vmatpush1.msra.mxu0 0.0
        %2888 = vmatprep.subr.mxu0 0.0
        %2889 = vmatpush1.msra.mxu0 0.0
        %2890 = vmatprep.subr.mxu0 0.0
        %2891 = vmatpush1.msra.mxu0 0.0
        %2892 = vmatprep.subr.mxu0 0.0
        %2893 = vmatpush1.msra.mxu0 0.0
        %2894 = vmatprep.subr.mxu0 0.0
        %2895 = vmatpush1.msra.mxu0 0.0
        %2896 = vmatprep.subr.mxu0 0.0
        %2897 = vmatpush1.msra.mxu0 0.0
        %2898 = vmatprep.subr.mxu0 0.0
        %2899 = vmatpush1.msra.mxu0 0.0
        %2900 = vmatprep.subr.mxu0 0.0
        %2901 = vmatpush1.msra.mxu0 0.0
        %2902 = vmatprep.subr.mxu0 0.0
        %2903 = vmatpush1.msra.mxu0 0.0
        %2904 = vmatprep.subr.mxu0 0.0
        %2905 = vmatpush1.msra.mxu0 0.0
        %2906 = vmatprep.subr.mxu0 0.0
        %2907 = vmatpush1.msra.mxu0 0.0
        %2908 = vmatprep.subr.mxu0 0.0
        %2909 = vmatpush1.msra.mxu0 0.0
        %2910 = vmatprep.subr.mxu0 0.0
        %2911 = vmatpush1.msra.mxu0 0.0
        %2912 = vmatprep.subr.mxu0 0.0
        %2913 = vmatpush1.msra.mxu0 0.0
        %2914 = vmatprep.subr.mxu0 0.0
        %2915 = vmatpush1.msra.mxu0 0.0
        %2916 = vmatprep.subr.mxu0 0.0
        %2917 = vmatpush1.msra.mxu0 0.0
        %2918 = vmatprep.subr.mxu0 0.0
        %2919 = vmatpush1.msra.mxu0 0.0
        %2920 = vmatprep.subr.mxu0 0.0
        %2921 = vmatpush1.msra.mxu0 0.0
        %2922 = vmatprep.subr.mxu0 0.0
        %2923 = vmatpush1.msra.mxu0 0.0
        %2924 = vmatprep.subr.mxu0 0.0
        %2925 = vmatpush1.msra.mxu0 0.0
        %2926 = vmatprep.subr.mxu0 0.0
        %2927 = vmatpush1.msra.mxu0 0.0
        %2928 = vmatprep.subr.mxu0 0.0
        %2929 = vmatpush1.msra.mxu0 0.0
        %2930 = vmatprep.mubr.f32.mxu0 0.0
        %2931 = vmatmul.mubr.f32.gmra.mrb[0].mxu0 %v2351
        %v2932 = vpop.f32.mrb[0].mxu0
        %v2933 = vadd.f32 0.0, %v2932
        %v2934 = vpop.f32.mrb[0].mxu0
        %2935 = vmatprep.mubr.f32.mxu0 0.0
        %2936 = vmatmul.mubr.f32.gmra.mrb[0].mxu0 %v2353
        %v2937 = vpop.f32.mrb[0].mxu0
        %v2938 = vadd.f32 0.0, %v2937
        %v2939 = vpop.f32.mrb[0].mxu0
        %2940 = vmatprep.mubr.f32.mxu0 0.0
        %2941 = vmatmul.mubr.f32.gmra.mrb[0].mxu0 %v2355
        %v2942 = vpop.f32.mrb[0].mxu0
        %v2943 = vadd.f32 0.0, %v2942
        %v2944 = vpop.f32.mrb[0].mxu0
        %2945 = vmatprep.mubr.f32.mxu0 0.0
        %2946 = vmatmul.mubr.f32.gmra.mrb[0].mxu0 %v2357
        %v2947 = vpop.f32.mrb[0].mxu0
        %v2948 = vadd.f32 0.0, %v2947
        %v2949 = vpop.f32.mrb[0].mxu0
        %2950 = vmatprep.mubr.f32.mxu0 0.0
        %2951 = vmatmul.mubr.f32.gmra.mrb[0].mxu0 %v2359
        %v2952 = vpop.f32.mrb[0].mxu0
        %v2953 = vadd.f32 0.0, %v2952
        %v2954 = vpop.f32.mrb[0].mxu0
        %2955 = vmatprep.mubr.f32.mxu0 0.0
        %2956 = vmatmul.mubr.f32.gmra.mrb[0].mxu0 %v2361
        %v2957 = vpop.f32.mrb[0].mxu0
        %v2958 = vadd.f32 0.0, %v2957
        %v2959 = vpop.f32.mrb[0].mxu0
        %2960 = vmatprep.mubr.f32.mxu0 0.0
        %2961 = vmatmul.mubr.f32.gmra.mrb[0].mxu0 %v2363
        %v2962 = vpop.f32.mrb[0].mxu0
        %v2963 = vadd.f32 0.0, %v2962
        %v2964 = vpop.f32.mrb[0].mxu0
        %2965 = vmatprep.mubr.f32.mxu0 0.0
        %2966 = vmatmul.mubr.f32.gmra.mrb[0].mxu0 %v2365
        %v2967 = vpop.f32.mrb[0].mxu0
        %v2968 = vadd.f32 0.0, %v2967
        %v2969 = vpop.f32.mrb[0].mxu0
        %2970 = vmatprep.mubr.f32.mxu0 0.0
        %2971 = vmatmul.mubr.f32.gmra.mrb[0].mxu0 %v2367
        %v2972 = vpop.f32.mrb[0].mxu0
        %v2973 = vadd.f32 0.0, %v2972
        %v2974 = vpop.f32.mrb[0].mxu0
        %2975 = vmatprep.mubr.f32.mxu0 0.0
        %2976 = vmatmul.mubr.f32.gmra.mrb[0].mxu0 %v2369
        %v2977 = vpop.f32.mrb[0].mxu0
        %v2978 = vadd.f32 0.0, %v2977
        %v2979 = vpop.f32.mrb[0].mxu0
        %2980 = vmatprep.mubr.f32.mxu0 0.0
        %2981 = vmatmul.mubr.f32.gmra.mrb[0].mxu0 %v2371
        %v2982 = vpop.f32.mrb[0].mxu0
        %v2983 = vadd.f32 0.0, %v2982
        %v2984 = vpop.f32.mrb[0].mxu0
        %2985 = vmatprep.mubr.f32.mxu0 0.0
        %2986 = vmatmul.mubr.f32.gmra.mrb[0].mxu0 %v2373
        %v2987 = vpop.f32.mrb[0].mxu0
        %v2988 = vadd.f32 0.0, %v2987
        %v2989 = vpop.f32.mrb[0].mxu0
        %2990 = vmatprep.mubr.f32.mxu0 0.0
        %2991 = vmatmul.mubr.f32.gmra.mrb[0].mxu0 %v2375
        %v2992 = vpop.f32.mrb[0].mxu0
        %v2993 = vadd.f32 0.0, %v2992
        %v2994 = vpop.f32.mrb[0].mxu0
        %2995 = vmatprep.mubr.f32.mxu0 0.0
        %2996 = vmatmul.mubr.f32.gmra.mrb[0].mxu0 %v2377
        %v2997 = vpop.f32.mrb[0].mxu0
        %v2998 = vadd.f32 0.0, %v2997
        %v2999 = vpop.f32.mrb[0].mxu0
        %3000 = vmatprep.mubr.f32.mxu0 0.0
        %3001 = vmatmul.mubr.f32.gmra.mrb[0].mxu0 %v2379
        %v3002 = vpop.f32.mrb[0].mxu0
        %v3003 = vadd.f32 0.0, %v3002
        %v3004 = vpop.f32.mrb[0].mxu0
        %3005 = vmatprep.mubr.f32.mxu0 0.0
        %3006 = vmatmul.mubr.f32.gmra.mrb[0].mxu0 %v2381
        %v3007 = vpop.f32.mrb[0].mxu0
        %v3008 = vadd.f32 0.0, %v3007
        %v3009 = vpop.f32.mrb[0].mxu0
        %3010 = vmatprep.mubr.f32.mxu0 0.0
        %3011 = vmatmul.mubr.f32.gmra.mrb[0].mxu0 %v2383
        %v3012 = vpop.f32.mrb[0].mxu0
        %v3013 = vadd.f32 0.0, %v3012
        %v3014 = vpop.f32.mrb[0].mxu0
        %3015 = vmatprep.mubr.f32.mxu0 0.0
        %3016 = vmatmul.mubr.f32.gmra.mrb[0].mxu0 %v2385
        %v3017 = vpop.f32.mrb[0].mxu0
        %v3018 = vadd.f32 0.0, %v3017
        %v3019 = vpop.f32.mrb[0].mxu0
        %3020 = vmatprep.mubr.f32.mxu0 0.0
        %3021 = vmatmul.mubr.f32.gmra.mrb[0].mxu0 %v2387
        %v3022 = vpop.f32.mrb[0].mxu0
        %v3023 = vadd.f32 0.0, %v3022
        %v3024 = vpop.f32.mrb[0].mxu0
        %3025 = vmatprep.mubr.f32.mxu0 0.0
        %3026 = vmatmul.mubr.f32.gmra.mrb[0].mxu0 %v2389
        %v3027 = vpop.f32.mrb[0].mxu0
        %v3028 = vadd.f32 0.0, %v3027
        %v3029 = vpop.f32.mrb[0].mxu0
        %3030 = vmatprep.mubr.f32.mxu0 0.0
        %3031 = vmatmul.mubr.f32.gmra.mrb[0].mxu0 %v2391
        %v3032 = vpop.f32.mrb[0].mxu0
        %v3033 = vadd.f32 0.0, %v3032
        %v3034 = vpop.f32.mrb[0].mxu0
        %3035 = vmatprep.mubr.f32.mxu0 0.0
        %3036 = vmatmul.mubr.f32.gmra.mrb[0].mxu0 %v2393
        %v3037 = vpop.f32.mrb[0].mxu0
        %v3038 = vadd.f32 0.0, %v3037
        %v3039 = vpop.f32.mrb[0].mxu0
        %3040 = vmatprep.mubr.f32.mxu0 0.0
        %3041 = vmatmul.mubr.f32.gmra.mrb[0].mxu0 %v2395
        %v3042 = vpop.f32.mrb[0].mxu0
        %v3043 = vadd.f32 0.0, %v3042
        %v3044 = vpop.f32.mrb[0].mxu0
        %3045 = vmatprep.mubr.f32.mxu0 0.0
        %3046 = vmatmul.mubr.f32.gmra.mrb[0].mxu0 %v2397
        %v3047 = vpop.f32.mrb[0].mxu0
        %v3048 = vadd.f32 0.0, %v3047
        %v3049 = vpop.f32.mrb[0].mxu0
        %3050 = vmatprep.mubr.f32.mxu0 0.0
        %3051 = vmatmul.mubr.f32.gmra.mrb[0].mxu0 %v2399
        %v3052 = vpop.f32.mrb[0].mxu0
        %v3053 = vadd.f32 0.0, %v3052
        %v3054 = vpop.f32.mrb[0].mxu0
        %3055 = vmatprep.mubr.f32.mxu0 0.0
        %3056 = vmatmul.mubr.f32.gmra.mrb[0].mxu0 %v2401
        %v3057 = vpop.f32.mrb[0].mxu0
        %v3058 = vadd.f32 0.0, %v3057
        %v3059 = vpop.f32.mrb[0].mxu0
        %3060 = vmatprep.mubr.f32.mxu0 0.0
        %3061 = vmatmul.mubr.f32.gmra.mrb[0].mxu0 %v2403
        %v3062 = vpop.f32.mrb[0].mxu0
        %v3063 = vadd.f32 0.0, %v3062
        %v3064 = vpop.f32.mrb[0].mxu0
        %3065 = vmatprep.mubr.f32.mxu0 0.0
        %3066 = vmatmul.mubr.f32.gmra.mrb[0].mxu0 %v2405
        %v3067 = vpop.f32.mrb[0].mxu0
        %v3068 = vadd.f32 0.0, %v3067
        %v3069 = vpop.f32.mrb[0].mxu0
        %3070 = vmatprep.mubr.f32.mxu0 0.0
        %3071 = vmatmul.mubr.f32.gmra.mrb[0].mxu0 %v2407
        %v3072 = vpop.f32.mrb[0].mxu0
        %v3073 = vadd.f32 0.0, %v3072
        %v3074 = vpop.f32.mrb[0].mxu0
        %3075 = vmatprep.mubr.f32.mxu0 0.0
        %3076 = vmatmul.mubr.f32.gmra.mrb[0].mxu0 %v2409
        %v3077 = vpop.f32.mrb[0].mxu0
        %v3078 = vadd.f32 0.0, %v3077
        %v3079 = vpop.f32.mrb[0].mxu0
        %3080 = vmatprep.mubr.f32.mxu0 0.0
        %3081 = vmatmul.mubr.f32.gmra.mrb[0].mxu0 %v2636
        %v3082 = vpop.f32.mrb[0].mxu0
        %v3083 = vadd.f32 0.0, %v3082
        %v3084 = vpop.f32.mrb[0].mxu0
        %3085 = vmatprep.mubr.f32.mxu0 0.0
        %3086 = vmatmul.mubr.f32.gmra.mrb[0].mxu0 %v2636
        %v3087 = vpop.f32.mrb[0].mxu0
        %v3088 = vadd.f32 0.0, %v3087
        %v3089 = vpop.f32.mrb[0].mxu0
        %3090 = vdwg.mxu0
        %v3091 = vadd.f32 %v2705, %v2933
        %v3092 = vadd.f32 %v2710, %v2938
        %v3093 = vadd.f32 %v2715, %v2943
        %v3094 = vadd.f32 %v2720, %v2948
        %v3095 = vadd.f32 %v2725, %v2953
        %v3096 = vadd.f32 %v2730, %v2958
        %v3097 = vadd.f32 %v2735, %v2963
        %v3098 = vadd.f32 %v2740, %v2968
        %v3099 = vadd.f32 %v2745, %v2973
        %v3100 = vadd.f32 %v2750, %v2978
        %v3101 = vadd.f32 %v2755, %v2983
        %v3102 = vadd.f32 %v2760, %v2988
        %v3103 = vadd.f32 %v2765, %v2993
        %v3104 = vadd.f32 %v2770, %v2998
        %v3105 = vadd.f32 %v2775, %v3003
        %v3106 = vadd.f32 %v2780, %v3008
        %v3107 = vadd.f32 %v2785, %v3013
        %v3108 = vadd.f32 %v2790, %v3018
        %v3109 = vadd.f32 %v2795, %v3023
        %v3110 = vadd.f32 %v2800, %v3028
        %v3111 = vadd.f32 %v2805, %v3033
        %v3112 = vadd.f32 %v2810, %v3038
        %v3113 = vadd.f32 %v2815, %v3043
        %v3114 = vadd.f32 %v2820, %v3048
        %v3115 = vadd.f32 %v2825, %v3053
        %v3116 = vadd.f32 %v2830, %v3058
        %v3117 = vadd.f32 %v2835, %v3063
        %v3118 = vadd.f32 %v2840, %v3068
        %v3119 = vadd.f32 %v2845, %v3073
        %v3120 = vadd.f32 %v2850, %v3078
        %v3121 = vadd.f32 %v2855, %v3083
        %v3122 = vadd.f32 %v2860, %v3088
        %v3123 = vadd.f32 %v2309, %v3091
        %v3124 = vadd.f32 %v2310, %v3092
        %v3125 = vadd.f32 %v2311, %v3093
        %v3126 = vadd.f32 %v2312, %v3094
        %v3127 = vadd.f32 %v2313, %v3095
        %v3128 = vadd.f32 %v2314, %v3096
        %v3129 = vadd.f32 %v2315, %v3097
        %v3130 = vadd.f32 %v2316, %v3098
        %v3131 = vadd.f32 %v2317, %v3099
        %v3132 = vadd.f32 %v2318, %v3100
        %v3133 = vadd.f32 %v2319, %v3101
        %v3134 = vadd.f32 %v2320, %v3102
        %v3135 = vadd.f32 %v2321, %v3103
        %v3136 = vadd.f32 %v2322, %v3104
        %v3137 = vadd.f32 %v2323, %v3105
        %v3138 = vadd.f32 %v2324, %v3106
        %v3139 = vadd.f32 %v2325, %v3107
        %v3140 = vadd.f32 %v2326, %v3108
        %v3141 = vadd.f32 %v2327, %v3109
        %v3142 = vadd.f32 %v2328, %v3110
        %v3143 = vadd.f32 %v2329, %v3111
        %v3144 = vadd.f32 %v2330, %v3112
        %v3145 = vadd.f32 %v2331, %v3113
        %v3146 = vadd.f32 %v2332, %v3114
        %v3147 = vadd.f32 %v2333, %v3115
        %v3148 = vadd.f32 %v2334, %v3116
        %v3149 = vadd.f32 %v2335, %v3117
        %v3150 = vadd.f32 %v2336, %v3118
        %v3151 = vadd.f32 %v2337, %v3119
        %v3152 = vadd.f32 %v2338, %v3120
        %v3153 = vadd.f32 %v2339, %v3121
        %v3154 = vadd.f32 %v2340, %v3122
        %s3155 = scalar_lea.vmem [#allocation5], 32
        %v3156 = vld [vmem:[%s3155] sm:$0xff]
        %v3157 = vld [vmem:[%s3155 + $0x8] sm:$0xff]
        %s3158 = scalar_lea.vmem [#allocation5], 80
        %v3159 = vld [vmem:[%s3158] sm:$0xff]
        %v3160 = vld [vmem:[%s3158 + $0x8] sm:$0xff]
        %vm3161 = vcmask 1046528
        %v3162 = vrot.slane %v751, 1
        %v3163 = vrot.slane %v752, 1
        %v3164 = vsel %vm3161, %v3162, %v3163
        %v3165 = vrot.slane %v753, 1
        %v3166 = vsel %vm3161, %v3163, %v3165
        %v3167 = vrot.slane %v754, 1
        %v3168 = vsel %vm3161, %v3165, %v3167
        %v3169 = vrot.slane %v755, 1
        %v3170 = vsel %vm3161, %v3167, %v3169
        %v3171 = vrot.slane %v756, 1
        %v3172 = vsel %vm3161, %v3169, %v3171
        %v3173 = vrot.slane %v757, 1
        %v3174 = vsel %vm3161, %v3171, %v3173
        %v3175 = vrot.slane %v758, 1
        %v3176 = vsel %vm3161, %v3173, %v3175
        %v3177 = vrot.slane %v759, 1
        %v3178 = vsel %vm3161, %v3175, %v3177
        %v3179 = vrot.slane %v760, 1
        %v3180 = vsel %vm3161, %v3177, %v3179
        %v3181 = vrot.slane %v761, 1
        %v3182 = vsel %vm3161, %v3179, %v3181
        %v3183 = vrot.slane %v762, 1
        %v3184 = vsel %vm3161, %v3181, %v3183
        %v3185 = vrot.slane %v763, 1
        %v3186 = vsel %vm3161, %v3183, %v3185
        %v3187 = vrot.slane %v764, 1
        %v3188 = vsel %vm3161, %v3185, %v3187
        %v3189 = vrot.slane %v765, 1
        %v3190 = vsel %vm3161, %v3187, %v3189
        %v3191 = vrot.slane %v766, 1
        %v3192 = vsel %vm3161, %v3189, %v3191
        %v3193 = vrot.slane %v767, 1
        %v3194 = vsel %vm3161, %v3191, %v3193
        %v3195 = vrot.slane %v768, 1
        %v3196 = vsel %vm3161, %v3193, %v3195
        %v3197 = vrot.slane %v769, 1
        %v3198 = vsel %vm3161, %v3195, %v3197
        %v3199 = vrot.slane %v770, 1
        %v3200 = vsel %vm3161, %v3197, %v3199
        %v3201 = vrot.slane %v771, 1
        %v3202 = vsel %vm3161, %v3199, %v3201
        %v3203 = vrot.slane %v772, 1
        %v3204 = vsel %vm3161, %v3201, %v3203
        %v3205 = vrot.slane %v773, 1
        %v3206 = vsel %vm3161, %v3203, %v3205
        %v3207 = vrot.slane %v774, 1
        %v3208 = vsel %vm3161, %v3205, %v3207
        %v3209 = vrot.slane %v775, 1
        %v3210 = vsel %vm3161, %v3207, %v3209
        %v3211 = vrot.slane %v776, 1
        %v3212 = vsel %vm3161, %v3209, %v3211
        %v3213 = vrot.slane %v777, 1
        %v3214 = vsel %vm3161, %v3211, %v3213
        %v3215 = vrot.slane %v778, 1
        %v3216 = vsel %vm3161, %v3213, %v3215
        %v3217 = vrot.slane %v779, 1
        %v3218 = vsel %vm3161, %v3215, %v3217
        %v3219 = vrot.slane %v780, 1
        %v3220 = vsel %vm3161, %v3217, %v3219
        %v3221 = vrot.slane %v781, 1
        %v3222 = vsel %vm3161, %v3219, %v3221
        %v3223 = vrot.slane %v782, 1
        %v3224 = vsel %vm3161, %v3221, %v3223
        %v3225 = vrot.slane 0.0, 1
        %v3226 = vsel %vm3161, %v3223, %v3225
        %v3227 = vsel %vm1496, %v3164, 0
        %v3229 = vsel %vm1496, %v3166, 0
        %v3231 = vsel %vm1496, %v3168, 0
        %v3233 = vsel %vm1496, %v3170, 0
        %v3235 = vsel %vm1496, %v3172, 0
        %v3237 = vsel %vm1496, %v3174, 0
        %v3239 = vsel %vm1496, %v3176, 0
        %v3241 = vsel %vm1496, %v3178, 0
        %v3243 = vsel %vm1496, %v3180, 0
        %v3245 = vsel %vm1496, %v3182, 0
        %v3247 = vsel %vm1496, %v3184, 0
        %v3249 = vsel %vm1496, %v3186, 0
        %v3251 = vsel %vm1496, %v3188, 0
        %v3253 = vsel %vm1496, %v3190, 0
        %v3255 = vsel %vm1496, %v3192, 0
        %v3257 = vsel %vm1496, %v3194, 0
        %v3259 = vsel %vm1496, %v3196, 0
        %v3261 = vsel %vm1496, %v3198, 0
        %v3263 = vsel %vm1496, %v3200, 0
        %v3265 = vsel %vm1496, %v3202, 0
        %v3267 = vsel %vm1496, %v3204, 0
        %v3269 = vsel %vm1496, %v3206, 0
        %v3271 = vsel %vm1496, %v3208, 0
        %v3273 = vsel %vm1496, %v3210, 0
        %v3275 = vsel %vm1496, %v3212, 0
        %v3277 = vsel %vm1496, %v3214, 0
        %v3279 = vsel %vm1496, %v3216, 0
        %v3281 = vsel %vm1496, %v3218, 0
        %v3283 = vsel %vm1496, %v3220, 0
        %v3285 = vsel %vm1496, %v3222, 0
        %v3287 = vsel %vm1496, %v3224, 0
        %v3289 = vsel %vm1496, %v3226, 0
        %3291 = vmatprep.subr.mxu0 0.0
        %3292 = vmatpush1.msra.mxu0 %v3159
        %3293 = vmatprep.subr.mxu0 0.0
        %3294 = vmatpush1.msra.mxu0 %v3160
        %3295 = vmatprep.subr.mxu0 0.0
        %3296 = vmatpush1.msra.mxu0 0.0
        %3297 = vmatprep.subr.mxu0 0.0
        %3298 = vmatpush1.msra.mxu0 0.0
        %3299 = vmatprep.subr.mxu0 0.0
        %3300 = vmatpush1.msra.mxu0 0.0
        %3301 = vmatprep.subr.mxu0 0.0
        %3302 = vmatpush1.msra.mxu0 0.0
        %3303 = vmatprep.subr.mxu0 0.0
        %3304 = vmatpush1.msra.mxu0 0.0
        %3305 = vmatprep.subr.mxu0 0.0
        %3306 = vmatpush1.msra.mxu0 0.0
        %3307 = vmatprep.subr.mxu0 0.0
        %3308 = vmatpush1.msra.mxu0 0.0
        %3309 = vmatprep.subr.mxu0 0.0
        %3310 = vmatpush1.msra.mxu0 0.0
        %3311 = vmatprep.subr.mxu0 0.0
        %3312 = vmatpush1.msra.mxu0 0.0
        %3313 = vmatprep.subr.mxu0 0.0
        %3314 = vmatpush1.msra.mxu0 0.0
        %3315 = vmatprep.subr.mxu0 0.0
        %3316 = vmatpush1.msra.mxu0 0.0
        %3317 = vmatprep.subr.mxu0 0.0
        %3318 = vmatpush1.msra.mxu0 0.0
        %3319 = vmatprep.subr.mxu0 0.0
        %3320 = vmatpush1.msra.mxu0 0.0
        %3321 = vmatprep.subr.mxu0 0.0
        %3322 = vmatpush1.msra.mxu0 0.0
        %3323 = vmatprep.subr.mxu0 0.0
        %3324 = vmatpush1.msra.mxu0 0.0
        %3325 = vmatprep.subr.mxu0 0.0
        %3326 = vmatpush1.msra.mxu0 0.0
        %3327 = vmatprep.subr.mxu0 0.0
        %3328 = vmatpush1.msra.mxu0 0.0
        %3329 = vmatprep.subr.mxu0 0.0
        %3330 = vmatpush1.msra.mxu0 0.0
        %3331 = vmatprep.subr.mxu0 0.0
        %3332 = vmatpush1.msra.mxu0 0.0
        %3333 = vmatprep.subr.mxu0 0.0
        %3334 = vmatpush1.msra.mxu0 0.0
        %3335 = vmatprep.subr.mxu0 0.0
        %3336 = vmatpush1.msra.mxu0 0.0
        %3337 = vmatprep.subr.mxu0 0.0
        %3338 = vmatpush1.msra.mxu0 0.0
        %3339 = vmatprep.subr.mxu0 0.0
        %3340 = vmatpush1.msra.mxu0 0.0
        %3341 = vmatprep.subr.mxu0 0.0
        %3342 = vmatpush1.msra.mxu0 0.0
        %3343 = vmatprep.subr.mxu0 0.0
        %3344 = vmatpush1.msra.mxu0 0.0
        %3345 = vmatprep.subr.mxu0 0.0
        %3346 = vmatpush1.msra.mxu0 0.0
        %3347 = vmatprep.subr.mxu0 0.0
        %3348 = vmatpush1.msra.mxu0 0.0
        %3349 = vmatprep.subr.mxu0 0.0
        %3350 = vmatpush1.msra.mxu0 0.0
        %3351 = vmatprep.subr.mxu0 0.0
        %3352 = vmatpush1.msra.mxu0 0.0
        %3353 = vmatprep.subr.mxu0 0.0
        %3354 = vmatpush1.msra.mxu0 0.0
        %3355 = vmatprep.mubr.f32.mxu0 0.0
        %3356 = vmatmul.mubr.f32.gmra.mrb[0].mxu0 %v3227
        %v3357 = vpop.f32.mrb[0].mxu0
        %v3358 = vadd.f32 0.0, %v3357
        %v3359 = vpop.f32.mrb[0].mxu0
        %3360 = vmatprep.mubr.f32.mxu0 0.0
        %3361 = vmatmul.mubr.f32.gmra.mrb[0].mxu0 %v3229
        %v3362 = vpop.f32.mrb[0].mxu0
        %v3363 = vadd.f32 0.0, %v3362
        %v3364 = vpop.f32.mrb[0].mxu0
        %3365 = vmatprep.mubr.f32.mxu0 0.0
        %3366 = vmatmul.mubr.f32.gmra.mrb[0].mxu0 %v3231
        %v3367 = vpop.f32.mrb[0].mxu0
        %v3368 = vadd.f32 0.0, %v3367
        %v3369 = vpop.f32.mrb[0].mxu0
        %3370 = vmatprep.mubr.f32.mxu0 0.0
        %3371 = vmatmul.mubr.f32.gmra.mrb[0].mxu0 %v3233
        %v3372 = vpop.f32.mrb[0].mxu0
        %v3373 = vadd.f32 0.0, %v3372
        %v3374 = vpop.f32.mrb[0].mxu0
        %3375 = vmatprep.mubr.f32.mxu0 0.0
        %3376 = vmatmul.mubr.f32.gmra.mrb[0].mxu0 %v3235
        %v3377 = vpop.f32.mrb[0].mxu0
        %v3378 = vadd.f32 0.0, %v3377
        %v3379 = vpop.f32.mrb[0].mxu0
        %3380 = vmatprep.mubr.f32.mxu0 0.0
        %3381 = vmatmul.mubr.f32.gmra.mrb[0].mxu0 %v3237
        %v3382 = vpop.f32.mrb[0].mxu0
        %v3383 = vadd.f32 0.0, %v3382
        %v3384 = vpop.f32.mrb[0].mxu0
        %3385 = vmatprep.mubr.f32.mxu0 0.0
        %3386 = vmatmul.mubr.f32.gmra.mrb[0].mxu0 %v3239
        %v3387 = vpop.f32.mrb[0].mxu0
        %v3388 = vadd.f32 0.0, %v3387
        %v3389 = vpop.f32.mrb[0].mxu0
        %3390 = vmatprep.mubr.f32.mxu0 0.0
        %3391 = vmatmul.mubr.f32.gmra.mrb[0].mxu0 %v3241
        %v3392 = vpop.f32.mrb[0].mxu0
        %v3393 = vadd.f32 0.0, %v3392
        %v3394 = vpop.f32.mrb[0].mxu0
        %3395 = vmatprep.mubr.f32.mxu0 0.0
        %3396 = vmatmul.mubr.f32.gmra.mrb[0].mxu0 %v3243
        %v3397 = vpop.f32.mrb[0].mxu0
        %v3398 = vadd.f32 0.0, %v3397
        %v3399 = vpop.f32.mrb[0].mxu0
        %3400 = vmatprep.mubr.f32.mxu0 0.0
        %3401 = vmatmul.mubr.f32.gmra.mrb[0].mxu0 %v3245
        %v3402 = vpop.f32.mrb[0].mxu0
        %v3403 = vadd.f32 0.0, %v3402
        %v3404 = vpop.f32.mrb[0].mxu0
        %3405 = vmatprep.mubr.f32.mxu0 0.0
        %3406 = vmatmul.mubr.f32.gmra.mrb[0].mxu0 %v3247
        %v3407 = vpop.f32.mrb[0].mxu0
        %v3408 = vadd.f32 0.0, %v3407
        %v3409 = vpop.f32.mrb[0].mxu0
        %3410 = vmatprep.mubr.f32.mxu0 0.0
        %3411 = vmatmul.mubr.f32.gmra.mrb[0].mxu0 %v3249
        %v3412 = vpop.f32.mrb[0].mxu0
        %v3413 = vadd.f32 0.0, %v3412
        %v3414 = vpop.f32.mrb[0].mxu0
        %3415 = vmatprep.mubr.f32.mxu0 0.0
        %3416 = vmatmul.mubr.f32.gmra.mrb[0].mxu0 %v3251
        %v3417 = vpop.f32.mrb[0].mxu0
        %v3418 = vadd.f32 0.0, %v3417
        %v3419 = vpop.f32.mrb[0].mxu0
        %3420 = vmatprep.mubr.f32.mxu0 0.0
        %3421 = vmatmul.mubr.f32.gmra.mrb[0].mxu0 %v3253
        %v3422 = vpop.f32.mrb[0].mxu0
        %v3423 = vadd.f32 0.0, %v3422
        %v3424 = vpop.f32.mrb[0].mxu0
        %3425 = vmatprep.mubr.f32.mxu0 0.0
        %3426 = vmatmul.mubr.f32.gmra.mrb[0].mxu0 %v3255
        %v3427 = vpop.f32.mrb[0].mxu0
        %v3428 = vadd.f32 0.0, %v3427
        %v3429 = vpop.f32.mrb[0].mxu0
        %3430 = vmatprep.mubr.f32.mxu0 0.0
        %3431 = vmatmul.mubr.f32.gmra.mrb[0].mxu0 %v3257
        %v3432 = vpop.f32.mrb[0].mxu0
        %v3433 = vadd.f32 0.0, %v3432
        %v3434 = vpop.f32.mrb[0].mxu0
        %3435 = vmatprep.mubr.f32.mxu0 0.0
        %3436 = vmatmul.mubr.f32.gmra.mrb[0].mxu0 %v3259
        %v3437 = vpop.f32.mrb[0].mxu0
        %v3438 = vadd.f32 0.0, %v3437
        %v3439 = vpop.f32.mrb[0].mxu0
        %3440 = vmatprep.mubr.f32.mxu0 0.0
        %3441 = vmatmul.mubr.f32.gmra.mrb[0].mxu0 %v3261
        %v3442 = vpop.f32.mrb[0].mxu0
        %v3443 = vadd.f32 0.0, %v3442
        %v3444 = vpop.f32.mrb[0].mxu0
        %3445 = vmatprep.mubr.f32.mxu0 0.0
        %3446 = vmatmul.mubr.f32.gmra.mrb[0].mxu0 %v3263
        %v3447 = vpop.f32.mrb[0].mxu0
        %v3448 = vadd.f32 0.0, %v3447
        %v3449 = vpop.f32.mrb[0].mxu0
        %3450 = vmatprep.mubr.f32.mxu0 0.0
        %3451 = vmatmul.mubr.f32.gmra.mrb[0].mxu0 %v3265
        %v3452 = vpop.f32.mrb[0].mxu0
        %v3453 = vadd.f32 0.0, %v3452
        %v3454 = vpop.f32.mrb[0].mxu0
        %3455 = vmatprep.mubr.f32.mxu0 0.0
        %3456 = vmatmul.mubr.f32.gmra.mrb[0].mxu0 %v3267
        %v3457 = vpop.f32.mrb[0].mxu0
        %v3458 = vadd.f32 0.0, %v3457
        %v3459 = vpop.f32.mrb[0].mxu0
        %3460 = vmatprep.mubr.f32.mxu0 0.0
        %3461 = vmatmul.mubr.f32.gmra.mrb[0].mxu0 %v3269
        %v3462 = vpop.f32.mrb[0].mxu0
        %v3463 = vadd.f32 0.0, %v3462
        %v3464 = vpop.f32.mrb[0].mxu0
        %3465 = vmatprep.mubr.f32.mxu0 0.0
        %3466 = vmatmul.mubr.f32.gmra.mrb[0].mxu0 %v3271
        %v3467 = vpop.f32.mrb[0].mxu0
        %v3468 = vadd.f32 0.0, %v3467
        %v3469 = vpop.f32.mrb[0].mxu0
        %3470 = vmatprep.mubr.f32.mxu0 0.0
        %3471 = vmatmul.mubr.f32.gmra.mrb[0].mxu0 %v3273
        %v3472 = vpop.f32.mrb[0].mxu0
        %v3473 = vadd.f32 0.0, %v3472
        %v3474 = vpop.f32.mrb[0].mxu0
        %3475 = vmatprep.mubr.f32.mxu0 0.0
        %3476 = vmatmul.mubr.f32.gmra.mrb[0].mxu0 %v3275
        %v3477 = vpop.f32.mrb[0].mxu0
        %v3478 = vadd.f32 0.0, %v3477
        %v3479 = vpop.f32.mrb[0].mxu0
        %3480 = vmatprep.mubr.f32.mxu0 0.0
        %3481 = vmatmul.mubr.f32.gmra.mrb[0].mxu0 %v3277
        %v3482 = vpop.f32.mrb[0].mxu0
        %v3483 = vadd.f32 0.0, %v3482
        %v3484 = vpop.f32.mrb[0].mxu0
        %3485 = vmatprep.mubr.f32.mxu0 0.0
        %3486 = vmatmul.mubr.f32.gmra.mrb[0].mxu0 %v3279
        %v3487 = vpop.f32.mrb[0].mxu0
        %v3488 = vadd.f32 0.0, %v3487
        %v3489 = vpop.f32.mrb[0].mxu0
        %3490 = vmatprep.mubr.f32.mxu0 0.0
        %3491 = vmatmul.mubr.f32.gmra.mrb[0].mxu0 %v3281
        %v3492 = vpop.f32.mrb[0].mxu0
        %v3493 = vadd.f32 0.0, %v3492
        %v3494 = vpop.f32.mrb[0].mxu0
        %3495 = vmatprep.mubr.f32.mxu0 0.0
        %3496 = vmatmul.mubr.f32.gmra.mrb[0].mxu0 %v3283
        %v3497 = vpop.f32.mrb[0].mxu0
        %v3498 = vadd.f32 0.0, %v3497
        %v3499 = vpop.f32.mrb[0].mxu0
        %3500 = vmatprep.mubr.f32.mxu0 0.0
        %3501 = vmatmul.mubr.f32.gmra.mrb[0].mxu0 %v3285
        %v3502 = vpop.f32.mrb[0].mxu0
        %v3503 = vadd.f32 0.0, %v3502
        %v3504 = vpop.f32.mrb[0].mxu0
        %3505 = vmatprep.mubr.f32.mxu0 0.0
        %3506 = vmatmul.mubr.f32.gmra.mrb[0].mxu0 %v3287
        %v3507 = vpop.f32.mrb[0].mxu0
        %v3508 = vadd.f32 0.0, %v3507
        %v3509 = vpop.f32.mrb[0].mxu0
        %3510 = vmatprep.mubr.f32.mxu0 0.0
        %3511 = vmatmul.mubr.f32.gmra.mrb[0].mxu0 %v3289
        %v3512 = vpop.f32.mrb[0].mxu0
        %v3513 = vadd.f32 0.0, %v3512
        %v3514 = vpop.f32.mrb[0].mxu0
        %3515 = vdwg.mxu0
        %v3516 = vsel %vm3161, %v3225, %v3225
        %v3517 = vsel %vm3161, %v3225, %v3162
        %v3518 = vsel %vm1496, %v3516, 0
        %v3520 = vsel %vm1496, %v3517, 0
        %3522 = vmatprep.subr.mxu0 0.0
        %3523 = vmatpush1.msra.mxu0 %v3156
        %3524 = vmatprep.subr.mxu0 0.0
        %3525 = vmatpush1.msra.mxu0 %v3157
        %3526 = vmatprep.subr.mxu0 0.0
        %3527 = vmatpush1.msra.mxu0 0.0
        %3528 = vmatprep.subr.mxu0 0.0
        %3529 = vmatpush1.msra.mxu0 0.0
        %3530 = vmatprep.subr.mxu0 0.0
        %3531 = vmatpush1.msra.mxu0 0.0
        %3532 = vmatprep.subr.mxu0 0.0
        %3533 = vmatpush1.msra.mxu0 0.0
        %3534 = vmatprep.subr.mxu0 0.0
        %3535 = vmatpush1.msra.mxu0 0.0
        %3536 = vmatprep.subr.mxu0 0.0
        %3537 = vmatpush1.msra.mxu0 0.0
        %3538 = vmatprep.subr.mxu0 0.0
        %3539 = vmatpush1.msra.mxu0 0.0
        %3540 = vmatprep.subr.mxu0 0.0
        %3541 = vmatpush1.msra.mxu0 0.0
        %3542 = vmatprep.subr.mxu0 0.0
        %3543 = vmatpush1.msra.mxu0 0.0
        %3544 = vmatprep.subr.mxu0 0.0
        %3545 = vmatpush1.msra.mxu0 0.0
        %3546 = vmatprep.subr.mxu0 0.0
        %3547 = vmatpush1.msra.mxu0 0.0
        %3548 = vmatprep.subr.mxu0 0.0
        %3549 = vmatpush1.msra.mxu0 0.0
        %3550 = vmatprep.subr.mxu0 0.0
        %3551 = vmatpush1.msra.mxu0 0.0
        %3552 = vmatprep.subr.mxu0 0.0
        %3553 = vmatpush1.msra.mxu0 0.0
        %3554 = vmatprep.subr.mxu0 0.0
        %3555 = vmatpush1.msra.mxu0 0.0
        %3556 = vmatprep.subr.mxu0 0.0
        %3557 = vmatpush1.msra.mxu0 0.0
        %3558 = vmatprep.subr.mxu0 0.0
        %3559 = vmatpush1.msra.mxu0 0.0
        %3560 = vmatprep.subr.mxu0 0.0
        %3561 = vmatpush1.msra.mxu0 0.0
        %3562 = vmatprep.subr.mxu0 0.0
        %3563 = vmatpush1.msra.mxu0 0.0
        %3564 = vmatprep.subr.mxu0 0.0
        %3565 = vmatpush1.msra.mxu0 0.0
        %3566 = vmatprep.subr.mxu0 0.0
        %3567 = vmatpush1.msra.mxu0 0.0
        %3568 = vmatprep.subr.mxu0 0.0
        %3569 = vmatpush1.msra.mxu0 0.0
        %3570 = vmatprep.subr.mxu0 0.0
        %3571 = vmatpush1.msra.mxu0 0.0
        %3572 = vmatprep.subr.mxu0 0.0
        %3573 = vmatpush1.msra.mxu0 0.0
        %3574 = vmatprep.subr.mxu0 0.0
        %3575 = vmatpush1.msra.mxu0 0.0
        %3576 = vmatprep.subr.mxu0 0.0
        %3577 = vmatpush1.msra.mxu0 0.0
        %3578 = vmatprep.subr.mxu0 0.0
        %3579 = vmatpush1.msra.mxu0 0.0
        %3580 = vmatprep.subr.mxu0 0.0
        %3581 = vmatpush1.msra.mxu0 0.0
        %3582 = vmatprep.subr.mxu0 0.0
        %3583 = vmatpush1.msra.mxu0 0.0
        %3584 = vmatprep.subr.mxu0 0.0
        %3585 = vmatpush1.msra.mxu0 0.0
        %3586 = vmatprep.mubr.f32.mxu0 0.0
        %3587 = vmatmul.mubr.f32.gmra.mrb[0].mxu0 %v3518
        %v3588 = vpop.f32.mrb[0].mxu0
        %v3589 = vadd.f32 %v3358, %v3588
        %v3590 = vpop.f32.mrb[0].mxu0
        %3591 = vmatprep.mubr.f32.mxu0 0.0
        %3592 = vmatmul.mubr.f32.gmra.mrb[0].mxu0 %v3520
        %v3593 = vpop.f32.mrb[0].mxu0
        %v3594 = vadd.f32 %v3363, %v3593
        %v3595 = vpop.f32.mrb[0].mxu0
        %3596 = vmatprep.mubr.f32.mxu0 0.0
        %3597 = vmatmul.mubr.f32.gmra.mrb[0].mxu0 %v3227
        %v3598 = vpop.f32.mrb[0].mxu0
        %v3599 = vadd.f32 %v3368, %v3598
        %v3600 = vpop.f32.mrb[0].mxu0
        %3601 = vmatprep.mubr.f32.mxu0 0.0
        %3602 = vmatmul.mubr.f32.gmra.mrb[0].mxu0 %v3229
        %v3603 = vpop.f32.mrb[0].mxu0
        %v3604 = vadd.f32 %v3373, %v3603
        %v3605 = vpop.f32.mrb[0].mxu0
        %3606 = vmatprep.mubr.f32.mxu0 0.0
        %3607 = vmatmul.mubr.f32.gmra.mrb[0].mxu0 %v3231
        %v3608 = vpop.f32.mrb[0].mxu0
        %v3609 = vadd.f32 %v3378, %v3608
        %v3610 = vpop.f32.mrb[0].mxu0
        %3611 = vmatprep.mubr.f32.mxu0 0.0
        %3612 = vmatmul.mubr.f32.gmra.mrb[0].mxu0 %v3233
        %v3613 = vpop.f32.mrb[0].mxu0
        %v3614 = vadd.f32 %v3383, %v3613
        %v3615 = vpop.f32.mrb[0].mxu0
        %3616 = vmatprep.mubr.f32.mxu0 0.0
        %3617 = vmatmul.mubr.f32.gmra.mrb[0].mxu0 %v3235
        %v3618 = vpop.f32.mrb[0].mxu0
        %v3619 = vadd.f32 %v3388, %v3618
        %v3620 = vpop.f32.mrb[0].mxu0
        %3621 = vmatprep.mubr.f32.mxu0 0.0
        %3622 = vmatmul.mubr.f32.gmra.mrb[0].mxu0 %v3237
        %v3623 = vpop.f32.mrb[0].mxu0
        %v3624 = vadd.f32 %v3393, %v3623
        %v3625 = vpop.f32.mrb[0].mxu0
        %3626 = vmatprep.mubr.f32.mxu0 0.0
        %3627 = vmatmul.mubr.f32.gmra.mrb[0].mxu0 %v3239
        %v3628 = vpop.f32.mrb[0].mxu0
        %v3629 = vadd.f32 %v3398, %v3628
        %v3630 = vpop.f32.mrb[0].mxu0
        %3631 = vmatprep.mubr.f32.mxu0 0.0
        %3632 = vmatmul.mubr.f32.gmra.mrb[0].mxu0 %v3241
        %v3633 = vpop.f32.mrb[0].mxu0
        %v3634 = vadd.f32 %v3403, %v3633
        %v3635 = vpop.f32.mrb[0].mxu0
        %3636 = vmatprep.mubr.f32.mxu0 0.0
        %3637 = vmatmul.mubr.f32.gmra.mrb[0].mxu0 %v3243
        %v3638 = vpop.f32.mrb[0].mxu0
        %v3639 = vadd.f32 %v3408, %v3638
        %v3640 = vpop.f32.mrb[0].mxu0
        %3641 = vmatprep.mubr.f32.mxu0 0.0
        %3642 = vmatmul.mubr.f32.gmra.mrb[0].mxu0 %v3245
        %v3643 = vpop.f32.mrb[0].mxu0
        %v3644 = vadd.f32 %v3413, %v3643
        %v3645 = vpop.f32.mrb[0].mxu0
        %3646 = vmatprep.mubr.f32.mxu0 0.0
        %3647 = vmatmul.mubr.f32.gmra.mrb[0].mxu0 %v3247
        %v3648 = vpop.f32.mrb[0].mxu0
        %v3649 = vadd.f32 %v3418, %v3648
        %v3650 = vpop.f32.mrb[0].mxu0
        %3651 = vmatprep.mubr.f32.mxu0 0.0
        %3652 = vmatmul.mubr.f32.gmra.mrb[0].mxu0 %v3249
        %v3653 = vpop.f32.mrb[0].mxu0
        %v3654 = vadd.f32 %v3423, %v3653
        %v3655 = vpop.f32.mrb[0].mxu0
        %3656 = vmatprep.mubr.f32.mxu0 0.0
        %3657 = vmatmul.mubr.f32.gmra.mrb[0].mxu0 %v3251
        %v3658 = vpop.f32.mrb[0].mxu0
        %v3659 = vadd.f32 %v3428, %v3658
        %v3660 = vpop.f32.mrb[0].mxu0
        %3661 = vmatprep.mubr.f32.mxu0 0.0
        %3662 = vmatmul.mubr.f32.gmra.mrb[0].mxu0 %v3253
        %v3663 = vpop.f32.mrb[0].mxu0
        %v3664 = vadd.f32 %v3433, %v3663
        %v3665 = vpop.f32.mrb[0].mxu0
        %3666 = vmatprep.mubr.f32.mxu0 0.0
        %3667 = vmatmul.mubr.f32.gmra.mrb[0].mxu0 %v3255
        %v3668 = vpop.f32.mrb[0].mxu0
        %v3669 = vadd.f32 %v3438, %v3668
        %v3670 = vpop.f32.mrb[0].mxu0
        %3671 = vmatprep.mubr.f32.mxu0 0.0
        %3672 = vmatmul.mubr.f32.gmra.mrb[0].mxu0 %v3257
        %v3673 = vpop.f32.mrb[0].mxu0
        %v3674 = vadd.f32 %v3443, %v3673
        %v3675 = vpop.f32.mrb[0].mxu0
        %3676 = vmatprep.mubr.f32.mxu0 0.0
        %3677 = vmatmul.mubr.f32.gmra.mrb[0].mxu0 %v3259
        %v3678 = vpop.f32.mrb[0].mxu0
        %v3679 = vadd.f32 %v3448, %v3678
        %v3680 = vpop.f32.mrb[0].mxu0
        %3681 = vmatprep.mubr.f32.mxu0 0.0
        %3682 = vmatmul.mubr.f32.gmra.mrb[0].mxu0 %v3261
        %v3683 = vpop.f32.mrb[0].mxu0
        %v3684 = vadd.f32 %v3453, %v3683
        %v3685 = vpop.f32.mrb[0].mxu0
        %3686 = vmatprep.mubr.f32.mxu0 0.0
        %3687 = vmatmul.mubr.f32.gmra.mrb[0].mxu0 %v3263
        %v3688 = vpop.f32.mrb[0].mxu0
        %v3689 = vadd.f32 %v3458, %v3688
        %v3690 = vpop.f32.mrb[0].mxu0
        %3691 = vmatprep.mubr.f32.mxu0 0.0
        %3692 = vmatmul.mubr.f32.gmra.mrb[0].mxu0 %v3265
        %v3693 = vpop.f32.mrb[0].mxu0
        %v3694 = vadd.f32 %v3463, %v3693
        %v3695 = vpop.f32.mrb[0].mxu0
        %3696 = vmatprep.mubr.f32.mxu0 0.0
        %3697 = vmatmul.mubr.f32.gmra.mrb[0].mxu0 %v3267
        %v3698 = vpop.f32.mrb[0].mxu0
        %v3699 = vadd.f32 %v3468, %v3698
        %v3700 = vpop.f32.mrb[0].mxu0
        %3701 = vmatprep.mubr.f32.mxu0 0.0
        %3702 = vmatmul.mubr.f32.gmra.mrb[0].mxu0 %v3269
        %v3703 = vpop.f32.mrb[0].mxu0
        %v3704 = vadd.f32 %v3473, %v3703
        %v3705 = vpop.f32.mrb[0].mxu0
        %3706 = vmatprep.mubr.f32.mxu0 0.0
        %3707 = vmatmul.mubr.f32.gmra.mrb[0].mxu0 %v3271
        %v3708 = vpop.f32.mrb[0].mxu0
        %v3709 = vadd.f32 %v3478, %v3708
        %v3710 = vpop.f32.mrb[0].mxu0
        %3711 = vmatprep.mubr.f32.mxu0 0.0
        %3712 = vmatmul.mubr.f32.gmra.mrb[0].mxu0 %v3273
        %v3713 = vpop.f32.mrb[0].mxu0
        %v3714 = vadd.f32 %v3483, %v3713
        %v3715 = vpop.f32.mrb[0].mxu0
        %3716 = vmatprep.mubr.f32.mxu0 0.0
        %3717 = vmatmul.mubr.f32.gmra.mrb[0].mxu0 %v3275
        %v3718 = vpop.f32.mrb[0].mxu0
        %v3719 = vadd.f32 %v3488, %v3718
        %v3720 = vpop.f32.mrb[0].mxu0
        %3721 = vmatprep.mubr.f32.mxu0 0.0
        %3722 = vmatmul.mubr.f32.gmra.mrb[0].mxu0 %v3277
        %v3723 = vpop.f32.mrb[0].mxu0
        %v3724 = vadd.f32 %v3493, %v3723
        %v3725 = vpop.f32.mrb[0].mxu0
        %3726 = vmatprep.mubr.f32.mxu0 0.0
        %3727 = vmatmul.mubr.f32.gmra.mrb[0].mxu0 %v3279
        %v3728 = vpop.f32.mrb[0].mxu0
        %v3729 = vadd.f32 %v3498, %v3728
        %v3730 = vpop.f32.mrb[0].mxu0
        %3731 = vmatprep.mubr.f32.mxu0 0.0
        %3732 = vmatmul.mubr.f32.gmra.mrb[0].mxu0 %v3281
        %v3733 = vpop.f32.mrb[0].mxu0
        %v3734 = vadd.f32 %v3503, %v3733
        %v3735 = vpop.f32.mrb[0].mxu0
        %3736 = vmatprep.mubr.f32.mxu0 0.0
        %3737 = vmatmul.mubr.f32.gmra.mrb[0].mxu0 %v3283
        %v3738 = vpop.f32.mrb[0].mxu0
        %v3739 = vadd.f32 %v3508, %v3738
        %v3740 = vpop.f32.mrb[0].mxu0
        %3741 = vmatprep.mubr.f32.mxu0 0.0
        %3742 = vmatmul.mubr.f32.gmra.mrb[0].mxu0 %v3285
        %v3743 = vpop.f32.mrb[0].mxu0
        %v3744 = vadd.f32 %v3513, %v3743
        %v3745 = vpop.f32.mrb[0].mxu0
        %3746 = vdwg.mxu0
        %s3747 = scalar_lea.vmem [#allocation5], 128
        %v3748 = vld [vmem:[%s3747] sm:$0xff]
        %v3749 = vld [vmem:[%s3747 + $0x8] sm:$0xff]
        %3750 = vmatprep.subr.mxu0 0.0
        %3751 = vmatpush1.msra.mxu0 %v3748
        %3752 = vmatprep.subr.mxu0 0.0
        %3753 = vmatpush1.msra.mxu0 %v3749
        %3754 = vmatprep.subr.mxu0 0.0
        %3755 = vmatpush1.msra.mxu0 0.0
        %3756 = vmatprep.subr.mxu0 0.0
        %3757 = vmatpush1.msra.mxu0 0.0
        %3758 = vmatprep.subr.mxu0 0.0
        %3759 = vmatpush1.msra.mxu0 0.0
        %3760 = vmatprep.subr.mxu0 0.0
        %3761 = vmatpush1.msra.mxu0 0.0
        %3762 = vmatprep.subr.mxu0 0.0
        %3763 = vmatpush1.msra.mxu0 0.0
        %3764 = vmatprep.subr.mxu0 0.0
        %3765 = vmatpush1.msra.mxu0 0.0
        %3766 = vmatprep.subr.mxu0 0.0
        %3767 = vmatpush1.msra.mxu0 0.0
        %3768 = vmatprep.subr.mxu0 0.0
        %3769 = vmatpush1.msra.mxu0 0.0
        %3770 = vmatprep.subr.mxu0 0.0
        %3771 = vmatpush1.msra.mxu0 0.0
        %3772 = vmatprep.subr.mxu0 0.0
        %3773 = vmatpush1.msra.mxu0 0.0
        %3774 = vmatprep.subr.mxu0 0.0
        %3775 = vmatpush1.msra.mxu0 0.0
        %3776 = vmatprep.subr.mxu0 0.0
        %3777 = vmatpush1.msra.mxu0 0.0
        %3778 = vmatprep.subr.mxu0 0.0
        %3779 = vmatpush1.msra.mxu0 0.0
        %3780 = vmatprep.subr.mxu0 0.0
        %3781 = vmatpush1.msra.mxu0 0.0
        %3782 = vmatprep.subr.mxu0 0.0
        %3783 = vmatpush1.msra.mxu0 0.0
        %3784 = vmatprep.subr.mxu0 0.0
        %3785 = vmatpush1.msra.mxu0 0.0
        %3786 = vmatprep.subr.mxu0 0.0
        %3787 = vmatpush1.msra.mxu0 0.0
        %3788 = vmatprep.subr.mxu0 0.0
        %3789 = vmatpush1.msra.mxu0 0.0
        %3790 = vmatprep.subr.mxu0 0.0
        %3791 = vmatpush1.msra.mxu0 0.0
        %3792 = vmatprep.subr.mxu0 0.0
        %3793 = vmatpush1.msra.mxu0 0.0
        %3794 = vmatprep.subr.mxu0 0.0
        %3795 = vmatpush1.msra.mxu0 0.0
        %3796 = vmatprep.subr.mxu0 0.0
        %3797 = vmatpush1.msra.mxu0 0.0
        %3798 = vmatprep.subr.mxu0 0.0
        %3799 = vmatpush1.msra.mxu0 0.0
        %3800 = vmatprep.subr.mxu0 0.0
        %3801 = vmatpush1.msra.mxu0 0.0
        %3802 = vmatprep.subr.mxu0 0.0
        %3803 = vmatpush1.msra.mxu0 0.0
        %3804 = vmatprep.subr.mxu0 0.0
        %3805 = vmatpush1.msra.mxu0 0.0
        %3806 = vmatprep.subr.mxu0 0.0
        %3807 = vmatpush1.msra.mxu0 0.0
        %3808 = vmatprep.subr.mxu0 0.0
        %3809 = vmatpush1.msra.mxu0 0.0
        %3810 = vmatprep.subr.mxu0 0.0
        %3811 = vmatpush1.msra.mxu0 0.0
        %3812 = vmatprep.subr.mxu0 0.0
        %3813 = vmatpush1.msra.mxu0 0.0
        %3814 = vmatprep.mubr.f32.mxu0 0.0
        %3815 = vmatmul.mubr.f32.gmra.mrb[0].mxu0 %v3231
        %v3816 = vpop.f32.mrb[0].mxu0
        %v3817 = vadd.f32 0.0, %v3816
        %v3818 = vpop.f32.mrb[0].mxu0
        %3819 = vmatprep.mubr.f32.mxu0 0.0
        %3820 = vmatmul.mubr.f32.gmra.mrb[0].mxu0 %v3233
        %v3821 = vpop.f32.mrb[0].mxu0
        %v3822 = vadd.f32 0.0, %v3821
        %v3823 = vpop.f32.mrb[0].mxu0
        %3824 = vmatprep.mubr.f32.mxu0 0.0
        %3825 = vmatmul.mubr.f32.gmra.mrb[0].mxu0 %v3235
        %v3826 = vpop.f32.mrb[0].mxu0
        %v3827 = vadd.f32 0.0, %v3826
        %v3828 = vpop.f32.mrb[0].mxu0
        %3829 = vmatprep.mubr.f32.mxu0 0.0
        %3830 = vmatmul.mubr.f32.gmra.mrb[0].mxu0 %v3237
        %v3831 = vpop.f32.mrb[0].mxu0
        %v3832 = vadd.f32 0.0, %v3831
        %v3833 = vpop.f32.mrb[0].mxu0
        %3834 = vmatprep.mubr.f32.mxu0 0.0
        %3835 = vmatmul.mubr.f32.gmra.mrb[0].mxu0 %v3239
        %v3836 = vpop.f32.mrb[0].mxu0
        %v3837 = vadd.f32 0.0, %v3836
        %v3838 = vpop.f32.mrb[0].mxu0
        %3839 = vmatprep.mubr.f32.mxu0 0.0
        %3840 = vmatmul.mubr.f32.gmra.mrb[0].mxu0 %v3241
        %v3841 = vpop.f32.mrb[0].mxu0
        %v3842 = vadd.f32 0.0, %v3841
        %v3843 = vpop.f32.mrb[0].mxu0
        %3844 = vmatprep.mubr.f32.mxu0 0.0
        %3845 = vmatmul.mubr.f32.gmra.mrb[0].mxu0 %v3243
        %v3846 = vpop.f32.mrb[0].mxu0
        %v3847 = vadd.f32 0.0, %v3846
        %v3848 = vpop.f32.mrb[0].mxu0
        %3849 = vmatprep.mubr.f32.mxu0 0.0
        %3850 = vmatmul.mubr.f32.gmra.mrb[0].mxu0 %v3245
        %v3851 = vpop.f32.mrb[0].mxu0
        %v3852 = vadd.f32 0.0, %v3851
        %v3853 = vpop.f32.mrb[0].mxu0
        %3854 = vmatprep.mubr.f32.mxu0 0.0
        %3855 = vmatmul.mubr.f32.gmra.mrb[0].mxu0 %v3247
        %v3856 = vpop.f32.mrb[0].mxu0
        %v3857 = vadd.f32 0.0, %v3856
        %v3858 = vpop.f32.mrb[0].mxu0
        %3859 = vmatprep.mubr.f32.mxu0 0.0
        %3860 = vmatmul.mubr.f32.gmra.mrb[0].mxu0 %v3249
        %v3861 = vpop.f32.mrb[0].mxu0
        %v3862 = vadd.f32 0.0, %v3861
        %v3863 = vpop.f32.mrb[0].mxu0
        %3864 = vmatprep.mubr.f32.mxu0 0.0
        %3865 = vmatmul.mubr.f32.gmra.mrb[0].mxu0 %v3251
        %v3866 = vpop.f32.mrb[0].mxu0
        %v3867 = vadd.f32 0.0, %v3866
        %v3868 = vpop.f32.mrb[0].mxu0
        %3869 = vmatprep.mubr.f32.mxu0 0.0
        %3870 = vmatmul.mubr.f32.gmra.mrb[0].mxu0 %v3253
        %v3871 = vpop.f32.mrb[0].mxu0
        %v3872 = vadd.f32 0.0, %v3871
        %v3873 = vpop.f32.mrb[0].mxu0
        %3874 = vmatprep.mubr.f32.mxu0 0.0
        %3875 = vmatmul.mubr.f32.gmra.mrb[0].mxu0 %v3255
        %v3876 = vpop.f32.mrb[0].mxu0
        %v3877 = vadd.f32 0.0, %v3876
        %v3878 = vpop.f32.mrb[0].mxu0
        %3879 = vmatprep.mubr.f32.mxu0 0.0
        %3880 = vmatmul.mubr.f32.gmra.mrb[0].mxu0 %v3257
        %v3881 = vpop.f32.mrb[0].mxu0
        %v3882 = vadd.f32 0.0, %v3881
        %v3883 = vpop.f32.mrb[0].mxu0
        %3884 = vmatprep.mubr.f32.mxu0 0.0
        %3885 = vmatmul.mubr.f32.gmra.mrb[0].mxu0 %v3259
        %v3886 = vpop.f32.mrb[0].mxu0
        %v3887 = vadd.f32 0.0, %v3886
        %v3888 = vpop.f32.mrb[0].mxu0
        %3889 = vmatprep.mubr.f32.mxu0 0.0
        %3890 = vmatmul.mubr.f32.gmra.mrb[0].mxu0 %v3261
        %v3891 = vpop.f32.mrb[0].mxu0
        %v3892 = vadd.f32 0.0, %v3891
        %v3893 = vpop.f32.mrb[0].mxu0
        %3894 = vmatprep.mubr.f32.mxu0 0.0
        %3895 = vmatmul.mubr.f32.gmra.mrb[0].mxu0 %v3263
        %v3896 = vpop.f32.mrb[0].mxu0
        %v3897 = vadd.f32 0.0, %v3896
        %v3898 = vpop.f32.mrb[0].mxu0
        %3899 = vmatprep.mubr.f32.mxu0 0.0
        %3900 = vmatmul.mubr.f32.gmra.mrb[0].mxu0 %v3265
        %v3901 = vpop.f32.mrb[0].mxu0
        %v3902 = vadd.f32 0.0, %v3901
        %v3903 = vpop.f32.mrb[0].mxu0
        %3904 = vmatprep.mubr.f32.mxu0 0.0
        %3905 = vmatmul.mubr.f32.gmra.mrb[0].mxu0 %v3267
        %v3906 = vpop.f32.mrb[0].mxu0
        %v3907 = vadd.f32 0.0, %v3906
        %v3908 = vpop.f32.mrb[0].mxu0
        %3909 = vmatprep.mubr.f32.mxu0 0.0
        %3910 = vmatmul.mubr.f32.gmra.mrb[0].mxu0 %v3269
        %v3911 = vpop.f32.mrb[0].mxu0
        %v3912 = vadd.f32 0.0, %v3911
        %v3913 = vpop.f32.mrb[0].mxu0
        %3914 = vmatprep.mubr.f32.mxu0 0.0
        %3915 = vmatmul.mubr.f32.gmra.mrb[0].mxu0 %v3271
        %v3916 = vpop.f32.mrb[0].mxu0
        %v3917 = vadd.f32 0.0, %v3916
        %v3918 = vpop.f32.mrb[0].mxu0
        %3919 = vmatprep.mubr.f32.mxu0 0.0
        %3920 = vmatmul.mubr.f32.gmra.mrb[0].mxu0 %v3273
        %v3921 = vpop.f32.mrb[0].mxu0
        %v3922 = vadd.f32 0.0, %v3921
        %v3923 = vpop.f32.mrb[0].mxu0
        %3924 = vmatprep.mubr.f32.mxu0 0.0
        %3925 = vmatmul.mubr.f32.gmra.mrb[0].mxu0 %v3275
        %v3926 = vpop.f32.mrb[0].mxu0
        %v3927 = vadd.f32 0.0, %v3926
        %v3928 = vpop.f32.mrb[0].mxu0
        %3929 = vmatprep.mubr.f32.mxu0 0.0
        %3930 = vmatmul.mubr.f32.gmra.mrb[0].mxu0 %v3277
        %v3931 = vpop.f32.mrb[0].mxu0
        %v3932 = vadd.f32 0.0, %v3931
        %v3933 = vpop.f32.mrb[0].mxu0
        %3934 = vmatprep.mubr.f32.mxu0 0.0
        %3935 = vmatmul.mubr.f32.gmra.mrb[0].mxu0 %v3279
        %v3936 = vpop.f32.mrb[0].mxu0
        %v3937 = vadd.f32 0.0, %v3936
        %v3938 = vpop.f32.mrb[0].mxu0
        %3939 = vmatprep.mubr.f32.mxu0 0.0
        %3940 = vmatmul.mubr.f32.gmra.mrb[0].mxu0 %v3281
        %v3941 = vpop.f32.mrb[0].mxu0
        %v3942 = vadd.f32 0.0, %v3941
        %v3943 = vpop.f32.mrb[0].mxu0
        %3944 = vmatprep.mubr.f32.mxu0 0.0
        %3945 = vmatmul.mubr.f32.gmra.mrb[0].mxu0 %v3283
        %v3946 = vpop.f32.mrb[0].mxu0
        %v3947 = vadd.f32 0.0, %v3946
        %v3948 = vpop.f32.mrb[0].mxu0
        %3949 = vmatprep.mubr.f32.mxu0 0.0
        %3950 = vmatmul.mubr.f32.gmra.mrb[0].mxu0 %v3285
        %v3951 = vpop.f32.mrb[0].mxu0
        %v3952 = vadd.f32 0.0, %v3951
        %v3953 = vpop.f32.mrb[0].mxu0
        %3954 = vmatprep.mubr.f32.mxu0 0.0
        %3955 = vmatmul.mubr.f32.gmra.mrb[0].mxu0 %v3287
        %v3956 = vpop.f32.mrb[0].mxu0
        %v3957 = vadd.f32 0.0, %v3956
        %v3958 = vpop.f32.mrb[0].mxu0
        %3959 = vmatprep.mubr.f32.mxu0 0.0
        %3960 = vmatmul.mubr.f32.gmra.mrb[0].mxu0 %v3289
        %v3961 = vpop.f32.mrb[0].mxu0
        %v3962 = vadd.f32 0.0, %v3961
        %v3963 = vpop.f32.mrb[0].mxu0
        %3964 = vmatprep.mubr.f32.mxu0 0.0
        %3965 = vmatmul.mubr.f32.gmra.mrb[0].mxu0 %v3518
        %v3966 = vpop.f32.mrb[0].mxu0
        %v3967 = vadd.f32 0.0, %v3966
        %v3968 = vpop.f32.mrb[0].mxu0
        %3969 = vmatprep.mubr.f32.mxu0 0.0
        %3970 = vmatmul.mubr.f32.gmra.mrb[0].mxu0 %v3518
        %v3971 = vpop.f32.mrb[0].mxu0
        %v3972 = vadd.f32 0.0, %v3971
        %v3973 = vpop.f32.mrb[0].mxu0
        %3974 = vdwg.mxu0
        %v3975 = vadd.f32 %v3589, %v3817
        %v3976 = vadd.f32 %v3594, %v3822
        %v3977 = vadd.f32 %v3599, %v3827
        %v3978 = vadd.f32 %v3604, %v3832
        %v3979 = vadd.f32 %v3609, %v3837
        %v3980 = vadd.f32 %v3614, %v3842
        %v3981 = vadd.f32 %v3619, %v3847
        %v3982 = vadd.f32 %v3624, %v3852
        %v3983 = vadd.f32 %v3629, %v3857
        %v3984 = vadd.f32 %v3634, %v3862
        %v3985 = vadd.f32 %v3639, %v3867
        %v3986 = vadd.f32 %v3644, %v3872
        %v3987 = vadd.f32 %v3649, %v3877
        %v3988 = vadd.f32 %v3654, %v3882
        %v3989 = vadd.f32 %v3659, %v3887
        %v3990 = vadd.f32 %v3664, %v3892
        %v3991 = vadd.f32 %v3669, %v3897
        %v3992 = vadd.f32 %v3674, %v3902
        %v3993 = vadd.f32 %v3679, %v3907
        %v3994 = vadd.f32 %v3684, %v3912
        %v3995 = vadd.f32 %v3689, %v3917
        %v3996 = vadd.f32 %v3694, %v3922
        %v3997 = vadd.f32 %v3699, %v3927
        %v3998 = vadd.f32 %v3704, %v3932
        %v3999 = vadd.f32 %v3709, %v3937
        %v4000 = vadd.f32 %v3714, %v3942
        %v4001 = vadd.f32 %v3719, %v3947
        %v4002 = vadd.f32 %v3724, %v3952
        %v4003 = vadd.f32 %v3729, %v3957
        %v4004 = vadd.f32 %v3734, %v3962
        %v4005 = vadd.f32 %v3739, %v3967
        %v4006 = vadd.f32 %v3744, %v3972
        %v4007 = vmul.f32 %v3975, %v1360
        %v4008 = vmul.f32 %v3976, %v1361
        %v4009 = vmul.f32 %v3977, %v1362
        %v4010 = vmul.f32 %v3978, %v1363
        %v4011 = vmul.f32 %v3979, %v1364
        %v4012 = vmul.f32 %v3980, %v1365
        %v4013 = vmul.f32 %v3981, %v1366
        %v4014 = vmul.f32 %v3982, %v1367
        %v4015 = vmul.f32 %v3983, %v1368
        %v4016 = vmul.f32 %v3984, %v1369
        %v4017 = vmul.f32 %v3985, %v1370
        %v4018 = vmul.f32 %v3986, %v1371
        %v4019 = vmul.f32 %v3987, %v1372
        %v4020 = vmul.f32 %v3988, %v1373
        %v4021 = vmul.f32 %v3989, %v1374
        %v4022 = vmul.f32 %v3990, %v1375
        %v4023 = vmul.f32 %v3991, %v1376
        %v4024 = vmul.f32 %v3992, %v1377
        %v4025 = vmul.f32 %v3993, %v1378
        %v4026 = vmul.f32 %v3994, %v1379
        %v4027 = vmul.f32 %v3995, %v1380
        %v4028 = vmul.f32 %v3996, %v1381
        %v4029 = vmul.f32 %v3997, %v1382
        %v4030 = vmul.f32 %v3998, %v1383
        %v4031 = vmul.f32 %v3999, %v1384
        %v4032 = vmul.f32 %v4000, %v1385
        %v4033 = vmul.f32 %v4001, %v1386
        %v4034 = vmul.f32 %v4002, %v1387
        %v4035 = vmul.f32 %v4003, %v1388
        %v4036 = vmul.f32 %v4004, %v1389
        %v4037 = vmul.f32 %v4005, %v1390
        %v4038 = vmul.f32 %v4006, %v1391
        %v4039 = vadd.f32 %v3123, %v4007
        %v4040 = vadd.f32 %v3124, %v4008
        %v4041 = vadd.f32 %v3125, %v4009
        %v4042 = vadd.f32 %v3126, %v4010
        %v4043 = vadd.f32 %v3127, %v4011
        %v4044 = vadd.f32 %v3128, %v4012
        %v4045 = vadd.f32 %v3129, %v4013
        %v4046 = vadd.f32 %v3130, %v4014
        %v4047 = vadd.f32 %v3131, %v4015
        %v4048 = vadd.f32 %v3132, %v4016
        %v4049 = vadd.f32 %v3133, %v4017
        %v4050 = vadd.f32 %v3134, %v4018
        %v4051 = vadd.f32 %v3135, %v4019
        %v4052 = vadd.f32 %v3136, %v4020
        %v4053 = vadd.f32 %v3137, %v4021
        %v4054 = vadd.f32 %v3138, %v4022
        %v4055 = vadd.f32 %v3139, %v4023
        %v4056 = vadd.f32 %v3140, %v4024
        %v4057 = vadd.f32 %v3141, %v4025
        %v4058 = vadd.f32 %v3142, %v4026
        %v4059 = vadd.f32 %v3143, %v4027
        %v4060 = vadd.f32 %v3144, %v4028
        %v4061 = vadd.f32 %v3145, %v4029
        %v4062 = vadd.f32 %v3146, %v4030
        %v4063 = vadd.f32 %v3147, %v4031
        %v4064 = vadd.f32 %v3148, %v4032
        %v4065 = vadd.f32 %v3149, %v4033
        %v4066 = vadd.f32 %v3150, %v4034
        %v4067 = vadd.f32 %v3151, %v4035
        %v4068 = vadd.f32 %v3152, %v4036
        %v4069 = vadd.f32 %v3153, %v4037
        %v4070 = vadd.f32 %v3154, %v4038
        %v4071 = vld [vmem:[%s4] sm:$0x1]
        %v4073 = vlaneseq
        %v4074 = vshrl.u32 %v4073, 7
        %v4075 = vsub.s32 0, %v4074
        %v4076 = vrot.slane %v4071, %v4075
        %v4078 = vadd.f32 %v4039, %v4076
        %v4079 = vadd.f32 %v4040, %v4076
        %v4080 = vadd.f32 %v4041, %v4076
        %v4081 = vadd.f32 %v4042, %v4076
        %v4082 = vadd.f32 %v4043, %v4076
        %v4083 = vadd.f32 %v4044, %v4076
        %v4084 = vadd.f32 %v4045, %v4076
        %v4085 = vadd.f32 %v4046, %v4076
        %v4086 = vadd.f32 %v4047, %v4076
        %v4087 = vadd.f32 %v4048, %v4076
        %v4088 = vadd.f32 %v4049, %v4076
        %v4089 = vadd.f32 %v4050, %v4076
        %v4090 = vadd.f32 %v4051, %v4076
        %v4091 = vadd.f32 %v4052, %v4076
        %v4092 = vadd.f32 %v4053, %v4076
        %v4093 = vadd.f32 %v4054, %v4076
        %v4094 = vadd.f32 %v4055, %v4076
        %v4095 = vadd.f32 %v4056, %v4076
        %v4096 = vadd.f32 %v4057, %v4076
        %v4097 = vadd.f32 %v4058, %v4076
        %v4098 = vadd.f32 %v4059, %v4076
        %v4099 = vadd.f32 %v4060, %v4076
        %v4100 = vadd.f32 %v4061, %v4076
        %v4101 = vadd.f32 %v4062, %v4076
        %v4102 = vadd.f32 %v4063, %v4076
        %v4103 = vadd.f32 %v4064, %v4076
        %v4104 = vadd.f32 %v4065, %v4076
        %v4105 = vadd.f32 %v4066, %v4076
        %v4106 = vadd.f32 %v4067, %v4076
        %v4107 = vadd.f32 %v4068, %v4076
        %v4108 = vadd.f32 %v4069, %v4076
        %v4109 = vadd.f32 %v4070, %v4076
        %v4110 = vadd.f32 %v4078, 3.0
        %v4111 = vadd.f32 %v4079, 3.0
        %v4112 = vadd.f32 %v4080, 3.0
        %v4113 = vadd.f32 %v4081, 3.0
        %v4114 = vadd.f32 %v4082, 3.0
        %v4115 = vadd.f32 %v4083, 3.0
        %v4116 = vadd.f32 %v4084, 3.0
        %v4117 = vadd.f32 %v4085, 3.0
        %v4118 = vadd.f32 %v4086, 3.0
        %v4119 = vadd.f32 %v4087, 3.0
        %v4120 = vadd.f32 %v4088, 3.0
        %v4121 = vadd.f32 %v4089, 3.0
        %v4122 = vadd.f32 %v4090, 3.0
        %v4123 = vadd.f32 %v4091, 3.0
        %v4124 = vadd.f32 %v4092, 3.0
        %v4125 = vadd.f32 %v4093, 3.0
        %v4126 = vadd.f32 %v4094, 3.0
        %v4127 = vadd.f32 %v4095, 3.0
        %v4128 = vadd.f32 %v4096, 3.0
        %v4129 = vadd.f32 %v4097, 3.0
        %v4130 = vadd.f32 %v4098, 3.0
        %v4131 = vadd.f32 %v4099, 3.0
        %v4132 = vadd.f32 %v4100, 3.0
        %v4133 = vadd.f32 %v4101, 3.0
        %v4134 = vadd.f32 %v4102, 3.0
        %v4135 = vadd.f32 %v4103, 3.0
        %v4136 = vadd.f32 %v4104, 3.0
        %v4137 = vadd.f32 %v4105, 3.0
        %v4138 = vadd.f32 %v4106, 3.0
        %v4139 = vadd.f32 %v4107, 3.0
        %v4140 = vadd.f32 %v4108, 3.0
        %v4141 = vadd.f32 %v4109, 3.0
        %v4142 = vmax.f32 %v4110, 0.0
        %v4143 = vmax.f32 %v4111, 0.0
        %v4144 = vmax.f32 %v4112, 0.0
        %v4145 = vmax.f32 %v4113, 0.0
        %v4146 = vmax.f32 %v4114, 0.0
        %v4147 = vmax.f32 %v4115, 0.0
        %v4148 = vmax.f32 %v4116, 0.0
        %v4149 = vmax.f32 %v4117, 0.0
        %v4150 = vmax.f32 %v4118, 0.0
        %v4151 = vmax.f32 %v4119, 0.0
        %v4152 = vmax.f32 %v4120, 0.0
        %v4153 = vmax.f32 %v4121, 0.0
        %v4154 = vmax.f32 %v4122, 0.0
        %v4155 = vmax.f32 %v4123, 0.0
        %v4156 = vmax.f32 %v4124, 0.0
        %v4157 = vmax.f32 %v4125, 0.0
        %v4158 = vmax.f32 %v4126, 0.0
        %v4159 = vmax.f32 %v4127, 0.0
        %v4160 = vmax.f32 %v4128, 0.0
        %v4161 = vmax.f32 %v4129, 0.0
        %v4162 = vmax.f32 %v4130, 0.0
        %v4163 = vmax.f32 %v4131, 0.0
        %v4164 = vmax.f32 %v4132, 0.0
        %v4165 = vmax.f32 %v4133, 0.0
        %v4166 = vmax.f32 %v4134, 0.0
        %v4167 = vmax.f32 %v4135, 0.0
        %v4168 = vmax.f32 %v4136, 0.0
        %v4169 = vmax.f32 %v4137, 0.0
        %v4170 = vmax.f32 %v4138, 0.0
        %v4171 = vmax.f32 %v4139, 0.0
        %v4172 = vmax.f32 %v4140, 0.0
        %v4173 = vmax.f32 %v4141, 0.0
        %v4174 = vmin.f32 %v4142, 6.0
        %v4175 = vmin.f32 %v4143, 6.0
        %v4176 = vmin.f32 %v4144, 6.0
        %v4177 = vmin.f32 %v4145, 6.0
        %v4178 = vmin.f32 %v4146, 6.0
        %v4179 = vmin.f32 %v4147, 6.0
        %v4180 = vmin.f32 %v4148, 6.0
        %v4181 = vmin.f32 %v4149, 6.0
        %v4182 = vmin.f32 %v4150, 6.0
        %v4183 = vmin.f32 %v4151, 6.0
        %v4184 = vmin.f32 %v4152, 6.0
        %v4185 = vmin.f32 %v4153, 6.0
        %v4186 = vmin.f32 %v4154, 6.0
        %v4187 = vmin.f32 %v4155, 6.0
        %v4188 = vmin.f32 %v4156, 6.0
        %v4189 = vmin.f32 %v4157, 6.0
        %v4190 = vmin.f32 %v4158, 6.0
        %v4191 = vmin.f32 %v4159, 6.0
        %v4192 = vmin.f32 %v4160, 6.0
        %v4193 = vmin.f32 %v4161, 6.0
        %v4194 = vmin.f32 %v4162, 6.0
        %v4195 = vmin.f32 %v4163, 6.0
        %v4196 = vmin.f32 %v4164, 6.0
        %v4197 = vmin.f32 %v4165, 6.0
        %v4198 = vmin.f32 %v4166, 6.0
        %v4199 = vmin.f32 %v4167, 6.0
        %v4200 = vmin.f32 %v4168, 6.0
        %v4201 = vmin.f32 %v4169, 6.0
        %v4202 = vmin.f32 %v4170, 6.0
        %v4203 = vmin.f32 %v4171, 6.0
        %v4204 = vmin.f32 %v4172, 6.0
        %v4205 = vmin.f32 %v4173, 6.0
        %v4206 = vmul.f32 %v4078, %v4174
        %v4207 = vmul.f32 %v4079, %v4175
        %v4208 = vmul.f32 %v4080, %v4176
        %v4209 = vmul.f32 %v4081, %v4177
        %v4210 = vmul.f32 %v4082, %v4178
        %v4211 = vmul.f32 %v4083, %v4179
        %v4212 = vmul.f32 %v4084, %v4180
        %v4213 = vmul.f32 %v4085, %v4181
        %v4214 = vmul.f32 %v4086, %v4182
        %v4215 = vmul.f32 %v4087, %v4183
        %v4216 = vmul.f32 %v4088, %v4184
        %v4217 = vmul.f32 %v4089, %v4185
        %v4218 = vmul.f32 %v4090, %v4186
        %v4219 = vmul.f32 %v4091, %v4187
        %v4220 = vmul.f32 %v4092, %v4188
        %v4221 = vmul.f32 %v4093, %v4189
        %v4222 = vmul.f32 %v4094, %v4190
        %v4223 = vmul.f32 %v4095, %v4191
        %v4224 = vmul.f32 %v4096, %v4192
        %v4225 = vmul.f32 %v4097, %v4193
        %v4226 = vmul.f32 %v4098, %v4194
        %v4227 = vmul.f32 %v4099, %v4195
        %v4228 = vmul.f32 %v4100, %v4196
        %v4229 = vmul.f32 %v4101, %v4197
        %v4230 = vmul.f32 %v4102, %v4198
        %v4231 = vmul.f32 %v4103, %v4199
        %v4232 = vmul.f32 %v4104, %v4200
        %v4233 = vmul.f32 %v4105, %v4201
        %v4234 = vmul.f32 %v4106, %v4202
        %v4235 = vmul.f32 %v4107, %v4203
        %v4236 = vmul.f32 %v4108, %v4204
        %v4237 = vmul.f32 %v4109, %v4205
        %v4238 = vmul.f32 %v4206, 0.16666667
        %v4239 = vmul.f32 %v4207, 0.16666667
        %v4240 = vmul.f32 %v4208, 0.16666667
        %v4241 = vmul.f32 %v4209, 0.16666667
        %v4242 = vmul.f32 %v4210, 0.16666667
        %v4243 = vmul.f32 %v4211, 0.16666667
        %v4244 = vmul.f32 %v4212, 0.16666667
        %v4245 = vmul.f32 %v4213, 0.16666667
        %v4246 = vmul.f32 %v4214, 0.16666667
        %v4247 = vmul.f32 %v4215, 0.16666667
        %v4248 = vmul.f32 %v4216, 0.16666667
        %v4249 = vmul.f32 %v4217, 0.16666667
        %v4250 = vmul.f32 %v4218, 0.16666667
        %v4251 = vmul.f32 %v4219, 0.16666667
        %v4252 = vmul.f32 %v4220, 0.16666667
        %v4253 = vmul.f32 %v4221, 0.16666667
        %v4254 = vmul.f32 %v4222, 0.16666667
        %v4255 = vmul.f32 %v4223, 0.16666667
        %v4256 = vmul.f32 %v4224, 0.16666667
        %v4257 = vmul.f32 %v4225, 0.16666667
        %v4258 = vmul.f32 %v4226, 0.16666667
        %v4259 = vmul.f32 %v4227, 0.16666667
        %v4260 = vmul.f32 %v4228, 0.16666667
        %v4261 = vmul.f32 %v4229, 0.16666667
        %v4262 = vmul.f32 %v4230, 0.16666667
        %v4263 = vmul.f32 %v4231, 0.16666667
        %v4264 = vmul.f32 %v4232, 0.16666667
        %v4265 = vmul.f32 %v4233, 0.16666667
        %v4266 = vmul.f32 %v4234, 0.16666667
        %v4267 = vmul.f32 %v4235, 0.16666667
        %v4268 = vmul.f32 %v4236, 0.16666667
        %v4269 = vmul.f32 %v4237, 0.16666667
        %v4270 = vadd.f32 %v4238, %v258
        %v4271 = vadd.f32 %v4239, %v259
        %v4272 = vadd.f32 %v4240, %v260
        %v4273 = vadd.f32 %v4241, %v261
        %v4274 = vadd.f32 %v4242, %v262
        %v4275 = vadd.f32 %v4243, %v263
        %v4276 = vadd.f32 %v4244, %v264
        %v4277 = vadd.f32 %v4245, %v265
        %v4278 = vadd.f32 %v4246, %v266
        %v4279 = vadd.f32 %v4247, %v267
        %v4280 = vadd.f32 %v4248, %v268
        %v4281 = vadd.f32 %v4249, %v269
        %v4282 = vadd.f32 %v4250, %v270
        %v4283 = vadd.f32 %v4251, %v271
        %v4284 = vadd.f32 %v4252, %v272
        %v4285 = vadd.f32 %v4253, %v273
        %v4286 = vadd.f32 %v4254, %v274
        %v4287 = vadd.f32 %v4255, %v275
        %v4288 = vadd.f32 %v4256, %v276
        %v4289 = vadd.f32 %v4257, %v277
        %v4290 = vadd.f32 %v4258, %v278
        %v4291 = vadd.f32 %v4259, %v279
        %v4292 = vadd.f32 %v4260, %v280
        %v4293 = vadd.f32 %v4261, %v281
        %v4294 = vadd.f32 %v4262, %v282
        %v4295 = vadd.f32 %v4263, %v283
        %v4296 = vadd.f32 %v4264, %v284
        %v4297 = vadd.f32 %v4265, %v285
        %v4298 = vadd.f32 %v4266, %v286
        %v4299 = vadd.f32 %v4267, %v287
        %v4300 = vadd.f32 %v4268, %v288
        %v4301 = vadd.f32 %v4269, %v289
        %4302 = vst.msk [vmem:[%s257] sm:$0xff] %vm301, %v4270
        %4303 = vst.msk [vmem:[%s257 + $0x8] sm:$0xff] %vm301, %v4271
        %4304 = vst.msk [vmem:[%s257 + $0x10] sm:$0xff] %vm301, %v4272
        %4305 = vst.msk [vmem:[%s257 + $0x18] sm:$0xff] %vm301, %v4273
        %4306 = vst.msk [vmem:[%s257 + $0x20] sm:$0xff] %vm301, %v4274
        %4307 = vst.msk [vmem:[%s257 + $0x28] sm:$0xff] %vm301, %v4275
        %4308 = vst.msk [vmem:[%s257 + $0x30] sm:$0xff] %vm301, %v4276
        %4309 = vst.msk [vmem:[%s257 + $0x38] sm:$0xff] %vm301, %v4277
        %4310 = vst.msk [vmem:[%s257 + $0x40] sm:$0xff] %vm301, %v4278
        %4311 = vst.msk [vmem:[%s257 + $0x48] sm:$0xff] %vm301, %v4279
        %4312 = vst.msk [vmem:[%s257 + $0x50] sm:$0xff] %vm301, %v4280
        %4313 = vst.msk [vmem:[%s257 + $0x58] sm:$0xff] %vm301, %v4281
        %4314 = vst.msk [vmem:[%s257 + $0x60] sm:$0xff] %vm301, %v4282
        %4315 = vst.msk [vmem:[%s257 + $0x68] sm:$0xff] %vm301, %v4283
        %4316 = vst.msk [vmem:[%s257 + $0x70] sm:$0xff] %vm301, %v4284
        %4317 = vst.msk [vmem:[%s257 + $0x78] sm:$0xff] %vm301, %v4285
        %4318 = vst.msk [vmem:[%s257 + $0x80] sm:$0xff] %vm301, %v4286
        %4319 = vst.msk [vmem:[%s257 + $0x88] sm:$0xff] %vm301, %v4287
        %4320 = vst.msk [vmem:[%s257 + $0x90] sm:$0xff] %vm301, %v4288
        %4321 = vst.msk [vmem:[%s257 + $0x98] sm:$0xff] %vm301, %v4289
        %4322 = vst.msk [vmem:[%s257 + $0xa0] sm:$0xff] %vm301, %v4290
        %4323 = vst.msk [vmem:[%s257 + $0xa8] sm:$0xff] %vm301, %v4291
        %4324 = vst.msk [vmem:[%s257 + $0xb0] sm:$0xff] %vm301, %v4292
        %4325 = vst.msk [vmem:[%s257 + $0xb8] sm:$0xff] %vm301, %v4293
        %4326 = vst.msk [vmem:[%s257 + $0xc0] sm:$0xff] %vm301, %v4294
        %4327 = vst.msk [vmem:[%s257 + $0xc8] sm:$0xff] %vm301, %v4295
        %4328 = vst.msk [vmem:[%s257 + $0xd0] sm:$0xff] %vm301, %v4296
        %4329 = vst.msk [vmem:[%s257 + $0xd8] sm:$0xff] %vm301, %v4297
        %4330 = vst.msk [vmem:[%s257 + $0xe0] sm:$0xff] %vm301, %v4298
        %4331 = vst.msk [vmem:[%s257 + $0xe8] sm:$0xff] %vm301, %v4299
        %4332 = vst.msk [vmem:[%s257 + $0xf0] sm:$0xff] %vm301, %v4300
        %4333 = vst.msk [vmem:[%s257 + $0xf8] sm:$0xff] %vm301, %v4301
        %s4334 = sand.u32 %s141, 1
        %s4335 = scalar_lea.sflag [#allocation4], %s4334
        %s4336 = sand.u32 %s141, 1
        %s4337 = smul.addr %s4336, 256
        %s4338 = scalar_lea.vmem [#allocation7], %s4337
        // Predicated region
        $region49: #{bottleneck_forward.1} parent=39 // pred_check
          %p4339 = pneg %p151
        $region50: #{bottleneck_forward.1} parent=39 // pred_check_branch
          %4341 = sbr.rel (%p4339) target = $region52
        $region51: #{bottleneck_forward.1} parent=39 // pred_region
          %s4343 = ssub.s32 4096, 4096
          %4344 = vsyncadd %s4335, %s4343
          %s4345 = smul.addr %s23, 32
          %s4346 = smul.addr %s4345, 128
          %s4347 = scalar_lea.hbm %s5, %s4346
          %s4348 = sshll.u32 %s4338, 4
          %s4349 = int_to_ptr.vmem [resolvable:$true] %s4348
          %4354 = dma.vmem_to_hbm [thread:$0]  %s4349, 4096, %s4347, %s4335, 128, 128, 8
        $region52: #{bottleneck_forward.1} parent=39 // pred_fallthru
          _
      $region40: #{bottleneck_forward.1} parent=5 // pred_fallthru
        _
      %p4355 = scmp.le.s32.totalorder 2, %s18
      // Predicated region
      $region53: #{bottleneck_forward.1} parent=5 // pred_check
        %p4356 = pneg %p4355
      $region54: #{bottleneck_forward.1} parent=5 // pred_check_branch
        %4358 = sbr.rel (%p4356) target = $region56
      $region55: #{bottleneck_forward.1} parent=5 // pred_region
        %s4359 = ssub.s32 %s18, 2
        // Predicated region
        $region57: #{bottleneck_forward.1} parent=55 // pred_check
          %p4360 = pneg %p157
        $region58: #{bottleneck_forward.1} parent=55 // pred_check_branch
          %4362 = sbr.rel (%p4360) target = $region60
        $region59: #{bottleneck_forward.1} parent=55 // pred_region
          %s4363 = sand.u32 %s142, 1
          %s4364 = scalar_lea.sflag [#allocation4], %s4363
          %s4365 = sand.u32 %s142, 1
          %s4366 = smul.addr %s4365, 256
          %s4367 = scalar_lea.vmem [#allocation7], %s4366
          %4368 = dma.done %s4364, 4096
        $region60: #{bottleneck_forward.1} parent=55 // pred_fallthru
          _
      $region56: #{bottleneck_forward.1} parent=5 // pred_fallthru
        _
    $region6: #{bottleneck_forward.1} parent=1 // loop_footer
      %s22 = sadd.s32 1, %s18
    $region7: #{bottleneck_forward.1} parent=1 // loop_footer_branch
      %17 = sbr.rel target = $region3
    $region8: #{bottleneck_forward.1} parent=1 // loop_exit
      _
    %4369 = vsyncpa [#allocation3], 1
    %s4370 = scalar_lea.sflag [#allocation3], 1
    %4371 = vsyncpa %s4370, 1
    %4372 = vsyncpa [#allocation6], 1
    %4373 = vsyncpa [#allocation4], 1
    %s4374 = scalar_lea.sflag [#allocation4], 1
    %4375 = vsyncpa %s4374, 1

</llo_original>
